<compile_context>
chip_gen: v7x
topology: tpu7x:2x2x1
jax: 0.10.0
libtpu: 0.0.40
codegen_flags: <defaults>
</compile_context>

<pallas_src>
import functools

import jax
import jax.numpy as jnp
from jax import lax
from jax.experimental import pallas as pl
from jax.experimental.pallas import tpu as pltpu


PARAM_NAMES = (
    # self-attention (q, k, v, out projections + biases)
    "wq1", "bq1", "wk1", "bk1", "wv1", "bv1", "wo1", "bo1",
    # cross-attention
    "wq2", "bq2", "wk2", "bk2", "wv2", "bv2", "wo2", "bo2",
    # feed-forward
    "w1", "b1", "w2", "b2",
    # layer norms for the 3 sublayers (gamma, beta)
    "g0", "be0", "g1", "be1", "g2", "be2",
)

_TQ = 32  # query-tile rows (multiple of 16 -> sublane-aligned for f32 and bf16)


def _layer_norm(x, g, b, eps=1e-6):
    # Annotated-Transformer LayerNorm uses eps=1e-6.
    mean = jnp.mean(x, axis=-1, keepdims=True)
    var = jnp.mean((x - mean) ** 2, axis=-1, keepdims=True)
    return g * (x - mean) * lax.rsqrt(var + eps) + b


def _mha(q, k, v, bias, num_heads, dh):
    """Head-batched attention core.

    q: (Lq, D) f32 (1/sqrt(dh) pre-folded into the projection),
    k/v: (Lk, D) f32, bias: (Lq, Lk) additive f32.
    Returns head-major context (H, Lq, dh) f32.
    """
    bf16 = jnp.bfloat16
    # Head split: static 128-lane-aligned slices (dh is a multiple of 128 in
    # the demo geometry) stacked once into a leading head-batch axis, then
    # leading-batch-dim einsums (single batched dot_general, no per-head
    # matmul loop).
    # TODO(synk): for dh < 128, keep Q/K/V head-major end-to-end to avoid the
    # non-lane-aligned relayout this stack would imply.
    qh = jnp.stack([q[:, h * dh:(h + 1) * dh] for h in range(num_heads)], 0).astype(bf16)
    kh = jnp.stack([k[:, h * dh:(h + 1) * dh] for h in range(num_heads)], 0).astype(bf16)
    vh = jnp.stack([v[:, h * dh:(h + 1) * dh] for h in range(num_heads)], 0).astype(bf16)

    s = jnp.einsum("hqd,hkd->hqk", qh, kh,
                   preferred_element_type=jnp.float32)           # (H, Lq, Lk)
    s = s + bias[None]                                           # one bias add, all heads
    m = jnp.max(s, axis=-1, keepdims=True)
    e = jnp.exp(s - m)
    p = e * pl.reciprocal(jnp.sum(e, axis=-1, keepdims=True), approx=True)
    ctx = jnp.einsum("hqk,hkd->hqd", p.astype(bf16), vh,
                     preferred_element_type=jnp.float32)         # (H, Lq, dh)
    return ctx


def _attn_out(ctx, wo_h, bo):
    """Head-batched output projection: (H,Lq,dh) x (H,dh,D) -> (Lq,D) + bias.

    Avoids the merge-side head concat: the sum over heads is a cheap
    major-axis reduction of the per-head partial projections.
    """
    part = jnp.einsum("hqd,hde->hqe", ctx.astype(jnp.bfloat16), wo_h,
                      preferred_element_type=jnp.float32)        # (H, Lq, D)
    return jnp.sum(part, axis=0) + bo


def _decoder_layer_kernel(xq_ref, xkv_ref, mem_ref, tgtm_ref, srcm_ref,
                          w_q_ref, w_kv_ref, b_kv_ref, wo_ref,
                          w_ff1_ref, b_ff1_ref, w_ff2_ref,
                          b_d_ref, ln_g_ref, ln_b_ref, out_ref, *, num_heads):
    f32, bf16 = jnp.float32, jnp.bfloat16
    d = xq_ref.shape[-1]
    dh = d // num_heads
    h = num_heads

    x = xq_ref[...]         # (tq, D)   residual rows of this q-tile
    x_all = xkv_ref[...]    # (S, D)    full (padded) target rows -> self-attn K/V
    mem = mem_ref[...]      # (Sm, D)   encoder memory rows -> cross-attn K/V

    ln_g = ln_g_ref[...]    # (3, D)
    ln_b = ln_b_ref[...]
    b_d = b_d_ref[...]      # (5, D): bq1*scale, bo1, bq2*scale, bo2, b2

    # int8 {0,1} masks -> additive bias (0 = keep, -1e9 = masked), built on-chip.
    tgt_bias = (tgtm_ref[...].astype(f32) - 1.0) * 1e9            # (tq, S)
    src_bias = (srcm_ref[...].astype(f32) - 1.0) * 1e9            # (tq, Sm)

    # ---- sublayer 0: masked self-attention (pre-norm, residual) ----
    # TODO(synk): at large S, add a kv grid axis with flash-style online
    # softmax so the (H, tq, S) scores and the full-S K/V never materialize;
    # here S fits comfortably in VMEM per step.
    yq = _layer_norm(x, ln_g[0:1], ln_b[0:1])
    yall = _layer_norm(x_all, ln_g[0:1], ln_b[0:1])
    q = jnp.dot(yq.astype(bf16), w_q_ref[0], preferred_element_type=f32) + b_d[0:1]
    kv = jnp.dot(yall.astype(bf16), w_kv_ref[0],
                 preferred_element_type=f32) + b_kv_ref[0:1]      # (S, 2D) fused K|V
    ctx = _mha(q, kv[:, :d], kv[:, d:], tgt_bias, num_heads, dh)
    x = x + _attn_out(ctx, wo_ref[0:h], b_d[1:2])

    # ---- sublayer 1: cross-attention over encoder memory ----
    y = _layer_norm(x, ln_g[1:2], ln_b[1:2])
    q = jnp.dot(y.astype(bf16), w_q_ref[1], preferred_element_type=f32) + b_d[2:3]
    kv = jnp.dot(mem.astype(bf16), w_kv_ref[1],
                 preferred_element_type=f32) + b_kv_ref[1:2]      # (Sm, 2D)
    ctx = _mha(q, kv[:, :d], kv[:, d:], src_bias, num_heads, dh)
    x = x + _attn_out(ctx, wo_ref[h:2 * h], b_d[3:4])

    # ---- sublayer 2: position-wise feed-forward ----
    y = _layer_norm(x, ln_g[2:3], ln_b[2:3])
    hid = jnp.dot(y.astype(bf16), w_ff1_ref[...],
                  preferred_element_type=f32) + b_ff1_ref[...]
    hid = jnp.maximum(hid, 0.0).astype(bf16)      # fused ReLU + bf16 hidden
    x = x + jnp.dot(hid, w_ff2_ref[...], preferred_element_type=f32) + b_d[4:5]

    out_ref[...] = x


def _pad_rows(a, axis, target):
    pad = target - a.shape[axis]
    if pad == 0:
        return a
    widths = [(0, 0)] * a.ndim
    widths[axis] = (0, pad)
    return jnp.pad(a, widths)


def decoder_layer(x, memory, src_mask, tgt_mask, params, num_heads, tq=_TQ):
    """x: (B,S,D), memory: (B,Sm,D), src_mask: (B,S,Sm), tgt_mask: (B,S,S).
    Masks: 1/True = keep, 0/False = masked. Dropout is identity (eval mode)."""
    # TODO(synk): dropout has no kernel-side equivalent here; eval-mode identity.
    B, S, D = x.shape
    Sm = memory.shape[1]
    dh = D // num_heads
    d_ff = params["w1"].shape[1]
    scale = 1.0 / float(dh) ** 0.5
    bf16 = jnp.bfloat16
    p = params

    # ---- host-side parameter packing: bf16 MXU weights, f32 biases / LN ----
    #      (1/sqrt(dh) folded into both q projections, weights + biases)
    w_q = jnp.stack([p["wq1"] * scale, p["wq2"] * scale], axis=0).astype(bf16)       # (2,D,D)
    w_kv = jnp.stack([jnp.concatenate([p["wk1"], p["wv1"]], axis=1),
                      jnp.concatenate([p["wk2"], p["wv2"]], axis=1)],
                     axis=0).astype(bf16)                                            # (2,D,2D)
    b_kv = jnp.concatenate([jnp.concatenate([p["bk1"], p["bv1"]], axis=1),
                            jnp.concatenate([p["bk2"], p["bv2"]], axis=1)], axis=0)  # (2,2D)
    wo_h = jnp.concatenate([p["wo1"].reshape(num_heads, dh, D),
                            p["wo2"].reshape(num_heads, dh, D)],
                           axis=0).astype(bf16)                                      # (2H,dh,D)
    b_d = jnp.concatenate([p["bq1"] * scale, p["bo1"],
                           p["bq2"] * scale, p["bo2"], p["b2"]], axis=0)             # (5,D)
    w_ff1 = p["w1"].astype(bf16)
    b_ff1 = p["b1"]
    w_ff2 = p["w2"].astype(bf16)
    ln_g = jnp.concatenate([p["g0"], p["g1"], p["g2"]], axis=0)                      # (3,D)
    ln_b = jnp.concatenate([p["be0"], p["be1"], p["be2"]], axis=0)

    # ---- pad target length to a q-tile multiple; padded keys stay masked
    #      (zero-padded mask columns) and padded query rows are sliced off. ----
    Sp = ((S + tq - 1) // tq) * tq
    x_p = _pad_rows(x, 1, Sp)
    tgt_p = _pad_rows(_pad_rows(tgt_mask, 1, Sp), 2, Sp)
    src_p = _pad_rows(src_mask, 1, Sp)
    # int8 {0,1} masks: 4x less HBM traffic than the f32 masks.
    tgt_i8 = (tgt_p > 0.5).astype(jnp.int8)
    src_i8 = (src_p > 0.5).astype(jnp.int8)

    kernel = functools.partial(_decoder_layer_kernel, num_heads=num_heads)
    out = pl.pallas_call(
        kernel,
        out_shape=jax.ShapeDtypeStruct((B, Sp, D), jnp.float32),
        # Grid over (batch, q-tile); both axes independent -> "parallel".
        grid=(B, Sp // tq),
        in_specs=[
            pl.BlockSpec((None, tq, D), lambda b, qi: (b, qi, 0)),        # x: q rows
            pl.BlockSpec((None, Sp, D), lambda b, qi: (b, 0, 0)),         # x: self-attn K/V rows
            pl.BlockSpec((None, Sm, D), lambda b, qi: (b, 0, 0)),         # memory
            pl.BlockSpec((None, tq, Sp), lambda b, qi: (b, qi, 0)),       # tgt mask (int8)
            pl.BlockSpec((None, tq, Sm), lambda b, qi: (b, qi, 0)),       # src mask (int8)
            pl.BlockSpec((2, D, D), lambda b, qi: (0, 0, 0)),             # w_q (scaled)
            pl.BlockSpec((2, D, 2 * D), lambda b, qi: (0, 0, 0)),         # w_kv (fused K|V)
            pl.BlockSpec((2, 2 * D), lambda b, qi: (0, 0)),               # b_kv
            pl.BlockSpec((2 * num_heads, dh, D), lambda b, qi: (0, 0, 0)),  # wo (head-major)
            pl.BlockSpec((D, d_ff), lambda b, qi: (0, 0)),                # w_ff1
            pl.BlockSpec((1, d_ff), lambda b, qi: (0, 0)),                # b_ff1
            pl.BlockSpec((d_ff, D), lambda b, qi: (0, 0)),                # w_ff2
            pl.BlockSpec((5, D), lambda b, qi: (0, 0)),                   # q/out/ffn biases
            pl.BlockSpec((3, D), lambda b, qi: (0, 0)),                   # LN gamma
            pl.BlockSpec((3, D), lambda b, qi: (0, 0)),                   # LN beta
        ],
        out_specs=pl.BlockSpec((None, tq, D), lambda b, qi: (b, qi, 0)),
        compiler_params=pltpu.CompilerParams(
            dimension_semantics=("parallel", "parallel"),
            # 48 MiB is safe on every generation (v7x physical VMEM is 64 MiB);
            # TODO(synk): per-generation tuning (~96-100 MiB on v5e/v6e,
            # <=56 MiB on v7x) plus fp8 weights on v7x at realistic sizes.
            vmem_limit_bytes=48 * 1024 * 1024),
        # TODO(synk): the self-/cross-attn K/V projections are recomputed per
        # q-tile; at large S precompute them in a separate pass or add a kv
        # grid axis (flash-style online softmax).
    )(x_p, x_p, memory, tgt_i8, src_i8,
      w_q, w_kv, b_kv, wo_h, w_ff1, b_ff1, w_ff2, b_d, ln_g, ln_b)
    return out[:, :S, :]


def init_params(key, d_model, d_ff):
    keys = jax.random.split(key, len(PARAM_NAMES))
    shapes = {
        "wq1": (d_model, d_model), "bq1": (1, d_model),
        "wk1": (d_model, d_model), "bk1": (1, d_model),
        "wv1": (d_model, d_model), "bv1": (1, d_model),
        "wo1": (d_model, d_model), "bo1": (1, d_model),
        "wq2": (d_model, d_model), "bq2": (1, d_model),
        "wk2": (d_model, d_model), "bk2": (1, d_model),
        "wv2": (d_model, d_model), "bv2": (1, d_model),
        "wo2": (d_model, d_model), "bo2": (1, d_model),
        "w1": (d_model, d_ff), "b1": (1, d_ff),
        "w2": (d_ff, d_model), "b2": (1, d_model),
        "g0": (1, d_model), "be0": (1, d_model),
        "g1": (1, d_model), "be1": (1, d_model),
        "g2": (1, d_model), "be2": (1, d_model),
    }
    params = {}
    for name, k in zip(PARAM_NAMES, keys):
        if name.startswith("g"):              # layernorm gamma ~ 1
            params[name] = jnp.ones(shapes[name], jnp.float32)
        elif name.startswith("b"):            # biases / beta ~ small
            params[name] = 0.01 * jax.random.normal(k, shapes[name], jnp.float32)
        else:
            params[name] = 0.02 * jax.random.normal(k, shapes[name], jnp.float32)
    return params


def _decoder_layer_reference(x, memory, src_mask, tgt_mask, p, num_heads):
    """Pure-JAX f32 reference mirroring the PyTorch module math."""
    def ln(t, g, b, eps=1e-6):
        mu = jnp.mean(t, axis=-1, keepdims=True)
        var = jnp.mean((t - mu) ** 2, axis=-1, keepdims=True)
        return g * (t - mu) * lax.rsqrt(var + eps) + b

    def mha(q_in, k_in, v_in, mask, wq, bq, wk, bk, wv, bv, wo, bo):
        d = q_in.shape[-1]
        dh = d // num_heads
        scale = 1.0 / float(dh) ** 0.5
        q = q_in @ wq + bq
        k = k_in @ wk + bk
        v = v_in @ wv + bv
        heads = []
        for h in range(num_heads):
            sl = slice(h * dh, (h + 1) * dh)
            s = (q[:, sl] @ k[:, sl].T) * scale
            s = jnp.where(mask > 0.5, s, -1e9)
            pr = jax.nn.softmax(s, axis=-1)
            heads.append(pr @ v[:, sl])
        return jnp.concatenate(heads, axis=-1) @ wo + bo

    def one(xb, mb, sm, tm):
        y = ln(xb, p["g0"], p["be0"])
        xb = xb + mha(y, y, y, tm, p["wq1"], p["bq1"], p["wk1"], p["bk1"],
                      p["wv1"], p["bv1"], p["wo1"], p["bo1"])
        y = ln(xb, p["g1"], p["be1"])
        xb = xb + mha(y, mb, mb, sm, p["wq2"], p["bq2"], p["wk2"], p["bk2"],
                      p["wv2"], p["bv2"], p["wo2"], p["bo2"])
        y = ln(xb, p["g2"], p["be2"])
        hh = jnp.maximum(y @ p["w1"] + p["b1"], 0.0)
        return xb + hh @ p["w2"] + p["b2"]

    return jax.vmap(one)(x, memory, src_mask, tgt_mask)


if __name__ == "__main__":
    # Small but lane/sublane-friendly geometry: D=256 with H=2 gives dh=128
    # (128-lane aligned head slices); sequences are multiples of the 32-row
    # q-tile / 16-sublane bf16 packing.
    B, S_TGT, S_SRC = 2, 64, 48
    D, H, D_FF = 256, 2, 512

    key = jax.random.PRNGKey(0)
    kx, km, kp = jax.random.split(key, 3)

    x = jax.random.normal(kx, (B, S_TGT, D), jnp.float32)
    memory = jax.random.normal(km, (B, S_SRC, D), jnp.float32)
    # causal target mask, full source mask (1.0 = keep, 0.0 = masked)
    tgt_mask = jnp.broadcast_to(
        jnp.tril(jnp.ones((S_TGT, S_TGT), jnp.float32)), (B, S_TGT, S_TGT))
    src_mask = jnp.ones((B, S_TGT, S_SRC), jnp.float32)

    params = init_params(kp, D, D_FF)

    out = decoder_layer(x, memory, src_mask, tgt_mask, params, H)
    out = jax.block_until_ready(out)

    ref = _decoder_layer_reference(x, memory, src_mask, tgt_mask, params, H)

    assert out.shape == (B, S_TGT, D)
    assert bool(jnp.all(jnp.isfinite(out)))
    # Kernel matmuls run in bf16 on the MXU (f32 accumulate) with an approx
    # softmax reciprocal -> compare loosely against the exact f32 reference.
    assert bool(jnp.allclose(out, ref, atol=5e-2, rtol=5e-2)), (
        "mismatch vs reference: max abs err = "
        f"{float(jnp.max(jnp.abs(out - ref)))}")
    print("KERNEL_OK")
</pallas_src>

<mosaic_0001>
module attributes {stable_mosaic.version = 11 : i64} {
  func.func @_decoder_layer_kernel(%arg0: i32, %arg1: i32, %arg2: memref<1x32x256xf32, #tpu.memory_space<vmem>>, %arg3: memref<1x64x256xf32, #tpu.memory_space<vmem>>, %arg4: memref<1x48x256xf32, #tpu.memory_space<vmem>>, %arg5: memref<1x32x64xi8, #tpu.memory_space<vmem>>, %arg6: memref<1x32x48xi8, #tpu.memory_space<vmem>>, %arg7: memref<2x256x256xbf16, #tpu.memory_space<vmem>>, %arg8: memref<2x256x512xbf16, #tpu.memory_space<vmem>>, %arg9: memref<2x512xf32, #tpu.memory_space<vmem>>, %arg10: memref<4x128x256xbf16, #tpu.memory_space<vmem>>, %arg11: memref<256x512xbf16, #tpu.memory_space<vmem>>, %arg12: memref<1x512xf32, #tpu.memory_space<vmem>>, %arg13: memref<512x256xbf16, #tpu.memory_space<vmem>>, %arg14: memref<5x256xf32, #tpu.memory_space<vmem>>, %arg15: memref<3x256xf32, #tpu.memory_space<vmem>>, %arg16: memref<3x256xf32, #tpu.memory_space<vmem>>, %arg17: memref<1x32x256xf32, #tpu.memory_space<vmem>>) attributes {dimension_semantics = [#tpu.dimension_semantics<parallel>, #tpu.dimension_semantics<parallel>], iteration_bounds = array<i64: 2, 2>, scalar_prefetch = 0 : i64, scratch_operands = 0 : i64, tpu.core_type = #tpu.core_type<tc>, window_params = [{transform_indices = @transform_0, window_bounds = array<i64: 1, 32, 256>}, {transform_indices = @transform_1, window_bounds = array<i64: 1, 64, 256>}, {transform_indices = @transform_2, window_bounds = array<i64: 1, 48, 256>}, {transform_indices = @transform_3, window_bounds = array<i64: 1, 32, 64>}, {transform_indices = @transform_4, window_bounds = array<i64: 1, 32, 48>}, {pipeline_mode = #tpu.pipeline_mode<synchronous>, transform_indices = @transform_5, window_bounds = array<i64: 2, 256, 256>}, {pipeline_mode = #tpu.pipeline_mode<synchronous>, transform_indices = @transform_6, window_bounds = array<i64: 2, 256, 512>}, {pipeline_mode = #tpu.pipeline_mode<synchronous>, transform_indices = @transform_7, window_bounds = array<i64: 2, 512>}, {pipeline_mode = #tpu.pipeline_mode<synchronous>, transform_indices = @transform_8, window_bounds = array<i64: 4, 128, 256>}, {pipeline_mode = #tpu.pipeline_mode<synchronous>, transform_indices = @transform_9, window_bounds = array<i64: 256, 512>}, {pipeline_mode = #tpu.pipeline_mode<synchronous>, transform_indices = @transform_10, window_bounds = array<i64: 1, 512>}, {pipeline_mode = #tpu.pipeline_mode<synchronous>, transform_indices = @transform_11, window_bounds = array<i64: 512, 256>}, {pipeline_mode = #tpu.pipeline_mode<synchronous>, transform_indices = @transform_12, window_bounds = array<i64: 5, 256>}, {pipeline_mode = #tpu.pipeline_mode<synchronous>, transform_indices = @transform_13, window_bounds = array<i64: 3, 256>}, {pipeline_mode = #tpu.pipeline_mode<synchronous>, transform_indices = @transform_14, window_bounds = array<i64: 3, 256>}, {transform_indices = @transform_15, window_bounds = array<i64: 1, 32, 256>}]} {
    %c0 = arith.constant 0 : index
    %c0_0 = arith.constant 0 : index
    %c0_1 = arith.constant 0 : index
    %0 = vector.load %arg2[%c0, %c0_0, %c0_1] : memref<1x32x256xf32, #tpu.memory_space<vmem>>, vector<1x32x256xf32>
    %1 = vector.shape_cast %0 : vector<1x32x256xf32> to vector<32x256xf32>
    %c0_2 = arith.constant 0 : index
    %c0_3 = arith.constant 0 : index
    %c0_4 = arith.constant 0 : index
    %2 = vector.load %arg3[%c0_2, %c0_3, %c0_4] : memref<1x64x256xf32, #tpu.memory_space<vmem>>, vector<1x64x256xf32>
    %3 = vector.shape_cast %2 : vector<1x64x256xf32> to vector<64x256xf32>
    %c0_5 = arith.constant 0 : index
    %c0_6 = arith.constant 0 : index
    %c0_7 = arith.constant 0 : index
    %4 = vector.load %arg4[%c0_5, %c0_6, %c0_7] : memref<1x48x256xf32, #tpu.memory_space<vmem>>, vector<1x48x256xf32>
    %5 = vector.shape_cast %4 : vector<1x48x256xf32> to vector<48x256xf32>
    %c0_8 = arith.constant 0 : index
    %c0_9 = arith.constant 0 : index
    %6 = vector.load %arg15[%c0_8, %c0_9] : memref<3x256xf32, #tpu.memory_space<vmem>>, vector<3x256xf32>
    %c0_10 = arith.constant 0 : index
    %c0_11 = arith.constant 0 : index
    %7 = vector.load %arg16[%c0_10, %c0_11] : memref<3x256xf32, #tpu.memory_space<vmem>>, vector<3x256xf32>
    %c0_12 = arith.constant 0 : index
    %c0_13 = arith.constant 0 : index
    %8 = vector.load %arg14[%c0_12, %c0_13] : memref<5x256xf32, #tpu.memory_space<vmem>>, vector<5x256xf32>
    %c0_14 = arith.constant 0 : index
    %c0_15 = arith.constant 0 : index
    %c0_16 = arith.constant 0 : index
    %9 = vector.load %arg5[%c0_14, %c0_15, %c0_16] : memref<1x32x64xi8, #tpu.memory_space<vmem>>, vector<1x32x64xi8>
    %10 = vector.shape_cast %9 : vector<1x32x64xi8> to vector<32x64xi8>
    %11 = arith.sitofp %10 : vector<32x64xi8> to vector<32x64xf32>
    %cst = arith.constant 1.000000e+00 : f32
    %12 = vector.broadcast %cst : f32 to vector<32x64xf32>
    %13 = arith.subf %11, %12 : vector<32x64xf32>
    %cst_17 = arith.constant 1.000000e+09 : f32
    %14 = vector.broadcast %cst_17 : f32 to vector<32x64xf32>
    %15 = arith.mulf %13, %14 : vector<32x64xf32>
    %c0_18 = arith.constant 0 : index
    %c0_19 = arith.constant 0 : index
    %c0_20 = arith.constant 0 : index
    %16 = vector.load %arg6[%c0_18, %c0_19, %c0_20] : memref<1x32x48xi8, #tpu.memory_space<vmem>>, vector<1x32x48xi8>
    %17 = vector.shape_cast %16 : vector<1x32x48xi8> to vector<32x48xi8>
    %18 = arith.sitofp %17 : vector<32x48xi8> to vector<32x48xf32>
    %cst_21 = arith.constant 1.000000e+00 : f32
    %19 = vector.broadcast %cst_21 : f32 to vector<32x48xf32>
    %20 = arith.subf %18, %19 : vector<32x48xf32>
    %cst_22 = arith.constant 1.000000e+09 : f32
    %21 = vector.broadcast %cst_22 : f32 to vector<32x48xf32>
    %22 = arith.mulf %20, %21 : vector<32x48xf32>
    %23 = vector.extract_strided_slice %6 {offsets = [0, 0], sizes = [1, 256], strides = [1, 1]} : vector<3x256xf32> to vector<1x256xf32>
    %24 = vector.extract_strided_slice %7 {offsets = [0, 0], sizes = [1, 256], strides = [1, 1]} : vector<3x256xf32> to vector<1x256xf32>
    %cst_23 = arith.constant dense<0.000000e+00> : vector<32xf32>
    %25 = vector.multi_reduction <add>, %1, %cst_23 [1] : vector<32x256xf32> to vector<32xf32>
    %26 = vector.shape_cast %25 : vector<32xf32> to vector<32x1xf32>
    %cst_24 = arith.constant 2.560000e+02 : f32
    %27 = vector.broadcast %cst_24 : f32 to vector<32x1xf32>
    %28 = arith.divf %26, %27 : vector<32x1xf32>
    %29 = vector.broadcast %28 : vector<32x1xf32> to vector<32x256xf32>
    %30 = arith.subf %1, %29 : vector<32x256xf32>
    %31 = arith.mulf %30, %30 : vector<32x256xf32>
    %cst_25 = arith.constant dense<0.000000e+00> : vector<32xf32>
    %32 = vector.multi_reduction <add>, %31, %cst_25 [1] : vector<32x256xf32> to vector<32xf32>
    %33 = vector.shape_cast %32 : vector<32xf32> to vector<32x1xf32>
    %cst_26 = arith.constant 2.560000e+02 : f32
    %34 = vector.broadcast %cst_26 : f32 to vector<32x1xf32>
    %35 = arith.divf %33, %34 : vector<32x1xf32>
    %36 = vector.broadcast %28 : vector<32x1xf32> to vector<32x256xf32>
    %37 = arith.subf %1, %36 : vector<32x256xf32>
    %38 = vector.broadcast %23 : vector<1x256xf32> to vector<32x256xf32>
    %39 = arith.mulf %38, %37 : vector<32x256xf32>
    %cst_27 = arith.constant 9.99999997E-7 : f32
    %40 = vector.broadcast %cst_27 : f32 to vector<32x1xf32>
    %41 = arith.addf %35, %40 : vector<32x1xf32>
    %42 = math.rsqrt %41 : vector<32x1xf32>
    %43 = vector.broadcast %42 : vector<32x1xf32> to vector<32x256xf32>
    %44 = arith.mulf %39, %43 : vector<32x256xf32>
    %45 = vector.broadcast %24 : vector<1x256xf32> to vector<32x256xf32>
    %46 = arith.addf %44, %45 : vector<32x256xf32>
    %47 = vector.extract_strided_slice %6 {offsets = [0, 0], sizes = [1, 256], strides = [1, 1]} : vector<3x256xf32> to vector<1x256xf32>
    %48 = vector.extract_strided_slice %7 {offsets = [0, 0], sizes = [1, 256], strides = [1, 1]} : vector<3x256xf32> to vector<1x256xf32>
    %cst_28 = arith.constant dense<0.000000e+00> : vector<64xf32>
    %49 = vector.multi_reduction <add>, %3, %cst_28 [1] : vector<64x256xf32> to vector<64xf32>
    %50 = vector.shape_cast %49 : vector<64xf32> to vector<64x1xf32>
    %cst_29 = arith.constant 2.560000e+02 : f32
    %51 = vector.broadcast %cst_29 : f32 to vector<64x1xf32>
    %52 = arith.divf %50, %51 : vector<64x1xf32>
    %53 = vector.broadcast %52 : vector<64x1xf32> to vector<64x256xf32>
    %54 = arith.subf %3, %53 : vector<64x256xf32>
    %55 = arith.mulf %54, %54 : vector<64x256xf32>
    %cst_30 = arith.constant dense<0.000000e+00> : vector<64xf32>
    %56 = vector.multi_reduction <add>, %55, %cst_30 [1] : vector<64x256xf32> to vector<64xf32>
    %57 = vector.shape_cast %56 : vector<64xf32> to vector<64x1xf32>
    %cst_31 = arith.constant 2.560000e+02 : f32
    %58 = vector.broadcast %cst_31 : f32 to vector<64x1xf32>
    %59 = arith.divf %57, %58 : vector<64x1xf32>
    %60 = vector.broadcast %52 : vector<64x1xf32> to vector<64x256xf32>
    %61 = arith.subf %3, %60 : vector<64x256xf32>
    %62 = vector.broadcast %47 : vector<1x256xf32> to vector<64x256xf32>
    %63 = arith.mulf %62, %61 : vector<64x256xf32>
    %cst_32 = arith.constant 9.99999997E-7 : f32
    %64 = vector.broadcast %cst_32 : f32 to vector<64x1xf32>
    %65 = arith.addf %59, %64 : vector<64x1xf32>
    %66 = math.rsqrt %65 : vector<64x1xf32>
    %67 = vector.broadcast %66 : vector<64x1xf32> to vector<64x256xf32>
    %68 = arith.mulf %63, %67 : vector<64x256xf32>
    %69 = vector.broadcast %48 : vector<1x256xf32> to vector<64x256xf32>
    %70 = arith.addf %68, %69 : vector<64x256xf32>
    %71 = arith.truncf %46 : vector<32x256xf32> to vector<32x256xbf16>
    %c0_33 = arith.constant 0 : index
    %c0_34 = arith.constant 0 : index
    %c0_35 = arith.constant 0 : index
    %72 = vector.load %arg7[%c0_33, %c0_34, %c0_35] : memref<2x256x256xbf16, #tpu.memory_space<vmem>>, vector<1x256x256xbf16>
    %73 = vector.shape_cast %72 : vector<1x256x256xbf16> to vector<256x256xbf16>
    %cst_36 = arith.constant dense<0.000000e+00> : vector<32x256xf32>
    %74 = tpu.matmul %71, %73, %cst_36 {dimension_numbers = #tpu.dot_dimension_numbers<[1], [0], [0], [1], [0, 0, 1, 1], [], []>} : vector<32x256xbf16>, vector<256x256xbf16>, vector<32x256xf32> -> vector<32x256xf32>
    %75 = vector.extract_strided_slice %8 {offsets = [0, 0], sizes = [1, 256], strides = [1, 1]} : vector<5x256xf32> to vector<1x256xf32>
    %76 = vector.broadcast %75 : vector<1x256xf32> to vector<32x256xf32>
    %77 = arith.addf %74, %76 : vector<32x256xf32>
    %78 = arith.truncf %70 : vector<64x256xf32> to vector<64x256xbf16>
    %c0_37 = arith.constant 0 : index
    %c0_38 = arith.constant 0 : index
    %c0_39 = arith.constant 0 : index
    %79 = vector.load %arg8[%c0_37, %c0_38, %c0_39] : memref<2x256x512xbf16, #tpu.memory_space<vmem>>, vector<1x256x512xbf16>
    %80 = vector.shape_cast %79 : vector<1x256x512xbf16> to vector<256x512xbf16>
    %cst_40 = arith.constant dense<0.000000e+00> : vector<64x512xf32>
    %81 = tpu.matmul %78, %80, %cst_40 {dimension_numbers = #tpu.dot_dimension_numbers<[1], [0], [0], [1], [0, 0, 1, 1], [], []>} : vector<64x256xbf16>, vector<256x512xbf16>, vector<64x512xf32> -> vector<64x512xf32>
    %c0_41 = arith.constant 0 : index
    %c0_42 = arith.constant 0 : index
    %82 = vector.load %arg9[%c0_41, %c0_42] : memref<2x512xf32, #tpu.memory_space<vmem>>, vector<1x512xf32>
    %83 = vector.broadcast %82 : vector<1x512xf32> to vector<64x512xf32>
    %84 = arith.addf %81, %83 : vector<64x512xf32>
    %85 = vector.extract_strided_slice %84 {offsets = [0, 0], sizes = [64, 256], strides = [1, 1]} : vector<64x512xf32> to vector<64x256xf32>
    %86 = vector.extract_strided_slice %84 {offsets = [0, 256], sizes = [64, 256], strides = [1, 1]} : vector<64x512xf32> to vector<64x256xf32>
    %87 = vector.extract_strided_slice %77 {offsets = [0, 0], sizes = [32, 128], strides = [1, 1]} : vector<32x256xf32> to vector<32x128xf32>
    %88 = vector.extract_strided_slice %77 {offsets = [0, 128], sizes = [32, 128], strides = [1, 1]} : vector<32x256xf32> to vector<32x128xf32>
    %89 = vector.shape_cast %87 : vector<32x128xf32> to vector<1x32x128xf32>
    %90 = vector.shape_cast %88 : vector<32x128xf32> to vector<1x32x128xf32>
    %91 = tpu.concatenate %89, %90 in 0 : vector<1x32x128xf32>, vector<1x32x128xf32> -> vector<2x32x128xf32>
    %92 = arith.truncf %91 : vector<2x32x128xf32> to vector<2x32x128xbf16>
    %93 = vector.extract_strided_slice %85 {offsets = [0, 0], sizes = [64, 128], strides = [1, 1]} : vector<64x256xf32> to vector<64x128xf32>
    %94 = vector.extract_strided_slice %85 {offsets = [0, 128], sizes = [64, 128], strides = [1, 1]} : vector<64x256xf32> to vector<64x128xf32>
    %95 = vector.shape_cast %93 : vector<64x128xf32> to vector<1x64x128xf32>
    %96 = vector.shape_cast %94 : vector<64x128xf32> to vector<1x64x128xf32>
    %97 = tpu.concatenate %95, %96 in 0 : vector<1x64x128xf32>, vector<1x64x128xf32> -> vector<2x64x128xf32>
    %98 = arith.truncf %97 : vector<2x64x128xf32> to vector<2x64x128xbf16>
    %99 = vector.extract_strided_slice %86 {offsets = [0, 0], sizes = [64, 128], strides = [1, 1]} : vector<64x256xf32> to vector<64x128xf32>
    %100 = vector.extract_strided_slice %86 {offsets = [0, 128], sizes = [64, 128], strides = [1, 1]} : vector<64x256xf32> to vector<64x128xf32>
    %101 = vector.shape_cast %99 : vector<64x128xf32> to vector<1x64x128xf32>
    %102 = vector.shape_cast %100 : vector<64x128xf32> to vector<1x64x128xf32>
    %103 = tpu.concatenate %101, %102 in 0 : vector<1x64x128xf32>, vector<1x64x128xf32> -> vector<2x64x128xf32>
    %104 = arith.truncf %103 : vector<2x64x128xf32> to vector<2x64x128xbf16>
    "tpu.trace_start"() <{level = 10 : i32, message = "hqd,hkd->hqk"}> : () -> ()
    %cst_43 = arith.constant dense<0.000000e+00> : vector<2x32x64xf32>
    %105 = tpu.matmul %92, %98, %cst_43 {dimension_numbers = #tpu.dot_dimension_numbers<[2], [2], [1], [1], [0, 0, 0, 1, 1, 1], [0], [0]>} : vector<2x32x128xbf16>, vector<2x64x128xbf16>, vector<2x32x64xf32> -> vector<2x32x64xf32>
    "tpu.trace_stop"() : () -> ()
    %106 = vector.shape_cast %15 : vector<32x64xf32> to vector<1x32x64xf32>
    %107 = vector.broadcast %106 : vector<1x32x64xf32> to vector<2x32x64xf32>
    %108 = arith.addf %105, %107 : vector<2x32x64xf32>
    %cst_44 = arith.constant dense<0xFF800000> : vector<2x32xf32>
    %109 = vector.multi_reduction <maximumf>, %108, %cst_44 [2] : vector<2x32x64xf32> to vector<2x32xf32>
    %110 = vector.shape_cast %109 : vector<2x32xf32> to vector<2x32x1xf32>
    %111 = vector.broadcast %110 : vector<2x32x1xf32> to vector<2x32x64xf32>
    %112 = arith.subf %108, %111 : vector<2x32x64xf32>
    %113 = math.exp %112 : vector<2x32x64xf32>
    %cst_45 = arith.constant dense<0.000000e+00> : vector<2x32xf32>
    %114 = vector.multi_reduction <add>, %113, %cst_45 [2] : vector<2x32x64xf32> to vector<2x32xf32>
    %115 = vector.shape_cast %114 : vector<2x32xf32> to vector<2x32x1xf32>
    %116 = tpu.reciprocal %115 {approx = true} : vector<2x32x1xf32> -> vector<2x32x1xf32>
    %117 = vector.broadcast %116 : vector<2x32x1xf32> to vector<2x32x64xf32>
    %118 = arith.mulf %113, %117 : vector<2x32x64xf32>
    %119 = arith.truncf %118 : vector<2x32x64xf32> to vector<2x32x64xbf16>
    "tpu.trace_start"() <{level = 10 : i32, message = "hqk,hkd->hqd"}> : () -> ()
    %cst_46 = arith.constant dense<0.000000e+00> : vector<2x32x128xf32>
    %120 = tpu.matmul %119, %104, %cst_46 {dimension_numbers = #tpu.dot_dimension_numbers<[2], [1], [1], [2], [0, 0, 0, 1, 1, 2], [0], [0]>} : vector<2x32x64xbf16>, vector<2x64x128xbf16>, vector<2x32x128xf32> -> vector<2x32x128xf32>
    "tpu.trace_stop"() : () -> ()
    %c0_47 = arith.constant 0 : index
    %c0_48 = arith.constant 0 : index
    %c0_49 = arith.constant 0 : index
    %121 = vector.load %arg10[%c0_47, %c0_48, %c0_49] : memref<4x128x256xbf16, #tpu.memory_space<vmem>>, vector<2x128x256xbf16>
    %122 = vector.extract_strided_slice %8 {offsets = [1, 0], sizes = [1, 256], strides = [1, 1]} : vector<5x256xf32> to vector<1x256xf32>
    %123 = arith.truncf %120 : vector<2x32x128xf32> to vector<2x32x128xbf16>
    "tpu.trace_start"() <{level = 10 : i32, message = "hqd,hde->hqe"}> : () -> ()
    %cst_50 = arith.constant dense<0.000000e+00> : vector<2x32x256xf32>
    %124 = tpu.matmul %123, %121, %cst_50 {dimension_numbers = #tpu.dot_dimension_numbers<[2], [1], [1], [2], [0, 0, 0, 1, 1, 2], [0], [0]>} : vector<2x32x128xbf16>, vector<2x128x256xbf16>, vector<2x32x256xf32> -> vector<2x32x256xf32>
    "tpu.trace_stop"() : () -> ()
    %cst_51 = arith.constant dense<0.000000e+00> : vector<32x256xf32>
    %125 = vector.multi_reduction <add>, %124, %cst_51 [0] : vector<2x32x256xf32> to vector<32x256xf32>
    %126 = vector.broadcast %122 : vector<1x256xf32> to vector<32x256xf32>
    %127 = arith.addf %125, %126 : vector<32x256xf32>
    %128 = arith.addf %1, %127 : vector<32x256xf32>
    %129 = vector.extract_strided_slice %6 {offsets = [1, 0], sizes = [1, 256], strides = [1, 1]} : vector<3x256xf32> to vector<1x256xf32>
    %130 = vector.extract_strided_slice %7 {offsets = [1, 0], sizes = [1, 256], strides = [1, 1]} : vector<3x256xf32> to vector<1x256xf32>
    %cst_52 = arith.constant dense<0.000000e+00> : vector<32xf32>
    %131 = vector.multi_reduction <add>, %128, %cst_52 [1] : vector<32x256xf32> to vector<32xf32>
    %132 = vector.shape_cast %131 : vector<32xf32> to vector<32x1xf32>
    %cst_53 = arith.constant 2.560000e+02 : f32
    %133 = vector.broadcast %cst_53 : f32 to vector<32x1xf32>
    %134 = arith.divf %132, %133 : vector<32x1xf32>
    %135 = vector.broadcast %134 : vector<32x1xf32> to vector<32x256xf32>
    %136 = arith.subf %128, %135 : vector<32x256xf32>
    %137 = arith.mulf %136, %136 : vector<32x256xf32>
    %cst_54 = arith.constant dense<0.000000e+00> : vector<32xf32>
    %138 = vector.multi_reduction <add>, %137, %cst_54 [1] : vector<32x256xf32> to vector<32xf32>
    %139 = vector.shape_cast %138 : vector<32xf32> to vector<32x1xf32>
    %cst_55 = arith.constant 2.560000e+02 : f32
    %140 = vector.broadcast %cst_55 : f32 to vector<32x1xf32>
    %141 = arith.divf %139, %140 : vector<32x1xf32>
    %142 = vector.broadcast %134 : vector<32x1xf32> to vector<32x256xf32>
    %143 = arith.subf %128, %142 : vector<32x256xf32>
    %144 = vector.broadcast %129 : vector<1x256xf32> to vector<32x256xf32>
    %145 = arith.mulf %144, %143 : vector<32x256xf32>
    %cst_56 = arith.constant 9.99999997E-7 : f32
    %146 = vector.broadcast %cst_56 : f32 to vector<32x1xf32>
    %147 = arith.addf %141, %146 : vector<32x1xf32>
    %148 = math.rsqrt %147 : vector<32x1xf32>
    %149 = vector.broadcast %148 : vector<32x1xf32> to vector<32x256xf32>
    %150 = arith.mulf %145, %149 : vector<32x256xf32>
    %151 = vector.broadcast %130 : vector<1x256xf32> to vector<32x256xf32>
    %152 = arith.addf %150, %151 : vector<32x256xf32>
    %153 = arith.truncf %152 : vector<32x256xf32> to vector<32x256xbf16>
    %c1 = arith.constant 1 : index
    %c0_57 = arith.constant 0 : index
    %c0_58 = arith.constant 0 : index
    %154 = vector.load %arg7[%c1, %c0_57, %c0_58] : memref<2x256x256xbf16, #tpu.memory_space<vmem>>, vector<1x256x256xbf16>
    %155 = vector.shape_cast %154 : vector<1x256x256xbf16> to vector<256x256xbf16>
    %cst_59 = arith.constant dense<0.000000e+00> : vector<32x256xf32>
    %156 = tpu.matmul %153, %155, %cst_59 {dimension_numbers = #tpu.dot_dimension_numbers<[1], [0], [0], [1], [0, 0, 1, 1], [], []>} : vector<32x256xbf16>, vector<256x256xbf16>, vector<32x256xf32> -> vector<32x256xf32>
    %157 = vector.extract_strided_slice %8 {offsets = [2, 0], sizes = [1, 256], strides = [1, 1]} : vector<5x256xf32> to vector<1x256xf32>
    %158 = vector.broadcast %157 : vector<1x256xf32> to vector<32x256xf32>
    %159 = arith.addf %156, %158 : vector<32x256xf32>
    %160 = arith.truncf %5 : vector<48x256xf32> to vector<48x256xbf16>
    %c1_60 = arith.constant 1 : index
    %c0_61 = arith.constant 0 : index
    %c0_62 = arith.constant 0 : index
    %161 = vector.load %arg8[%c1_60, %c0_61, %c0_62] : memref<2x256x512xbf16, #tpu.memory_space<vmem>>, vector<1x256x512xbf16>
    %162 = vector.shape_cast %161 : vector<1x256x512xbf16> to vector<256x512xbf16>
    %cst_63 = arith.constant dense<0.000000e+00> : vector<48x512xf32>
    %163 = tpu.matmul %160, %162, %cst_63 {dimension_numbers = #tpu.dot_dimension_numbers<[1], [0], [0], [1], [0, 0, 1, 1], [], []>} : vector<48x256xbf16>, vector<256x512xbf16>, vector<48x512xf32> -> vector<48x512xf32>
    %c1_64 = arith.constant 1 : index
    %c0_65 = arith.constant 0 : index
    %164 = vector.load %arg9[%c1_64, %c0_65] : memref<2x512xf32, #tpu.memory_space<vmem>>, vector<1x512xf32>
    %165 = vector.broadcast %164 : vector<1x512xf32> to vector<48x512xf32>
    %166 = arith.addf %163, %165 : vector<48x512xf32>
    %167 = vector.extract_strided_slice %166 {offsets = [0, 0], sizes = [48, 256], strides = [1, 1]} : vector<48x512xf32> to vector<48x256xf32>
    %168 = vector.extract_strided_slice %166 {offsets = [0, 256], sizes = [48, 256], strides = [1, 1]} : vector<48x512xf32> to vector<48x256xf32>
    %169 = vector.extract_strided_slice %159 {offsets = [0, 0], sizes = [32, 128], strides = [1, 1]} : vector<32x256xf32> to vector<32x128xf32>
    %170 = vector.extract_strided_slice %159 {offsets = [0, 128], sizes = [32, 128], strides = [1, 1]} : vector<32x256xf32> to vector<32x128xf32>
    %171 = vector.shape_cast %169 : vector<32x128xf32> to vector<1x32x128xf32>
    %172 = vector.shape_cast %170 : vector<32x128xf32> to vector<1x32x128xf32>
    %173 = tpu.concatenate %171, %172 in 0 : vector<1x32x128xf32>, vector<1x32x128xf32> -> vector<2x32x128xf32>
    %174 = arith.truncf %173 : vector<2x32x128xf32> to vector<2x32x128xbf16>
    %175 = vector.extract_strided_slice %167 {offsets = [0, 0], sizes = [48, 128], strides = [1, 1]} : vector<48x256xf32> to vector<48x128xf32>
    %176 = vector.extract_strided_slice %167 {offsets = [0, 128], sizes = [48, 128], strides = [1, 1]} : vector<48x256xf32> to vector<48x128xf32>
    %177 = vector.shape_cast %175 : vector<48x128xf32> to vector<1x48x128xf32>
    %178 = vector.shape_cast %176 : vector<48x128xf32> to vector<1x48x128xf32>
    %179 = tpu.concatenate %177, %178 in 0 : vector<1x48x128xf32>, vector<1x48x128xf32> -> vector<2x48x128xf32>
    %180 = arith.truncf %179 : vector<2x48x128xf32> to vector<2x48x128xbf16>
    %181 = vector.extract_strided_slice %168 {offsets = [0, 0], sizes = [48, 128], strides = [1, 1]} : vector<48x256xf32> to vector<48x128xf32>
    %182 = vector.extract_strided_slice %168 {offsets = [0, 128], sizes = [48, 128], strides = [1, 1]} : vector<48x256xf32> to vector<48x128xf32>
    %183 = vector.shape_cast %181 : vector<48x128xf32> to vector<1x48x128xf32>
    %184 = vector.shape_cast %182 : vector<48x128xf32> to vector<1x48x128xf32>
    %185 = tpu.concatenate %183, %184 in 0 : vector<1x48x128xf32>, vector<1x48x128xf32> -> vector<2x48x128xf32>
    %186 = arith.truncf %185 : vector<2x48x128xf32> to vector<2x48x128xbf16>
    "tpu.trace_start"() <{level = 10 : i32, message = "hqd,hkd->hqk"}> : () -> ()
    %cst_66 = arith.constant dense<0.000000e+00> : vector<2x32x48xf32>
    %187 = tpu.matmul %174, %180, %cst_66 {dimension_numbers = #tpu.dot_dimension_numbers<[2], [2], [1], [1], [0, 0, 0, 1, 1, 1], [0], [0]>} : vector<2x32x128xbf16>, vector<2x48x128xbf16>, vector<2x32x48xf32> -> vector<2x32x48xf32>
    "tpu.trace_stop"() : () -> ()
    %188 = vector.shape_cast %22 : vector<32x48xf32> to vector<1x32x48xf32>
    %189 = vector.broadcast %188 : vector<1x32x48xf32> to vector<2x32x48xf32>
    %190 = arith.addf %187, %189 : vector<2x32x48xf32>
    %cst_67 = arith.constant dense<0xFF800000> : vector<2x32xf32>
    %191 = vector.multi_reduction <maximumf>, %190, %cst_67 [2] : vector<2x32x48xf32> to vector<2x32xf32>
    %192 = vector.shape_cast %191 : vector<2x32xf32> to vector<2x32x1xf32>
    %193 = vector.broadcast %192 : vector<2x32x1xf32> to vector<2x32x48xf32>
    %194 = arith.subf %190, %193 : vector<2x32x48xf32>
    %195 = math.exp %194 : vector<2x32x48xf32>
    %cst_68 = arith.constant dense<0.000000e+00> : vector<2x32xf32>
    %196 = vector.multi_reduction <add>, %195, %cst_68 [2] : vector<2x32x48xf32> to vector<2x32xf32>
    %197 = vector.shape_cast %196 : vector<2x32xf32> to vector<2x32x1xf32>
    %198 = tpu.reciprocal %197 {approx = true} : vector<2x32x1xf32> -> vector<2x32x1xf32>
    %199 = vector.broadcast %198 : vector<2x32x1xf32> to vector<2x32x48xf32>
    %200 = arith.mulf %195, %199 : vector<2x32x48xf32>
    %201 = arith.truncf %200 : vector<2x32x48xf32> to vector<2x32x48xbf16>
    "tpu.trace_start"() <{level = 10 : i32, message = "hqk,hkd->hqd"}> : () -> ()
    %cst_69 = arith.constant dense<0.000000e+00> : vector<2x32x128xf32>
    %202 = tpu.matmul %201, %186, %cst_69 {dimension_numbers = #tpu.dot_dimension_numbers<[2], [1], [1], [2], [0, 0, 0, 1, 1, 2], [0], [0]>} : vector<2x32x48xbf16>, vector<2x48x128xbf16>, vector<2x32x128xf32> -> vector<2x32x128xf32>
    "tpu.trace_stop"() : () -> ()
    %c2 = arith.constant 2 : index
    %c0_70 = arith.constant 0 : index
    %c0_71 = arith.constant 0 : index
    %203 = vector.load %arg10[%c2, %c0_70, %c0_71] : memref<4x128x256xbf16, #tpu.memory_space<vmem>>, vector<2x128x256xbf16>
    %204 = vector.extract_strided_slice %8 {offsets = [3, 0], sizes = [1, 256], strides = [1, 1]} : vector<5x256xf32> to vector<1x256xf32>
    %205 = arith.truncf %202 : vector<2x32x128xf32> to vector<2x32x128xbf16>
    "tpu.trace_start"() <{level = 10 : i32, message = "hqd,hde->hqe"}> : () -> ()
    %cst_72 = arith.constant dense<0.000000e+00> : vector<2x32x256xf32>
    %206 = tpu.matmul %205, %203, %cst_72 {dimension_numbers = #tpu.dot_dimension_numbers<[2], [1], [1], [2], [0, 0, 0, 1, 1, 2], [0], [0]>} : vector<2x32x128xbf16>, vector<2x128x256xbf16>, vector<2x32x256xf32> -> vector<2x32x256xf32>
    "tpu.trace_stop"() : () -> ()
    %cst_73 = arith.constant dense<0.000000e+00> : vector<32x256xf32>
    %207 = vector.multi_reduction <add>, %206, %cst_73 [0] : vector<2x32x256xf32> to vector<32x256xf32>
    %208 = vector.broadcast %204 : vector<1x256xf32> to vector<32x256xf32>
    %209 = arith.addf %207, %208 : vector<32x256xf32>
    %210 = arith.addf %128, %209 : vector<32x256xf32>
    %211 = vector.extract_strided_slice %6 {offsets = [2, 0], sizes = [1, 256], strides = [1, 1]} : vector<3x256xf32> to vector<1x256xf32>
    %212 = vector.extract_strided_slice %7 {offsets = [2, 0], sizes = [1, 256], strides = [1, 1]} : vector<3x256xf32> to vector<1x256xf32>
    %cst_74 = arith.constant dense<0.000000e+00> : vector<32xf32>
    %213 = vector.multi_reduction <add>, %210, %cst_74 [1] : vector<32x256xf32> to vector<32xf32>
    %214 = vector.shape_cast %213 : vector<32xf32> to vector<32x1xf32>
    %cst_75 = arith.constant 2.560000e+02 : f32
    %215 = vector.broadcast %cst_75 : f32 to vector<32x1xf32>
    %216 = arith.divf %214, %215 : vector<32x1xf32>
    %217 = vector.broadcast %216 : vector<32x1xf32> to vector<32x256xf32>
    %218 = arith.subf %210, %217 : vector<32x256xf32>
    %219 = arith.mulf %218, %218 : vector<32x256xf32>
    %cst_76 = arith.constant dense<0.000000e+00> : vector<32xf32>
    %220 = vector.multi_reduction <add>, %219, %cst_76 [1] : vector<32x256xf32> to vector<32xf32>
    %221 = vector.shape_cast %220 : vector<32xf32> to vector<32x1xf32>
    %cst_77 = arith.constant 2.560000e+02 : f32
    %222 = vector.broadcast %cst_77 : f32 to vector<32x1xf32>
    %223 = arith.divf %221, %222 : vector<32x1xf32>
    %224 = vector.broadcast %216 : vector<32x1xf32> to vector<32x256xf32>
    %225 = arith.subf %210, %224 : vector<32x256xf32>
    %226 = vector.broadcast %211 : vector<1x256xf32> to vector<32x256xf32>
    %227 = arith.mulf %226, %225 : vector<32x256xf32>
    %cst_78 = arith.constant 9.99999997E-7 : f32
    %228 = vector.broadcast %cst_78 : f32 to vector<32x1xf32>
    %229 = arith.addf %223, %228 : vector<32x1xf32>
    %230 = math.rsqrt %229 : vector<32x1xf32>
    %231 = vector.broadcast %230 : vector<32x1xf32> to vector<32x256xf32>
    %232 = arith.mulf %227, %231 : vector<32x256xf32>
    %233 = vector.broadcast %212 : vector<1x256xf32> to vector<32x256xf32>
    %234 = arith.addf %232, %233 : vector<32x256xf32>
    %235 = arith.truncf %234 : vector<32x256xf32> to vector<32x256xbf16>
    %c0_79 = arith.constant 0 : index
    %c0_80 = arith.constant 0 : index
    %236 = vector.load %arg11[%c0_79, %c0_80] : memref<256x512xbf16, #tpu.memory_space<vmem>>, vector<256x512xbf16>
    %cst_81 = arith.constant dense<0.000000e+00> : vector<32x512xf32>
    %237 = tpu.matmul %235, %236, %cst_81 {dimension_numbers = #tpu.dot_dimension_numbers<[1], [0], [0], [1], [0, 0, 1, 1], [], []>} : vector<32x256xbf16>, vector<256x512xbf16>, vector<32x512xf32> -> vector<32x512xf32>
    %c0_82 = arith.constant 0 : index
    %c0_83 = arith.constant 0 : index
    %238 = vector.load %arg12[%c0_82, %c0_83] : memref<1x512xf32, #tpu.memory_space<vmem>>, vector<1x512xf32>
    %239 = vector.broadcast %238 : vector<1x512xf32> to vector<32x512xf32>
    %240 = arith.addf %237, %239 : vector<32x512xf32>
    %cst_84 = arith.constant 0.000000e+00 : f32
    %241 = vector.broadcast %cst_84 : f32 to vector<32x512xf32>
    %242 = arith.maximumf %240, %241 : vector<32x512xf32>
    %243 = arith.truncf %242 : vector<32x512xf32> to vector<32x512xbf16>
    %c0_85 = arith.constant 0 : index
    %c0_86 = arith.constant 0 : index
    %244 = vector.load %arg13[%c0_85, %c0_86] : memref<512x256xbf16, #tpu.memory_space<vmem>>, vector<512x256xbf16>
    %cst_87 = arith.constant dense<0.000000e+00> : vector<32x256xf32>
    %245 = tpu.matmul %243, %244, %cst_87 {dimension_numbers = #tpu.dot_dimension_numbers<[1], [0], [0], [1], [0, 0, 1, 1], [], []>} : vector<32x512xbf16>, vector<512x256xbf16>, vector<32x256xf32> -> vector<32x256xf32>
    %246 = arith.addf %210, %245 : vector<32x256xf32>
    %247 = vector.extract_strided_slice %8 {offsets = [4, 0], sizes = [1, 256], strides = [1, 1]} : vector<5x256xf32> to vector<1x256xf32>
    %248 = vector.broadcast %247 : vector<1x256xf32> to vector<32x256xf32>
    %249 = arith.addf %246, %248 : vector<32x256xf32>
    %c0_88 = arith.constant 0 : index
    %c0_89 = arith.constant 0 : index
    %c0_90 = arith.constant 0 : index
    %250 = vector.load %arg17[%c0_88, %c0_89, %c0_90] : memref<1x32x256xf32, #tpu.memory_space<vmem>>, vector<1x32x256xf32>
    %251 = vector.shape_cast %250 : vector<1x32x256xf32> to vector<32x256xf32>
    %252 = vector.shape_cast %249 : vector<32x256xf32> to vector<1x32x256xf32>
    tpu.vector_store %arg17[%c0_88, %c0_89, %c0_90], %252 {strides = array<i32>} : memref<1x32x256xf32, #tpu.memory_space<vmem>>, vector<1x32x256xf32>,
    return
  }
  func.func @transform_0(%arg0: i32, %arg1: i32) -> (i32, i32, i32) {
    %c0_i32 = arith.constant 0 : i32
    %c0_i32_0 = arith.constant 0 : i32
    return %arg0, %arg1, %c0_i32 : i32, i32, i32
  }
  func.func @transform_1(%arg0: i32, %arg1: i32) -> (i32, i32, i32) {
    %c0_i32 = arith.constant 0 : i32
    %c0_i32_0 = arith.constant 0 : i32
    %c0_i32_1 = arith.constant 0 : i32
    return %arg0, %c0_i32, %c0_i32_0 : i32, i32, i32
  }
  func.func @transform_2(%arg0: i32, %arg1: i32) -> (i32, i32, i32) {
    %c0_i32 = arith.constant 0 : i32
    %c0_i32_0 = arith.constant 0 : i32
    %c0_i32_1 = arith.constant 0 : i32
    return %arg0, %c0_i32, %c0_i32_0 : i32, i32, i32
  }
  func.func @transform_3(%arg0: i32, %arg1: i32) -> (i32, i32, i32) {
    %c0_i32 = arith.constant 0 : i32
    %c0_i32_0 = arith.constant 0 : i32
    return %arg0, %arg1, %c0_i32 : i32, i32, i32
  }
  func.func @transform_4(%arg0: i32, %arg1: i32) -> (i32, i32, i32) {
    %c0_i32 = arith.constant 0 : i32
    %c0_i32_0 = arith.constant 0 : i32
    return %arg0, %arg1, %c0_i32 : i32, i32, i32
  }
  func.func @transform_5(%arg0: i32, %arg1: i32) -> (i32, i32, i32) {
    %c0_i32 = arith.constant 0 : i32
    %c0_i32_0 = arith.constant 0 : i32
    %c0_i32_1 = arith.constant 0 : i32
    %c0_i32_2 = arith.constant 0 : i32
    return %c0_i32, %c0_i32_0, %c0_i32_1 : i32, i32, i32
  }
  func.func @transform_6(%arg0: i32, %arg1: i32) -> (i32, i32, i32) {
    %c0_i32 = arith.constant 0 : i32
    %c0_i32_0 = arith.constant 0 : i32
    %c0_i32_1 = arith.constant 0 : i32
    %c0_i32_2 = arith.constant 0 : i32
    return %c0_i32, %c0_i32_0, %c0_i32_1 : i32, i32, i32
  }
  func.func @transform_7(%arg0: i32, %arg1: i32) -> (i32, i32) {
    %c0_i32 = arith.constant 0 : i32
    %c0_i32_0 = arith.constant 0 : i32
    %c0_i32_1 = arith.constant 0 : i32
    return %c0_i32, %c0_i32_0 : i32, i32
  }
  func.func @transform_8(%arg0: i32, %arg1: i32) -> (i32, i32, i32) {
    %c0_i32 = arith.constant 0 : i32
    %c0_i32_0 = arith.constant 0 : i32
    %c0_i32_1 = arith.constant 0 : i32
    %c0_i32_2 = arith.constant 0 : i32
    return %c0_i32, %c0_i32_0, %c0_i32_1 : i32, i32, i32
  }
  func.func @transform_9(%arg0: i32, %arg1: i32) -> (i32, i32) {
    %c0_i32 = arith.constant 0 : i32
    %c0_i32_0 = arith.constant 0 : i32
    %c0_i32_1 = arith.constant 0 : i32
    return %c0_i32, %c0_i32_0 : i32, i32
  }
  func.func @transform_10(%arg0: i32, %arg1: i32) -> (i32, i32) {
    %c0_i32 = arith.constant 0 : i32
    %c0_i32_0 = arith.constant 0 : i32
    %c0_i32_1 = arith.constant 0 : i32
    return %c0_i32, %c0_i32_0 : i32, i32
  }
  func.func @transform_11(%arg0: i32, %arg1: i32) -> (i32, i32) {
    %c0_i32 = arith.constant 0 : i32
    %c0_i32_0 = arith.constant 0 : i32
    %c0_i32_1 = arith.constant 0 : i32
    return %c0_i32, %c0_i32_0 : i32, i32
  }
  func.func @transform_12(%arg0: i32, %arg1: i32) -> (i32, i32) {
    %c0_i32 = arith.constant 0 : i32
    %c0_i32_0 = arith.constant 0 : i32
    %c0_i32_1 = arith.constant 0 : i32
    return %c0_i32, %c0_i32_0 : i32, i32
  }
  func.func @transform_13(%arg0: i32, %arg1: i32) -> (i32, i32) {
    %c0_i32 = arith.constant 0 : i32
    %c0_i32_0 = arith.constant 0 : i32
    %c0_i32_1 = arith.constant 0 : i32
    return %c0_i32, %c0_i32_0 : i32, i32
  }
  func.func @transform_14(%arg0: i32, %arg1: i32) -> (i32, i32) {
    %c0_i32 = arith.constant 0 : i32
    %c0_i32_0 = arith.constant 0 : i32
    %c0_i32_1 = arith.constant 0 : i32
    return %c0_i32, %c0_i32_0 : i32, i32
  }
  func.func @transform_15(%arg0: i32, %arg1: i32) -> (i32, i32, i32) {
    %c0_i32 = arith.constant 0 : i32
    %c0_i32_0 = arith.constant 0 : i32
    return %arg0, %arg1, %c0_i32 : i32, i32, i32
  }
}

</mosaic_0001>

<llo_original>
// kernel: tpu_custom_call.1
$region0: #{tpu_custom_call.1}
  #allocation0 [shape = 'u32[]', space=smem, size = 0x4, offset = 0x4, fixed_abs, tag = 'smem constant byte address 0x4 - core index']
  #allocation1 [shape = 'u32[144,128]{1,0:T(1,128)}', space=vmem, size = 0x12000, scoped, tag = 'internal scratch']
  %s0 = inlined_call_operand.hbm [shape: f32[2,64,256], index: 0, kind: input, shape index: {}]
  %s1 = inlined_call_operand.hbm [shape: f32[2,64,256], index: 1, kind: input, shape index: {}]
  %s2 = inlined_call_operand.hbm [shape: f32[2,48,256], index: 2, kind: input, shape index: {}]
  %s3 = inlined_call_operand.vmem [shape: s8[2,64,64], index: 3, kind: input, shape index: {}]
  %s4 = inlined_call_operand.vmem [shape: s8[2,64,48], index: 4, kind: input, shape index: {}]
  %s5 = inlined_call_operand.hbm [shape: bf16[2,256,256], index: 5, kind: input, shape index: {}]
  %s6 = inlined_call_operand.hbm [shape: bf16[2,256,512], index: 6, kind: input, shape index: {}]
  %s7 = inlined_call_operand.vmem [shape: f32[2,512], index: 7, kind: input, shape index: {}]
  %s8 = inlined_call_operand.hbm [shape: bf16[4,128,256], index: 8, kind: input, shape index: {}]
  %s9 = inlined_call_operand.hbm [shape: bf16[256,512], index: 9, kind: input, shape index: {}]
  %s10 = inlined_call_operand.vmem [shape: f32[1,512], index: 10, kind: input, shape index: {}]
  %s11 = inlined_call_operand.hbm [shape: bf16[512,256], index: 11, kind: input, shape index: {}]
  %s12 = inlined_call_operand.vmem [shape: f32[5,256], index: 12, kind: input, shape index: {}]
  %s13 = inlined_call_operand.vmem [shape: f32[3,256], index: 13, kind: input, shape index: {}]
  %s14 = inlined_call_operand.vmem [shape: f32[3,256], index: 14, kind: input, shape index: {}]
  %s15 = inlined_call_operand.hbm [shape: f32[2,64,256], index: 15, kind: output, shape index: {}]
  %s16 = sld [smem:[#allocation0]]
  $region125: #{tpu_custom_call.1} parent=0
    _
  %s18 = ssub.s32 1, %s16
  %s19 = scalar_select 0, %s18, %s16
  $region1: #{tpu_custom_call.1} parent=0
    #allocation2 [shape = 'u8[65536]{0}', space=vmem, size = 0x10000, scoped, tag = 'input window, operand 0']
    #allocation3 [shape = 's32[2]{0}', space=sflag, size = 0x8, scoped, tag = 'scoped memory for tpu_custom_call.1']
    #allocation4 [shape = 's32[2]{0}', space=sflag, size = 0x8, scoped, tag = 'scoped memory for tpu_custom_call.1']
    #allocation5 [shape = 'u8[131072]{0}', space=vmem, size = 0x20000, scoped, tag = 'input window, operand 1']
    #allocation6 [shape = 's32[2]{0}', space=sflag, size = 0x8, scoped, tag = 'scoped memory for tpu_custom_call.1']
    #allocation7 [shape = 'u8[98304]{0}', space=vmem, size = 0x18000, scoped, tag = 'input window, operand 2']
    #allocation8 [shape = 'u8[262144]{0}', space=vmem, size = 0x40000, scoped, tag = 'input window, operand 5, single buffered']
    #allocation9 [shape = 's32[1]{0}', space=sflag, size = 0x4, scoped, tag = 'scoped memory for tpu_custom_call.1']
    #allocation10 [shape = 'u8[524288]{0}', space=vmem, size = 0x80000, scoped, tag = 'input window, operand 6, single buffered']
    #allocation11 [shape = 'u8[262144]{0}', space=vmem, size = 0x40000, scoped, tag = 'input window, operand 8, single buffered']
    #allocation12 [shape = 's32[1]{0}', space=sflag, size = 0x4, scoped, tag = 'scoped memory for tpu_custom_call.1']
    #allocation13 [shape = 'u8[262144]{0}', space=vmem, size = 0x40000, scoped, tag = 'input window, operand 9, single buffered']
    #allocation14 [shape = 'u8[262144]{0}', space=vmem, size = 0x40000, scoped, tag = 'input window, operand 11, single buffered']
    #allocation15 [shape = 's32[1]{0}', space=sflag, size = 0x4, scoped, tag = 'scoped memory for tpu_custom_call.1']
    #allocation16 [shape = 'u8[65536]{0}', space=vmem, size = 0x10000, scoped, tag = 'output window, operand 0']
    %20 = vsyncpa [#allocation3], 0
    %s21 = scalar_lea.sflag [#allocation3], 1
    %22 = vsyncpa %s21, 0
    %23 = vsyncpa [#allocation6], 0
    %s24 = scalar_lea.sflag [#allocation6], 1
    %25 = vsyncpa %s24, 0
    %26 = vsyncpa [#allocation9], 0
    %27 = vsyncpa [#allocation12], 0
    %28 = vsyncpa [#allocation15], 0
    %29 = vsyncpa [#allocation4], 0
    %s30 = scalar_lea.sflag [#allocation4], 1
    %31 = vsyncpa %s30, 0
    loop: start=0, step=1, limit=6
    $region2: #{tpu_custom_call.1} parent=1 // loop_pre_header
      _
    $region3: #{tpu_custom_call.1} parent=1 // loop_header
      %s33 = sphi 0, %s37
      %p34 = scmp.ge.s32.totalorder %s33, 6
      %s40 = sphi 0, %s52
      %s41 = sphi 0, %s48
      %s42 = sphi 0, %s40
      %s43 = sphi 0, %s41
      %s44 = sphi 0, %s42
      %s45 = sphi 0, %s43
      %s57 = sphi 0, %s59
      %s60 = sphi 0, %s57
      %s61 = sphi 0, %s60
      %s77 = sphi 0, %s61
      %s83 = sphi 0, %s85
      %s86 = sphi 0, %s83
      %s87 = sphi 0, %s86
      %s103 = sphi 0, %s87
      %s109 = sphi 0, %s111
      %s112 = sphi 0, %s109
      %s113 = sphi 0, %s112
      %s129 = sphi 0, %s113
      %s137 = sphi 0, %s139
      %s140 = sphi 0, %s137
      %s141 = sphi 0, %s140
      %s157 = sphi 0, %s141
      %s165 = sphi 0, %s167
      %s168 = sphi 0, %s165
      %s169 = sphi 0, %s168
      %s185 = sphi 0, %s169
      %s189 = sphi 0, %s189
      %s191 = sphi 0, %s189
      %s192 = sphi 0, %s191
      %s206 = sphi 0, %s192
      %s210 = sphi 0, %s210
      %s212 = sphi 0, %s210
      %s213 = sphi 0, %s212
      %s227 = sphi 0, %s213
      %s231 = sphi 0, %s231
      %s233 = sphi 0, %s231
      %s234 = sphi 0, %s233
      %s248 = sphi 0, %s234
      %s252 = sphi 0, %s252
      %s254 = sphi 0, %s252
      %s255 = sphi 0, %s254
      %s269 = sphi 0, %s255
      %s273 = sphi 0, %s273
      %s275 = sphi 0, %s273
      %s276 = sphi 0, %s275
      %s290 = sphi 0, %s276
      %s294 = sphi 0, %s294
      %s296 = sphi 0, %s294
      %s297 = sphi 0, %s296
      %s311 = sphi 0, %s297
      %s315 = sphi 0, %s315
      %s317 = sphi 0, %s315
      %s318 = sphi 0, %s317
      %s332 = sphi 0, %s318
      %s336 = sphi 0, %s336
      %s338 = sphi 0, %s336
      %s339 = sphi 0, %s338
      %s353 = sphi 0, %s339
      %s357 = sphi 0, %s357
      %s359 = sphi 0, %s357
      %s360 = sphi 0, %s359
      %s374 = sphi 0, %s360
      %s378 = sphi 0, %s378
      %s380 = sphi 0, %s378
      %s381 = sphi 0, %s380
      %s395 = sphi 0, %s381
      %s403 = sphi 0, %s405
      %s406 = sphi 0, %s403
      %s407 = sphi 0, %s406
      %s423 = sphi 0, %s407
    $region4: #{tpu_custom_call.1} parent=1 // loop_header_branch
      %36 = sbr.rel (%p34) target = $region8
    $region5: #{tpu_custom_call.1} parent=1 // loop_body
      %s38 = ssub.s32 %s33, 1
      %s39 = ssub.s32 %s33, 2
      %s46 = sadd.s32 1, %s41
      %p47 = scmp.ge.s32.totalorder %s46, 2
      %s48 = scalar_select %p47, 0, %s46
      %s49 = sadd.s32 1, %s40
      %s50 = scalar_select %p47, %s49, %s40
      %p51 = scmp.ge.s32.totalorder %s50, 2
      %s52 = scalar_select %p51, 0, %s50
      %s53 = ssub.s32 %s40, %s52
      %s54 = ssub.s32 %s41, %s48
      %s55 = sor.u32 %s53, %s54
      %p56 = scmp.eq.s32.totalorder %s55, 0
      %s58 = sadd.s32 %s57, 1
      %s59 = scalar_select %p56, %s57, %s58
      %p62 = pneg %p56
      %p63 = scmp.eq.s32.totalorder %s33, 3
      %p64 = por %p62, %p63
      %p65 = scmp.ne.s32.totalorder %s57, %s60
      %p66 = scmp.eq.s32.totalorder %s33, 0
      %p67 = por %p65, %p66
      %p68 = scmp.ne.s32.totalorder %s57, %s60
      %p69 = scmp.eq.s32.totalorder %s38, 3
      %p70 = por %p68, %p69
      %p71 = scmp.ne.s32.totalorder %s60, %s61
      %p72 = scmp.eq.s32.totalorder %s38, 0
      %p73 = por %p71, %p72
      %p74 = scmp.ne.s32.totalorder %s60, %s61
      %p75 = scmp.eq.s32.totalorder %s39, 3
      %p76 = por %p74, %p75
      %p78 = scmp.ne.s32.totalorder %s61, %s77
      %p79 = scmp.eq.s32.totalorder %s39, 0
      %p80 = por %p78, %p79
      %s81 = ssub.s32 %s40, %s52
      %p82 = scmp.eq.s32.totalorder %s81, 0
      %s84 = sadd.s32 %s83, 1
      %s85 = scalar_select %p82, %s83, %s84
      %p88 = pneg %p82
      %p89 = scmp.eq.s32.totalorder %s33, 3
      %p90 = por %p88, %p89
      %p91 = scmp.ne.s32.totalorder %s83, %s86
      %p92 = scmp.eq.s32.totalorder %s33, 0
      %p93 = por %p91, %p92
      %p94 = scmp.ne.s32.totalorder %s83, %s86
      %p95 = scmp.eq.s32.totalorder %s38, 3
      %p96 = por %p94, %p95
      %p97 = scmp.ne.s32.totalorder %s86, %s87
      %p98 = scmp.eq.s32.totalorder %s38, 0
      %p99 = por %p97, %p98
      %p100 = scmp.ne.s32.totalorder %s86, %s87
      %p101 = scmp.eq.s32.totalorder %s39, 3
      %p102 = por %p100, %p101
      %p104 = scmp.ne.s32.totalorder %s87, %s103
      %p105 = scmp.eq.s32.totalorder %s39, 0
      %p106 = por %p104, %p105
      %s107 = ssub.s32 %s40, %s52
      %p108 = scmp.eq.s32.totalorder %s107, 0
      %s110 = sadd.s32 %s109, 1
      %s111 = scalar_select %p108, %s109, %s110
      %p114 = pneg %p108
      %p115 = scmp.eq.s32.totalorder %s33, 3
      %p116 = por %p114, %p115
      %p117 = scmp.ne.s32.totalorder %s109, %s112
      %p118 = scmp.eq.s32.totalorder %s33, 0
      %p119 = por %p117, %p118
      %p120 = scmp.ne.s32.totalorder %s109, %s112
      %p121 = scmp.eq.s32.totalorder %s38, 3
      %p122 = por %p120, %p121
      %p123 = scmp.ne.s32.totalorder %s112, %s113
      %p124 = scmp.eq.s32.totalorder %s38, 0
      %p125 = por %p123, %p124
      %p126 = scmp.ne.s32.totalorder %s112, %s113
      %p127 = scmp.eq.s32.totalorder %s39, 3
      %p128 = por %p126, %p127
      %p130 = scmp.ne.s32.totalorder %s113, %s129
      %p131 = scmp.eq.s32.totalorder %s39, 0
      %p132 = por %p130, %p131
      %s133 = ssub.s32 %s40, %s52
      %s134 = ssub.s32 %s41, %s48
      %s135 = sor.u32 %s133, %s134
      %p136 = scmp.eq.s32.totalorder %s135, 0
      %s138 = sadd.s32 %s137, 1
      %s139 = scalar_select %p136, %s137, %s138
      %p142 = pneg %p136
      %p143 = scmp.eq.s32.totalorder %s33, 3
      %p144 = por %p142, %p143
      %p145 = scmp.ne.s32.totalorder %s137, %s140
      %p146 = scmp.eq.s32.totalorder %s33, 0
      %p147 = por %p145, %p146
      %p148 = scmp.ne.s32.totalorder %s137, %s140
      %p149 = scmp.eq.s32.totalorder %s38, 3
      %p150 = por %p148, %p149
      %p151 = scmp.ne.s32.totalorder %s140, %s141
      %p152 = scmp.eq.s32.totalorder %s38, 0
      %p153 = por %p151, %p152
      %p154 = scmp.ne.s32.totalorder %s140, %s141
      %p155 = scmp.eq.s32.totalorder %s39, 3
      %p156 = por %p154, %p155
      %p158 = scmp.ne.s32.totalorder %s141, %s157
      %p159 = scmp.eq.s32.totalorder %s39, 0
      %p160 = por %p158, %p159
      %s161 = ssub.s32 %s40, %s52
      %s162 = ssub.s32 %s41, %s48
      %s163 = sor.u32 %s161, %s162
      %p164 = scmp.eq.s32.totalorder %s163, 0
      %s166 = sadd.s32 %s165, 1
      %s167 = scalar_select %p164, %s165, %s166
      %p170 = pneg %p164
      %p171 = scmp.eq.s32.totalorder %s33, 3
      %p172 = por %p170, %p171
      %p173 = scmp.ne.s32.totalorder %s165, %s168
      %p174 = scmp.eq.s32.totalorder %s33, 0
      %p175 = por %p173, %p174
      %p176 = scmp.ne.s32.totalorder %s165, %s168
      %p177 = scmp.eq.s32.totalorder %s38, 3
      %p178 = por %p176, %p177
      %p179 = scmp.ne.s32.totalorder %s168, %s169
      %p180 = scmp.eq.s32.totalorder %s38, 0
      %p181 = por %p179, %p180
      %p182 = scmp.ne.s32.totalorder %s168, %s169
      %p183 = scmp.eq.s32.totalorder %s39, 3
      %p184 = por %p182, %p183
      %p186 = scmp.ne.s32.totalorder %s169, %s185
      %p187 = scmp.eq.s32.totalorder %s39, 0
      %p188 = por %p186, %p187
      %s190 = sadd.s32 %s189, 1
      %p193 = scmp.eq.s32.totalorder %s33, 3
      %p194 = scmp.ne.s32.totalorder %s189, %s191
      %p195 = scmp.eq.s32.totalorder %s33, 0
      %p196 = por %p194, %p195
      %p197 = scmp.ne.s32.totalorder %s189, %s191
      %p198 = scmp.eq.s32.totalorder %s38, 3
      %p199 = por %p197, %p198
      %p200 = scmp.ne.s32.totalorder %s191, %s192
      %p201 = scmp.eq.s32.totalorder %s38, 0
      %p202 = por %p200, %p201
      %p203 = scmp.ne.s32.totalorder %s191, %s192
      %p204 = scmp.eq.s32.totalorder %s39, 3
      %p205 = por %p203, %p204
      %p207 = scmp.ne.s32.totalorder %s192, %s206
      %p208 = scmp.eq.s32.totalorder %s39, 0
      %p209 = por %p207, %p208
      %s211 = sadd.s32 %s210, 1
      %p214 = scmp.eq.s32.totalorder %s33, 3
      %p215 = scmp.ne.s32.totalorder %s210, %s212
      %p216 = scmp.eq.s32.totalorder %s33, 0
      %p217 = por %p215, %p216
      %p218 = scmp.ne.s32.totalorder %s210, %s212
      %p219 = scmp.eq.s32.totalorder %s38, 3
      %p220 = por %p218, %p219
      %p221 = scmp.ne.s32.totalorder %s212, %s213
      %p222 = scmp.eq.s32.totalorder %s38, 0
      %p223 = por %p221, %p222
      %p224 = scmp.ne.s32.totalorder %s212, %s213
      %p225 = scmp.eq.s32.totalorder %s39, 3
      %p226 = por %p224, %p225
      %p228 = scmp.ne.s32.totalorder %s213, %s227
      %p229 = scmp.eq.s32.totalorder %s39, 0
      %p230 = por %p228, %p229
      %s232 = sadd.s32 %s231, 1
      %p235 = scmp.eq.s32.totalorder %s33, 3
      %p236 = scmp.ne.s32.totalorder %s231, %s233
      %p237 = scmp.eq.s32.totalorder %s33, 0
      %p238 = por %p236, %p237
      %p239 = scmp.ne.s32.totalorder %s231, %s233
      %p240 = scmp.eq.s32.totalorder %s38, 3
      %p241 = por %p239, %p240
      %p242 = scmp.ne.s32.totalorder %s233, %s234
      %p243 = scmp.eq.s32.totalorder %s38, 0
      %p244 = por %p242, %p243
      %p245 = scmp.ne.s32.totalorder %s233, %s234
      %p246 = scmp.eq.s32.totalorder %s39, 3
      %p247 = por %p245, %p246
      %p249 = scmp.ne.s32.totalorder %s234, %s248
      %p250 = scmp.eq.s32.totalorder %s39, 0
      %p251 = por %p249, %p250
      %s253 = sadd.s32 %s252, 1
      %p256 = scmp.eq.s32.totalorder %s33, 3
      %p257 = scmp.ne.s32.totalorder %s252, %s254
      %p258 = scmp.eq.s32.totalorder %s33, 0
      %p259 = por %p257, %p258
      %p260 = scmp.ne.s32.totalorder %s252, %s254
      %p261 = scmp.eq.s32.totalorder %s38, 3
      %p262 = por %p260, %p261
      %p263 = scmp.ne.s32.totalorder %s254, %s255
      %p264 = scmp.eq.s32.totalorder %s38, 0
      %p265 = por %p263, %p264
      %p266 = scmp.ne.s32.totalorder %s254, %s255
      %p267 = scmp.eq.s32.totalorder %s39, 3
      %p268 = por %p266, %p267
      %p270 = scmp.ne.s32.totalorder %s255, %s269
      %p271 = scmp.eq.s32.totalorder %s39, 0
      %p272 = por %p270, %p271
      %s274 = sadd.s32 %s273, 1
      %p277 = scmp.eq.s32.totalorder %s33, 3
      %p278 = scmp.ne.s32.totalorder %s273, %s275
      %p279 = scmp.eq.s32.totalorder %s33, 0
      %p280 = por %p278, %p279
      %p281 = scmp.ne.s32.totalorder %s273, %s275
      %p282 = scmp.eq.s32.totalorder %s38, 3
      %p283 = por %p281, %p282
      %p284 = scmp.ne.s32.totalorder %s275, %s276
      %p285 = scmp.eq.s32.totalorder %s38, 0
      %p286 = por %p284, %p285
      %p287 = scmp.ne.s32.totalorder %s275, %s276
      %p288 = scmp.eq.s32.totalorder %s39, 3
      %p289 = por %p287, %p288
      %p291 = scmp.ne.s32.totalorder %s276, %s290
      %p292 = scmp.eq.s32.totalorder %s39, 0
      %p293 = por %p291, %p292
      %s295 = sadd.s32 %s294, 1
      %p298 = scmp.eq.s32.totalorder %s33, 3
      %p299 = scmp.ne.s32.totalorder %s294, %s296
      %p300 = scmp.eq.s32.totalorder %s33, 0
      %p301 = por %p299, %p300
      %p302 = scmp.ne.s32.totalorder %s294, %s296
      %p303 = scmp.eq.s32.totalorder %s38, 3
      %p304 = por %p302, %p303
      %p305 = scmp.ne.s32.totalorder %s296, %s297
      %p306 = scmp.eq.s32.totalorder %s38, 0
      %p307 = por %p305, %p306
      %p308 = scmp.ne.s32.totalorder %s296, %s297
      %p309 = scmp.eq.s32.totalorder %s39, 3
      %p310 = por %p308, %p309
      %p312 = scmp.ne.s32.totalorder %s297, %s311
      %p313 = scmp.eq.s32.totalorder %s39, 0
      %p314 = por %p312, %p313
      %s316 = sadd.s32 %s315, 1
      %p319 = scmp.eq.s32.totalorder %s33, 3
      %p320 = scmp.ne.s32.totalorder %s315, %s317
      %p321 = scmp.eq.s32.totalorder %s33, 0
      %p322 = por %p320, %p321
      %p323 = scmp.ne.s32.totalorder %s315, %s317
      %p324 = scmp.eq.s32.totalorder %s38, 3
      %p325 = por %p323, %p324
      %p326 = scmp.ne.s32.totalorder %s317, %s318
      %p327 = scmp.eq.s32.totalorder %s38, 0
      %p328 = por %p326, %p327
      %p329 = scmp.ne.s32.totalorder %s317, %s318
      %p330 = scmp.eq.s32.totalorder %s39, 3
      %p331 = por %p329, %p330
      %p333 = scmp.ne.s32.totalorder %s318, %s332
      %p334 = scmp.eq.s32.totalorder %s39, 0
      %p335 = por %p333, %p334
      %s337 = sadd.s32 %s336, 1
      %p340 = scmp.eq.s32.totalorder %s33, 3
      %p341 = scmp.ne.s32.totalorder %s336, %s338
      %p342 = scmp.eq.s32.totalorder %s33, 0
      %p343 = por %p341, %p342
      %p344 = scmp.ne.s32.totalorder %s336, %s338
      %p345 = scmp.eq.s32.totalorder %s38, 3
      %p346 = por %p344, %p345
      %p347 = scmp.ne.s32.totalorder %s338, %s339
      %p348 = scmp.eq.s32.totalorder %s38, 0
      %p349 = por %p347, %p348
      %p350 = scmp.ne.s32.totalorder %s338, %s339
      %p351 = scmp.eq.s32.totalorder %s39, 3
      %p352 = por %p350, %p351
      %p354 = scmp.ne.s32.totalorder %s339, %s353
      %p355 = scmp.eq.s32.totalorder %s39, 0
      %p356 = por %p354, %p355
      %s358 = sadd.s32 %s357, 1
      %p361 = scmp.eq.s32.totalorder %s33, 3
      %p362 = scmp.ne.s32.totalorder %s357, %s359
      %p363 = scmp.eq.s32.totalorder %s33, 0
      %p364 = por %p362, %p363
      %p365 = scmp.ne.s32.totalorder %s357, %s359
      %p366 = scmp.eq.s32.totalorder %s38, 3
      %p367 = por %p365, %p366
      %p368 = scmp.ne.s32.totalorder %s359, %s360
      %p369 = scmp.eq.s32.totalorder %s38, 0
      %p370 = por %p368, %p369
      %p371 = scmp.ne.s32.totalorder %s359, %s360
      %p372 = scmp.eq.s32.totalorder %s39, 3
      %p373 = por %p371, %p372
      %p375 = scmp.ne.s32.totalorder %s360, %s374
      %p376 = scmp.eq.s32.totalorder %s39, 0
      %p377 = por %p375, %p376
      %s379 = sadd.s32 %s378, 1
      %p382 = scmp.eq.s32.totalorder %s33, 3
      %p383 = scmp.ne.s32.totalorder %s378, %s380
      %p384 = scmp.eq.s32.totalorder %s33, 0
      %p385 = por %p383, %p384
      %p386 = scmp.ne.s32.totalorder %s378, %s380
      %p387 = scmp.eq.s32.totalorder %s38, 3
      %p388 = por %p386, %p387
      %p389 = scmp.ne.s32.totalorder %s380, %s381
      %p390 = scmp.eq.s32.totalorder %s38, 0
      %p391 = por %p389, %p390
      %p392 = scmp.ne.s32.totalorder %s380, %s381
      %p393 = scmp.eq.s32.totalorder %s39, 3
      %p394 = por %p392, %p393
      %p396 = scmp.ne.s32.totalorder %s381, %s395
      %p397 = scmp.eq.s32.totalorder %s39, 0
      %p398 = por %p396, %p397
      %s399 = ssub.s32 %s40, %s52
      %s400 = ssub.s32 %s41, %s48
      %s401 = sor.u32 %s399, %s400
      %p402 = scmp.eq.s32.totalorder %s401, 0
      %s404 = sadd.s32 %s403, 1
      %s405 = scalar_select %p402, %s403, %s404
      %p408 = pneg %p402
      %p409 = scmp.eq.s32.totalorder %s33, 3
      %p410 = por %p408, %p409
      %p411 = scmp.ne.s32.totalorder %s403, %s406
      %p412 = scmp.eq.s32.totalorder %s33, 0
      %p413 = por %p411, %p412
      %p414 = scmp.ne.s32.totalorder %s403, %s406
      %p415 = scmp.eq.s32.totalorder %s38, 3
      %p416 = por %p414, %p415
      %p417 = scmp.ne.s32.totalorder %s406, %s407
      %p418 = scmp.eq.s32.totalorder %s38, 0
      %p419 = por %p417, %p418
      %p420 = scmp.ne.s32.totalorder %s406, %s407
      %p421 = scmp.eq.s32.totalorder %s39, 3
      %p422 = por %p420, %p421
      %p424 = scmp.ne.s32.totalorder %s407, %s423
      %p425 = scmp.eq.s32.totalorder %s39, 0
      %p426 = por %p424, %p425
      %p427 = scmp.le.s32.totalorder 1, %s33
      %p428 = scmp.lt.s32.totalorder %s33, 5
      %p429 = pnand %p427, %p428
      %p430 = pneg %p429
      // Predicated region
      $region9: #{tpu_custom_call.1} parent=5 // pred_check
        _
      $region10: #{tpu_custom_call.1} parent=5 // pred_check_branch
        %432 = sbr.rel (%p429) target = $region12
      $region11: #{tpu_custom_call.1} parent=5 // pred_region
        %s433 = ssub.s32 %s33, 1
        // Predicated region
        $region13: #{tpu_custom_call.1} parent=11 // pred_check
          %p434 = pneg %p202
        $region14: #{tpu_custom_call.1} parent=11 // pred_check_branch
          %436 = sbr.rel (%p434) target = $region16
        $region15: #{tpu_custom_call.1} parent=11 // pred_region
          %s438 = ssub.s32 8192, 8192
          %439 = vsyncadd [#allocation9], %s438
          %s440 = sshll.u32 [#allocation8], 4
          %s441 = int_to_ptr.vmem [resolvable:$true] %s440
          %446 = dma.hbm_to_vmem [thread:$0]  %s5, 8192, %s441, [#allocation9], 128, 128, 8
        $region16: #{tpu_custom_call.1} parent=11 // pred_fallthru
          _
        // Predicated region
        $region17: #{tpu_custom_call.1} parent=11 // pred_check
          %p447 = pneg %p223
        $region18: #{tpu_custom_call.1} parent=11 // pred_check_branch
          %449 = sbr.rel (%p447) target = $region20
        $region19: #{tpu_custom_call.1} parent=11 // pred_region
          %s451 = ssub.s32 16384, 16384
          %452 = vsyncadd [#allocation9], %s451
          %s453 = sshll.u32 [#allocation10], 4
          %s454 = int_to_ptr.vmem [resolvable:$true] %s453
          %459 = dma.hbm_to_vmem [thread:$0]  %s6, 16384, %s454, [#allocation9], 256, 256, 16
        $region20: #{tpu_custom_call.1} parent=11 // pred_fallthru
          _
        // Predicated region
        $region21: #{tpu_custom_call.1} parent=11 // pred_check
          %p460 = pneg %p244
        $region22: #{tpu_custom_call.1} parent=11 // pred_check_branch
          %462 = sbr.rel (%p460) target = $region24
        $region23: #{tpu_custom_call.1} parent=11 // pred_region
          _
        $region24: #{tpu_custom_call.1} parent=11 // pred_fallthru
          _
        // Predicated region
        $region25: #{tpu_custom_call.1} parent=11 // pred_check
          %p463 = pneg %p265
        $region26: #{tpu_custom_call.1} parent=11 // pred_check_branch
          %465 = sbr.rel (%p463) target = $region28
        $region27: #{tpu_custom_call.1} parent=11 // pred_region
          %s467 = ssub.s32 8192, 8192
          %468 = vsyncadd [#allocation12], %s467
          %s469 = sshll.u32 [#allocation11], 4
          %s470 = int_to_ptr.vmem [resolvable:$true] %s469
          %475 = dma.hbm_to_vmem [thread:$0]  %s8, 8192, %s470, [#allocation12], 128, 128, 8
        $region28: #{tpu_custom_call.1} parent=11 // pred_fallthru
          _
        // Predicated region
        $region29: #{tpu_custom_call.1} parent=11 // pred_check
          %p476 = pneg %p286
        $region30: #{tpu_custom_call.1} parent=11 // pred_check_branch
          %478 = sbr.rel (%p476) target = $region32
        $region31: #{tpu_custom_call.1} parent=11 // pred_region
          %s480 = ssub.s32 8192, 8192
          %481 = vsyncadd [#allocation12], %s480
          %s482 = sshll.u32 [#allocation13], 4
          %s483 = int_to_ptr.vmem [resolvable:$true] %s482
          %488 = dma.hbm_to_vmem [thread:$0]  %s9, 8192, %s483, [#allocation12], 256, 256, 16
        $region32: #{tpu_custom_call.1} parent=11 // pred_fallthru
          _
        // Predicated region
        $region33: #{tpu_custom_call.1} parent=11 // pred_check
          %p489 = pneg %p307
        $region34: #{tpu_custom_call.1} parent=11 // pred_check_branch
          %491 = sbr.rel (%p489) target = $region36
        $region35: #{tpu_custom_call.1} parent=11 // pred_region
          _
        $region36: #{tpu_custom_call.1} parent=11 // pred_fallthru
          _
        // Predicated region
        $region37: #{tpu_custom_call.1} parent=11 // pred_check
          %p492 = pneg %p328
        $region38: #{tpu_custom_call.1} parent=11 // pred_check_branch
          %494 = sbr.rel (%p492) target = $region40
        $region39: #{tpu_custom_call.1} parent=11 // pred_region
          %s496 = ssub.s32 8192, 8192
          %497 = vsyncadd [#allocation15], %s496
          %s498 = sshll.u32 [#allocation14], 4
          %s499 = int_to_ptr.vmem [resolvable:$true] %s498
          %504 = dma.hbm_to_vmem [thread:$0]  %s11, 8192, %s499, [#allocation15], 128, 128, 8
        $region40: #{tpu_custom_call.1} parent=11 // pred_fallthru
          _
        // Predicated region
        $region41: #{tpu_custom_call.1} parent=11 // pred_check
          %p505 = pneg %p349
        $region42: #{tpu_custom_call.1} parent=11 // pred_check_branch
          %507 = sbr.rel (%p505) target = $region44
        $region43: #{tpu_custom_call.1} parent=11 // pred_region
          _
        $region44: #{tpu_custom_call.1} parent=11 // pred_fallthru
          _
        // Predicated region
        $region45: #{tpu_custom_call.1} parent=11 // pred_check
          %p508 = pneg %p370
        $region46: #{tpu_custom_call.1} parent=11 // pred_check_branch
          %510 = sbr.rel (%p508) target = $region48
        $region47: #{tpu_custom_call.1} parent=11 // pred_region
          _
        $region48: #{tpu_custom_call.1} parent=11 // pred_fallthru
          _
        // Predicated region
        $region49: #{tpu_custom_call.1} parent=11 // pred_check
          %p511 = pneg %p391
        $region50: #{tpu_custom_call.1} parent=11 // pred_check_branch
          %513 = sbr.rel (%p511) target = $region52
        $region51: #{tpu_custom_call.1} parent=11 // pred_region
          _
        $region52: #{tpu_custom_call.1} parent=11 // pred_fallthru
          _
      $region12: #{tpu_custom_call.1} parent=5 // pred_fallthru
        _
      %p514 = scmp.lt.s32.totalorder %s33, 4
      // Predicated region
      $region53: #{tpu_custom_call.1} parent=5 // pred_check
        %p515 = pneg %p514
      $region54: #{tpu_custom_call.1} parent=5 // pred_check_branch
        %517 = sbr.rel (%p515) target = $region56
      $region55: #{tpu_custom_call.1} parent=5 // pred_region
        // Predicated region
        $region57: #{tpu_custom_call.1} parent=55 // pred_check
          %p518 = pneg %p67
        $region58: #{tpu_custom_call.1} parent=55 // pred_check_branch
          %520 = sbr.rel (%p518) target = $region60
        $region59: #{tpu_custom_call.1} parent=55 // pred_region
          %s521 = sand.u32 %s57, 1
          %s522 = scalar_lea.sflag [#allocation3], %s521
          %s523 = sand.u32 %s57, 1
          %s524 = smul.addr %s523, 64
          %s525 = scalar_lea.vmem [#allocation2], %s524
          %s526 = smul.u32 4, %s41
          %s528 = ssub.s32 1024, 1024
          %529 = vsyncadd %s522, %s528
          %s530 = smul.addr %s526, 2
          %s531 = smul.addr %s40, 16
          %s532 = sadd.s32 %s530, %s531
          %s533 = smul.addr %s532, 128
          %s534 = scalar_lea.hbm %s0, %s533
          %s535 = sshll.u32 %s525, 4
          %s536 = int_to_ptr.vmem [resolvable:$true] %s535
          %541 = dma.hbm_to_vmem [thread:$0]  %s534, 1024, %s536, %s522, 256, 256, 16
        $region60: #{tpu_custom_call.1} parent=55 // pred_fallthru
          _
        // Predicated region
        $region61: #{tpu_custom_call.1} parent=55 // pred_check
          %p542 = pneg %p93
        $region62: #{tpu_custom_call.1} parent=55 // pred_check_branch
          %544 = sbr.rel (%p542) target = $region64
        $region63: #{tpu_custom_call.1} parent=55 // pred_region
          %s545 = sand.u32 %s33, 1
          %s546 = scalar_lea.sflag [#allocation6], %s545
          %s547 = sand.u32 %s83, 1
          %s548 = smul.addr %s547, 128
          %s549 = scalar_lea.vmem [#allocation5], %s548
          %s551 = ssub.s32 2048, 2048
          %552 = vsyncadd %s546, %s551
          %s553 = smul.addr %s40, 16
          %s554 = smul.addr %s553, 128
          %s555 = scalar_lea.hbm %s1, %s554
          %s556 = sshll.u32 %s549, 4
          %s557 = int_to_ptr.vmem [resolvable:$true] %s556
          %562 = dma.hbm_to_vmem [thread:$0]  %s555, 2048, %s557, %s546, 256, 256, 16
        $region64: #{tpu_custom_call.1} parent=55 // pred_fallthru
          _
        // Predicated region
        $region65: #{tpu_custom_call.1} parent=55 // pred_check
          %p563 = pneg %p119
        $region66: #{tpu_custom_call.1} parent=55 // pred_check_branch
          %565 = sbr.rel (%p563) target = $region68
        $region67: #{tpu_custom_call.1} parent=55 // pred_region
          %s566 = sand.u32 %s33, 1
          %s567 = scalar_lea.sflag [#allocation6], %s566
          %s568 = sand.u32 %s109, 1
          %s569 = smul.addr %s568, 96
          %s570 = scalar_lea.vmem [#allocation7], %s569
          %s572 = ssub.s32 1536, 1536
          %573 = vsyncadd %s567, %s572
          %s574 = smul.addr %s40, 12
          %s575 = smul.addr %s574, 128
          %s576 = scalar_lea.hbm %s2, %s575
          %s577 = sshll.u32 %s570, 4
          %s578 = int_to_ptr.vmem [resolvable:$true] %s577
          %583 = dma.hbm_to_vmem [thread:$0]  %s576, 1536, %s578, %s567, 256, 256, 16
        $region68: #{tpu_custom_call.1} parent=55 // pred_fallthru
          _
        // Predicated region
        $region69: #{tpu_custom_call.1} parent=55 // pred_check
          %p584 = pneg %p147
        $region70: #{tpu_custom_call.1} parent=55 // pred_check_branch
          %586 = sbr.rel (%p584) target = $region72
        $region71: #{tpu_custom_call.1} parent=55 // pred_region
          %p587 = scmp.lt.s32.totalorder %s40, 1
          %s588 = scalar_select %p587, %s40, 1
          %p589 = scmp.lt.s32.totalorder %s41, 1
          %s590 = scalar_select %p589, %s41, 1
          %s591 = smul.addr %s588, 2
          %s592 = sadd.s32 %s590, %s591
          %s593 = smul.addr %s592, 8
          %s594 = scalar_lea.vmem %s3, %s593
        $region72: #{tpu_custom_call.1} parent=55 // pred_fallthru
          _
        // Predicated region
        $region73: #{tpu_custom_call.1} parent=55 // pred_check
          %p595 = pneg %p175
        $region74: #{tpu_custom_call.1} parent=55 // pred_check_branch
          %597 = sbr.rel (%p595) target = $region76
        $region75: #{tpu_custom_call.1} parent=55 // pred_region
          %p598 = scmp.lt.s32.totalorder %s40, 1
          %s599 = scalar_select %p598, %s40, 1
          %p600 = scmp.lt.s32.totalorder %s41, 1
          %s601 = scalar_select %p600, %s41, 1
          %s602 = smul.addr %s599, 2
          %s603 = sadd.s32 %s601, %s602
          %s604 = smul.addr %s603, 8
          %s605 = scalar_lea.vmem %s4, %s604
        $region76: #{tpu_custom_call.1} parent=55 // pred_fallthru
          _
      $region56: #{tpu_custom_call.1} parent=5 // pred_fallthru
        _
      %p606 = scmp.le.s32.totalorder 1, %s33
      %p607 = scmp.lt.s32.totalorder %s33, 5
      %p608 = pnand %p606, %p607
      %p609 = pneg %p608
      // Predicated region
      $region77: #{tpu_custom_call.1} parent=5 // pred_check
        _
      $region78: #{tpu_custom_call.1} parent=5 // pred_check_branch
        %611 = sbr.rel (%p608) target = $region80
      $region79: #{tpu_custom_call.1} parent=5 // pred_region
        %s612 = ssub.s32 %s33, 1
        %s613 = sand.u32 %s60, 1
        %s614 = scalar_lea.sflag [#allocation3], %s613
        %s615 = sand.u32 %s60, 1
        %s616 = smul.addr %s615, 64
        %s617 = scalar_lea.vmem [#allocation2], %s616
        // Predicated region
        $region81: #{tpu_custom_call.1} parent=79 // pred_check
          %p618 = pneg %p73
        $region82: #{tpu_custom_call.1} parent=79 // pred_check_branch
          %620 = sbr.rel (%p618) target = $region84
        $region83: #{tpu_custom_call.1} parent=79 // pred_region
          %621 = dma.done %s614, 1024
        $region84: #{tpu_custom_call.1} parent=79 // pred_fallthru
          _
        %s622 = sand.u32 %s38, 1
        %s623 = scalar_lea.sflag [#allocation6], %s622
        %s624 = sand.u32 %s86, 1
        %s625 = smul.addr %s624, 128
        %s626 = scalar_lea.vmem [#allocation5], %s625
        // Predicated region
        $region85: #{tpu_custom_call.1} parent=79 // pred_check
          %p627 = pneg %p99
        $region86: #{tpu_custom_call.1} parent=79 // pred_check_branch
          %629 = sbr.rel (%p627) target = $region88
        $region87: #{tpu_custom_call.1} parent=79 // pred_region
          %630 = dma.done %s623, 2048
        $region88: #{tpu_custom_call.1} parent=79 // pred_fallthru
          _
        %s631 = sand.u32 %s38, 1
        %s632 = scalar_lea.sflag [#allocation6], %s631
        %s633 = sand.u32 %s112, 1
        %s634 = smul.addr %s633, 96
        %s635 = scalar_lea.vmem [#allocation7], %s634
        // Predicated region
        $region89: #{tpu_custom_call.1} parent=79 // pred_check
          %p636 = pneg %p125
        $region90: #{tpu_custom_call.1} parent=79 // pred_check_branch
          %638 = sbr.rel (%p636) target = $region92
        $region91: #{tpu_custom_call.1} parent=79 // pred_region
          %639 = dma.done %s632, 1536
        $region92: #{tpu_custom_call.1} parent=79 // pred_fallthru
          _
        // Predicated region
        $region93: #{tpu_custom_call.1} parent=79 // pred_check
          %p640 = pneg %p202
        $region94: #{tpu_custom_call.1} parent=79 // pred_check_branch
          %642 = sbr.rel (%p640) target = $region96
        $region95: #{tpu_custom_call.1} parent=79 // pred_region
          %643 = dma.done [#allocation9], 8192
        $region96: #{tpu_custom_call.1} parent=79 // pred_fallthru
          _
        // Predicated region
        $region97: #{tpu_custom_call.1} parent=79 // pred_check
          %p644 = pneg %p223
        $region98: #{tpu_custom_call.1} parent=79 // pred_check_branch
          %646 = sbr.rel (%p644) target = $region100
        $region99: #{tpu_custom_call.1} parent=79 // pred_region
          %647 = dma.done [#allocation9], 16384
        $region100: #{tpu_custom_call.1} parent=79 // pred_fallthru
          _
        // Predicated region
        $region101: #{tpu_custom_call.1} parent=79 // pred_check
          %p648 = pneg %p265
        $region102: #{tpu_custom_call.1} parent=79 // pred_check_branch
          %650 = sbr.rel (%p648) target = $region104
        $region103: #{tpu_custom_call.1} parent=79 // pred_region
          %651 = dma.done [#allocation12], 8192
        $region104: #{tpu_custom_call.1} parent=79 // pred_fallthru
          _
        // Predicated region
        $region105: #{tpu_custom_call.1} parent=79 // pred_check
          %p652 = pneg %p286
        $region106: #{tpu_custom_call.1} parent=79 // pred_check_branch
          %654 = sbr.rel (%p652) target = $region108
        $region107: #{tpu_custom_call.1} parent=79 // pred_region
          %655 = dma.done [#allocation12], 8192
        $region108: #{tpu_custom_call.1} parent=79 // pred_fallthru
          _
        // Predicated region
        $region109: #{tpu_custom_call.1} parent=79 // pred_check
          %p656 = pneg %p328
        $region110: #{tpu_custom_call.1} parent=79 // pred_check_branch
          %658 = sbr.rel (%p656) target = $region112
        $region111: #{tpu_custom_call.1} parent=79 // pred_region
          %659 = dma.done [#allocation15], 8192
        $region112: #{tpu_custom_call.1} parent=79 // pred_fallthru
          _
        %s660 = sand.u32 %s60, 1
        %s661 = scalar_lea.sflag [#allocation3], %s660
        %s662 = sand.u32 %s60, 1
        %s663 = smul.addr %s662, 64
        %s664 = scalar_lea.vmem [#allocation2], %s663
        %p665 = pneg %p73
        %p666 = pneg %p70
        %s667 = sand.u32 %s38, 1
        %s668 = scalar_lea.sflag [#allocation6], %s667
        %s669 = sand.u32 %s86, 1
        %s670 = smul.addr %s669, 128
        %s671 = scalar_lea.vmem [#allocation5], %s670
        %p672 = pneg %p99
        %p673 = pneg %p96
        %s674 = sand.u32 %s38, 1
        %s675 = scalar_lea.sflag [#allocation6], %s674
        %s676 = sand.u32 %s112, 1
        %s677 = smul.addr %s676, 96
        %s678 = scalar_lea.vmem [#allocation7], %s677
        %p679 = pneg %p125
        %p680 = pneg %p122
        %p681 = scmp.lt.s32.totalorder %s42, 1
        %s682 = scalar_select %p681, %s42, 1
        %p683 = scmp.lt.s32.totalorder %s43, 1
        %s684 = scalar_select %p683, %s43, 1
        %s685 = smul.addr %s682, 2
        %s686 = sadd.s32 %s684, %s685
        %s687 = smul.addr %s686, 8
        %s688 = scalar_lea.vmem %s3, %s687
        %p689 = pneg %p153
        %p690 = pneg %p150
        %p691 = scmp.lt.s32.totalorder %s42, 1
        %s692 = scalar_select %p691, %s42, 1
        %p693 = scmp.lt.s32.totalorder %s43, 1
        %s694 = scalar_select %p693, %s43, 1
        %s695 = smul.addr %s692, 2
        %s696 = sadd.s32 %s694, %s695
        %s697 = smul.addr %s696, 8
        %s698 = scalar_lea.vmem %s4, %s697
        %p699 = pneg %p181
        %p700 = pneg %p178
        %p701 = pneg %p202
        %p702 = pneg %p199
        %p703 = pneg %p223
        %p704 = pneg %p220
        %p705 = pneg %p244
        %p706 = pneg %p241
        %p707 = pneg %p265
        %p708 = pneg %p262
        %p709 = pneg %p286
        %p710 = pneg %p283
        %p711 = pneg %p307
        %p712 = pneg %p304
        %p713 = pneg %p328
        %p714 = pneg %p325
        %p715 = pneg %p349
        %p716 = pneg %p346
        %p717 = pneg %p370
        %p718 = pneg %p367
        %p719 = pneg %p391
        %p720 = pneg %p388
        %p721 = pneg %p419
        %p722 = pneg %p416
        %s723 = sand.u32 %s406, 1
        %s724 = scalar_lea.sflag [#allocation4], %s723
        %s725 = sand.u32 %s406, 1
        %s726 = smul.addr %s725, 64
        %s727 = scalar_lea.vmem [#allocation16], %s726
        %s728 = smul.u32 4, %s43
        %p729 = scmp.lt.s32.totalorder %s42, 1
        %s730 = scalar_select %p729, %s42, 1
        %p731 = scmp.lt.s32.totalorder %s43, 1
        %s732 = scalar_select %p731, %s43, 1
        %s733 = smul.addr %s730, 2
        %s734 = sadd.s32 %s732, %s733
        %s735 = smul.addr %s734, 8
        %s736 = scalar_lea.vmem %s3, %s735
        %p737 = scmp.lt.s32.totalorder %s42, 1
        %s738 = scalar_select %p737, %s42, 1
        %p739 = scmp.lt.s32.totalorder %s43, 1
        %s740 = scalar_select %p739, %s43, 1
        %s741 = smul.addr %s738, 2
        %s742 = sadd.s32 %s740, %s741
        %s743 = smul.addr %s742, 8
        %s744 = scalar_lea.vmem %s4, %s743
        %s745 = smul.u32 4, %s43
        %v747 = vld [vmem:[%s617] sm:$0xff]
        %v748 = vld [vmem:[%s617 + $0x8] sm:$0xff]
        %v749 = vld [vmem:[%s617 + $0x10] sm:$0xff]
        %v750 = vld [vmem:[%s617 + $0x18] sm:$0xff]
        %v751 = vld [vmem:[%s617 + $0x20] sm:$0xff]
        %v752 = vld [vmem:[%s617 + $0x28] sm:$0xff]
        %v753 = vld [vmem:[%s617 + $0x30] sm:$0xff]
        %v754 = vld [vmem:[%s617 + $0x38] sm:$0xff]
        %v755 = vld [vmem:[%s626] sm:$0xff]
        %v756 = vld [vmem:[%s626 + $0x8] sm:$0xff]
        %v757 = vld [vmem:[%s626 + $0x10] sm:$0xff]
        %v758 = vld [vmem:[%s626 + $0x18] sm:$0xff]
        %v759 = vld [vmem:[%s626 + $0x20] sm:$0xff]
        %v760 = vld [vmem:[%s626 + $0x28] sm:$0xff]
        %v761 = vld [vmem:[%s626 + $0x30] sm:$0xff]
        %v762 = vld [vmem:[%s626 + $0x38] sm:$0xff]
        %v763 = vld [vmem:[%s626 + $0x40] sm:$0xff]
        %v764 = vld [vmem:[%s626 + $0x48] sm:$0xff]
        %v765 = vld [vmem:[%s626 + $0x50] sm:$0xff]
        %v766 = vld [vmem:[%s626 + $0x58] sm:$0xff]
        %v767 = vld [vmem:[%s626 + $0x60] sm:$0xff]
        %v768 = vld [vmem:[%s626 + $0x68] sm:$0xff]
        %v769 = vld [vmem:[%s626 + $0x70] sm:$0xff]
        %v770 = vld [vmem:[%s626 + $0x78] sm:$0xff]
        %v771 = vld [vmem:[%s635] sm:$0xff]
        %v772 = vld [vmem:[%s635 + $0x8] sm:$0xff]
        %v773 = vld [vmem:[%s635 + $0x10] sm:$0xff]
        %v774 = vld [vmem:[%s635 + $0x18] sm:$0xff]
        %v775 = vld [vmem:[%s635 + $0x20] sm:$0xff]
        %v776 = vld [vmem:[%s635 + $0x28] sm:$0xff]
        %v777 = vld [vmem:[%s635 + $0x30] sm:$0xff]
        %v778 = vld [vmem:[%s635 + $0x38] sm:$0xff]
        %v779 = vld [vmem:[%s635 + $0x40] sm:$0xff]
        %v780 = vld [vmem:[%s635 + $0x48] sm:$0xff]
        %v781 = vld [vmem:[%s635 + $0x50] sm:$0xff]
        %v782 = vld [vmem:[%s635 + $0x58] sm:$0xff]
        %v783 = vld [vmem:[%s13] sm:$0x77]
        %v784 = vld [vmem:[%s14] sm:$0x77]
        %v785 = vld [vmem:[%s12] sm:$0x1f]
        %v786 = vld [vmem:[%s12 + $0x8] sm:$0x1f]
        %v787 = vld [vmem:[%s736] sm:$0xff]
        %v788 = vunpack.c.0.s8 %v787
        %v789 = vunpack.c.1.s8 %v787
        %v790 = vunpack.c.2.s8 %v787
        %v791 = vunpack.c.3.s8 %v787
        %v792 = vcvt.s32.f32 %v788
        %v793 = vcvt.s32.f32 %v789
        %v794 = vcvt.s32.f32 %v790
        %v795 = vcvt.s32.f32 %v791
        %v796 = vsub.f32 %v792, 1.0
        %v797 = vsub.f32 %v793, 1.0
        %v798 = vsub.f32 %v794, 1.0
        %v799 = vsub.f32 %v795, 1.0
        %v800 = vmul.f32 %v796, 1e+09
        %v801 = vmul.f32 %v797, 1e+09
        %v802 = vmul.f32 %v798, 1e+09
        %v803 = vmul.f32 %v799, 1e+09
        %v804 = vld [vmem:[%s744] sm:$0xff]
        %v805 = vunpack.c.0.s8 %v804
        %v806 = vunpack.c.1.s8 %v804
        %v807 = vunpack.c.2.s8 %v804
        %v808 = vunpack.c.3.s8 %v804
        %v809 = vcvt.s32.f32 %v805
        %v810 = vcvt.s32.f32 %v806
        %v811 = vcvt.s32.f32 %v807
        %v812 = vcvt.s32.f32 %v808
        %v813 = vsub.f32 %v809, 1.0
        %v814 = vsub.f32 %v810, 1.0
        %v815 = vsub.f32 %v811, 1.0
        %v816 = vsub.f32 %v812, 1.0
        %v817 = vmul.f32 %v813, 1e+09
        %v818 = vmul.f32 %v814, 1e+09
        %v819 = vmul.f32 %v815, 1e+09
        %v820 = vmul.f32 %v816, 1e+09
        %v821 = vadd.f32 %v747, %v748
        %822 = vadd.xlane.f32.xlu0 %v821
        %v823 = vpop.xlane.xlu0 %822
        %v824 = vadd.f32 %v749, %v750
        %825 = vadd.xlane.f32.xlu0 %v824
        %v826 = vpop.xlane.xlu0 %825
        %v827 = vadd.f32 %v751, %v752
        %828 = vadd.xlane.f32.xlu0 %v827
        %v829 = vpop.xlane.xlu0 %828
        %v830 = vadd.f32 %v753, %v754
        %831 = vadd.xlane.f32.xlu0 %v830
        %v832 = vpop.xlane.xlu0 %831
        %v833 = vrcp.pop 256.0
        %v834 = vmul.f32 %v823, %v833
        %v835 = vmul.f32 %v826, %v833
        %v836 = vmul.f32 %v829, %v833
        %v837 = vmul.f32 %v832, %v833
        %v838 = vsub.f32 %v747, %v834
        %v839 = vsub.f32 %v748, %v834
        %v840 = vsub.f32 %v749, %v835
        %v841 = vsub.f32 %v750, %v835
        %v842 = vsub.f32 %v751, %v836
        %v843 = vsub.f32 %v752, %v836
        %v844 = vsub.f32 %v753, %v837
        %v845 = vsub.f32 %v754, %v837
        %v846 = vmul.f32 %v838, %v838
        %v847 = vmul.f32 %v839, %v839
        %v848 = vmul.f32 %v840, %v840
        %v849 = vmul.f32 %v841, %v841
        %v850 = vmul.f32 %v842, %v842
        %v851 = vmul.f32 %v843, %v843
        %v852 = vmul.f32 %v844, %v844
        %v853 = vmul.f32 %v845, %v845
        %v854 = vadd.f32 %v846, %v847
        %855 = vadd.xlane.f32.xlu0 %v854
        %v856 = vpop.xlane.xlu0 %855
        %v857 = vadd.f32 %v848, %v849
        %858 = vadd.xlane.f32.xlu0 %v857
        %v859 = vpop.xlane.xlu0 %858
        %v860 = vadd.f32 %v850, %v851
        %861 = vadd.xlane.f32.xlu0 %v860
        %v862 = vpop.xlane.xlu0 %861
        %v863 = vadd.f32 %v852, %v853
        %864 = vadd.xlane.f32.xlu0 %v863
        %v865 = vpop.xlane.xlu0 %864
        %v866 = vmul.f32 %v856, %v833
        %v867 = vmul.f32 %v859, %v833
        %v868 = vmul.f32 %v862, %v833
        %v869 = vmul.f32 %v865, %v833
        %v871 = vlaneseq
        %v872 = vshrl.u32 %v871, 7
        %v873 = vsub.s32 0, %v872
        %v874 = vrot.slane %v783, %v873
        %v875 = vlaneseq
        %v876 = vshrl.u32 %v875, 7
        %v877 = vsub.s32 4, %v876
        %v878 = vrot.slane %v783, %v877
        %v881 = vlaneseq
        %v882 = vshrl.u32 %v881, 7
        %v883 = vsub.s32 0, %v882
        %v884 = vrot.slane %v874, %v883
        %v885 = vlaneseq
        %v886 = vshrl.u32 %v885, 7
        %v887 = vsub.s32 0, %v886
        %v888 = vrot.slane %v878, %v887
        %v889 = vmul.f32 %v884, %v838
        %v890 = vmul.f32 %v888, %v839
        %v891 = vmul.f32 %v884, %v840
        %v892 = vmul.f32 %v888, %v841
        %v893 = vmul.f32 %v884, %v842
        %v894 = vmul.f32 %v888, %v843
        %v895 = vmul.f32 %v884, %v844
        %v896 = vmul.f32 %v888, %v845
        %v897 = vadd.f32 %v866, 1e-06
        %v898 = vadd.f32 %v867, 1e-06
        %v899 = vadd.f32 %v868, 1e-06
        %v900 = vadd.f32 %v869, 1e-06
        %v901 = vrsqrt.pop %v897
        %v902 = vrsqrt.pop %v898
        %v903 = vrsqrt.pop %v899
        %v904 = vrsqrt.pop %v900
        %v905 = vmul.f32 %v889, %v901
        %v906 = vmul.f32 %v890, %v901
        %v907 = vmul.f32 %v891, %v902
        %v908 = vmul.f32 %v892, %v902
        %v909 = vmul.f32 %v893, %v903
        %v910 = vmul.f32 %v894, %v903
        %v911 = vmul.f32 %v895, %v904
        %v912 = vmul.f32 %v896, %v904
        %v914 = vlaneseq
        %v915 = vshrl.u32 %v914, 7
        %v916 = vsub.s32 0, %v915
        %v917 = vrot.slane %v784, %v916
        %v918 = vlaneseq
        %v919 = vshrl.u32 %v918, 7
        %v920 = vsub.s32 4, %v919
        %v921 = vrot.slane %v784, %v920
        %v924 = vlaneseq
        %v925 = vshrl.u32 %v924, 7
        %v926 = vsub.s32 0, %v925
        %v927 = vrot.slane %v917, %v926
        %v928 = vlaneseq
        %v929 = vshrl.u32 %v928, 7
        %v930 = vsub.s32 0, %v929
        %v931 = vrot.slane %v921, %v930
        %v932 = vadd.f32 %v905, %v927
        %v933 = vadd.f32 %v906, %v931
        %v934 = vadd.f32 %v907, %v927
        %v935 = vadd.f32 %v908, %v931
        %v936 = vadd.f32 %v909, %v927
        %v937 = vadd.f32 %v910, %v931
        %v938 = vadd.f32 %v911, %v927
        %v939 = vadd.f32 %v912, %v931
        %v940 = vadd.f32 %v755, %v756
        %941 = vadd.xlane.f32.xlu0 %v940
        %v942 = vpop.xlane.xlu0 %941
        %v943 = vadd.f32 %v757, %v758
        %944 = vadd.xlane.f32.xlu0 %v943
        %v945 = vpop.xlane.xlu0 %944
        %v946 = vadd.f32 %v759, %v760
        %947 = vadd.xlane.f32.xlu0 %v946
        %v948 = vpop.xlane.xlu0 %947
        %v949 = vadd.f32 %v761, %v762
        %950 = vadd.xlane.f32.xlu0 %v949
        %v951 = vpop.xlane.xlu0 %950
        %v952 = vadd.f32 %v763, %v764
        %953 = vadd.xlane.f32.xlu0 %v952
        %v954 = vpop.xlane.xlu0 %953
        %v955 = vadd.f32 %v765, %v766
        %956 = vadd.xlane.f32.xlu0 %v955
        %v957 = vpop.xlane.xlu0 %956
        %v958 = vadd.f32 %v767, %v768
        %959 = vadd.xlane.f32.xlu0 %v958
        %v960 = vpop.xlane.xlu0 %959
        %v961 = vadd.f32 %v769, %v770
        %962 = vadd.xlane.f32.xlu0 %v961
        %v963 = vpop.xlane.xlu0 %962
        %v964 = vmul.f32 %v942, %v833
        %v965 = vmul.f32 %v945, %v833
        %v966 = vmul.f32 %v948, %v833
        %v967 = vmul.f32 %v951, %v833
        %v968 = vmul.f32 %v954, %v833
        %v969 = vmul.f32 %v957, %v833
        %v970 = vmul.f32 %v960, %v833
        %v971 = vmul.f32 %v963, %v833
        %v972 = vsub.f32 %v755, %v964
        %v973 = vsub.f32 %v756, %v964
        %v974 = vsub.f32 %v757, %v965
        %v975 = vsub.f32 %v758, %v965
        %v976 = vsub.f32 %v759, %v966
        %v977 = vsub.f32 %v760, %v966
        %v978 = vsub.f32 %v761, %v967
        %v979 = vsub.f32 %v762, %v967
        %v980 = vsub.f32 %v763, %v968
        %v981 = vsub.f32 %v764, %v968
        %v982 = vsub.f32 %v765, %v969
        %v983 = vsub.f32 %v766, %v969
        %v984 = vsub.f32 %v767, %v970
        %v985 = vsub.f32 %v768, %v970
        %v986 = vsub.f32 %v769, %v971
        %v987 = vsub.f32 %v770, %v971
        %v988 = vmul.f32 %v972, %v972
        %v989 = vmul.f32 %v973, %v973
        %v990 = vmul.f32 %v974, %v974
        %v991 = vmul.f32 %v975, %v975
        %v992 = vmul.f32 %v976, %v976
        %v993 = vmul.f32 %v977, %v977
        %v994 = vmul.f32 %v978, %v978
        %v995 = vmul.f32 %v979, %v979
        %v996 = vmul.f32 %v980, %v980
        %v997 = vmul.f32 %v981, %v981
        %v998 = vmul.f32 %v982, %v982
        %v999 = vmul.f32 %v983, %v983
        %v1000 = vmul.f32 %v984, %v984
        %v1001 = vmul.f32 %v985, %v985
        %v1002 = vmul.f32 %v986, %v986
        %v1003 = vmul.f32 %v987, %v987
        %v1004 = vadd.f32 %v988, %v989
        %1005 = vadd.xlane.f32.xlu0 %v1004
        %v1006 = vpop.xlane.xlu0 %1005
        %v1007 = vadd.f32 %v990, %v991
        %1008 = vadd.xlane.f32.xlu0 %v1007
        %v1009 = vpop.xlane.xlu0 %1008
        %v1010 = vadd.f32 %v992, %v993
        %1011 = vadd.xlane.f32.xlu0 %v1010
        %v1012 = vpop.xlane.xlu0 %1011
        %v1013 = vadd.f32 %v994, %v995
        %1014 = vadd.xlane.f32.xlu0 %v1013
        %v1015 = vpop.xlane.xlu0 %1014
        %v1016 = vadd.f32 %v996, %v997
        %1017 = vadd.xlane.f32.xlu0 %v1016
        %v1018 = vpop.xlane.xlu0 %1017
        %v1019 = vadd.f32 %v998, %v999
        %1020 = vadd.xlane.f32.xlu0 %v1019
        %v1021 = vpop.xlane.xlu0 %1020
        %v1022 = vadd.f32 %v1000, %v1001
        %1023 = vadd.xlane.f32.xlu0 %v1022
        %v1024 = vpop.xlane.xlu0 %1023
        %v1025 = vadd.f32 %v1002, %v1003
        %1026 = vadd.xlane.f32.xlu0 %v1025
        %v1027 = vpop.xlane.xlu0 %1026
        %v1028 = vmul.f32 %v1006, %v833
        %v1029 = vmul.f32 %v1009, %v833
        %v1030 = vmul.f32 %v1012, %v833
        %v1031 = vmul.f32 %v1015, %v833
        %v1032 = vmul.f32 %v1018, %v833
        %v1033 = vmul.f32 %v1021, %v833
        %v1034 = vmul.f32 %v1024, %v833
        %v1035 = vmul.f32 %v1027, %v833
        %v1036 = vmul.f32 %v884, %v972
        %v1037 = vmul.f32 %v888, %v973
        %v1038 = vmul.f32 %v884, %v974
        %v1039 = vmul.f32 %v888, %v975
        %v1040 = vmul.f32 %v884, %v976
        %v1041 = vmul.f32 %v888, %v977
        %v1042 = vmul.f32 %v884, %v978
        %v1043 = vmul.f32 %v888, %v979
        %v1044 = vmul.f32 %v884, %v980
        %v1045 = vmul.f32 %v888, %v981
        %v1046 = vmul.f32 %v884, %v982
        %v1047 = vmul.f32 %v888, %v983
        %v1048 = vmul.f32 %v884, %v984
        %v1049 = vmul.f32 %v888, %v985
        %v1050 = vmul.f32 %v884, %v986
        %v1051 = vmul.f32 %v888, %v987
        %v1052 = vadd.f32 %v1028, 1e-06
        %v1053 = vadd.f32 %v1029, 1e-06
        %v1054 = vadd.f32 %v1030, 1e-06
        %v1055 = vadd.f32 %v1031, 1e-06
        %v1056 = vadd.f32 %v1032, 1e-06
        %v1057 = vadd.f32 %v1033, 1e-06
        %v1058 = vadd.f32 %v1034, 1e-06
        %v1059 = vadd.f32 %v1035, 1e-06
        %v1060 = vrsqrt.pop %v1052
        %v1061 = vrsqrt.pop %v1053
        %v1062 = vrsqrt.pop %v1054
        %v1063 = vrsqrt.pop %v1055
        %v1064 = vrsqrt.pop %v1056
        %v1065 = vrsqrt.pop %v1057
        %v1066 = vrsqrt.pop %v1058
        %v1067 = vrsqrt.pop %v1059
        %v1068 = vmul.f32 %v1036, %v1060
        %v1069 = vmul.f32 %v1037, %v1060
        %v1070 = vmul.f32 %v1038, %v1061
        %v1071 = vmul.f32 %v1039, %v1061
        %v1072 = vmul.f32 %v1040, %v1062
        %v1073 = vmul.f32 %v1041, %v1062
        %v1074 = vmul.f32 %v1042, %v1063
        %v1075 = vmul.f32 %v1043, %v1063
        %v1076 = vmul.f32 %v1044, %v1064
        %v1077 = vmul.f32 %v1045, %v1064
        %v1078 = vmul.f32 %v1046, %v1065
        %v1079 = vmul.f32 %v1047, %v1065
        %v1080 = vmul.f32 %v1048, %v1066
        %v1081 = vmul.f32 %v1049, %v1066
        %v1082 = vmul.f32 %v1050, %v1067
        %v1083 = vmul.f32 %v1051, %v1067
        %v1084 = vadd.f32 %v1068, %v927
        %v1085 = vadd.f32 %v1069, %v931
        %v1086 = vadd.f32 %v1070, %v927
        %v1087 = vadd.f32 %v1071, %v931
        %v1088 = vadd.f32 %v1072, %v927
        %v1089 = vadd.f32 %v1073, %v931
        %v1090 = vadd.f32 %v1074, %v927
        %v1091 = vadd.f32 %v1075, %v931
        %v1092 = vadd.f32 %v1076, %v927
        %v1093 = vadd.f32 %v1077, %v931
        %v1094 = vadd.f32 %v1078, %v927
        %v1095 = vadd.f32 %v1079, %v931
        %v1096 = vadd.f32 %v1080, %v927
        %v1097 = vadd.f32 %v1081, %v931
        %v1098 = vadd.f32 %v1082, %v927
        %v1099 = vadd.f32 %v1083, %v931
        %v1100 = vpack.c.bf16 %v934, %v932
        %v1101 = vpack.c.bf16 %v935, %v933
        %v1102 = vpack.c.bf16 %v938, %v936
        %v1103 = vpack.c.bf16 %v939, %v937
        %v1104 = vld [vmem:[#allocation8] sm:$0xff]
        %v1105 = vld [vmem:[#allocation8 + $0x8] sm:$0xff]
        %v1106 = vld [vmem:[#allocation8 + $0x10] sm:$0xff]
        %v1107 = vld [vmem:[#allocation8 + $0x18] sm:$0xff]
        %v1108 = vld [vmem:[#allocation8 + $0x20] sm:$0xff]
        %v1109 = vld [vmem:[#allocation8 + $0x28] sm:$0xff]
        %v1110 = vld [vmem:[#allocation8 + $0x30] sm:$0xff]
        %v1111 = vld [vmem:[#allocation8 + $0x38] sm:$0xff]
        %v1112 = vld [vmem:[#allocation8 + $0x40] sm:$0xff]
        %v1113 = vld [vmem:[#allocation8 + $0x48] sm:$0xff]
        %v1114 = vld [vmem:[#allocation8 + $0x50] sm:$0xff]
        %v1115 = vld [vmem:[#allocation8 + $0x58] sm:$0xff]
        %v1116 = vld [vmem:[#allocation8 + $0x60] sm:$0xff]
        %v1117 = vld [vmem:[#allocation8 + $0x68] sm:$0xff]
        %v1118 = vld [vmem:[#allocation8 + $0x70] sm:$0xff]
        %v1119 = vld [vmem:[#allocation8 + $0x78] sm:$0xff]
        %v1120 = vld [vmem:[#allocation8 + $0x80] sm:$0xff]
        %v1121 = vld [vmem:[#allocation8 + $0x88] sm:$0xff]
        %v1122 = vld [vmem:[#allocation8 + $0x90] sm:$0xff]
        %v1123 = vld [vmem:[#allocation8 + $0x98] sm:$0xff]
        %v1124 = vld [vmem:[#allocation8 + $0xa0] sm:$0xff]
        %v1125 = vld [vmem:[#allocation8 + $0xa8] sm:$0xff]
        %v1126 = vld [vmem:[#allocation8 + $0xb0] sm:$0xff]
        %v1127 = vld [vmem:[#allocation8 + $0xb8] sm:$0xff]
        %v1128 = vld [vmem:[#allocation8 + $0xc0] sm:$0xff]
        %v1129 = vld [vmem:[#allocation8 + $0xc8] sm:$0xff]
        %v1130 = vld [vmem:[#allocation8 + $0xd0] sm:$0xff]
        %v1131 = vld [vmem:[#allocation8 + $0xd8] sm:$0xff]
        %v1132 = vld [vmem:[#allocation8 + $0xe0] sm:$0xff]
        %v1133 = vld [vmem:[#allocation8 + $0xe8] sm:$0xff]
        %v1134 = vld [vmem:[#allocation8 + $0xf0] sm:$0xff]
        %v1135 = vld [vmem:[#allocation8 + $0xf8] sm:$0xff]
        %v1136 = vlaneseq
        %v1137 = vshrl.u32 %v1136, 7
        %v1138 = vsub.s32 0, %v1137
        %v1139 = vrot.slane %v785, %v1138
        %v1140 = vlaneseq
        %v1141 = vshrl.u32 %v1140, 7
        %v1142 = vsub.s32 0, %v1141
        %v1143 = vrot.slane %v786, %v1142
        %v1176 = vunpack.c.l.b16 %v1104
        %v1177 = vunpack.c.h.b16 %v1104
        %v1178 = vunpack.c.l.b16 %v1105
        %v1179 = vunpack.c.h.b16 %v1105
        %v1180 = vunpack.c.l.b16 %v1106
        %v1181 = vunpack.c.h.b16 %v1106
        %v1182 = vunpack.c.l.b16 %v1107
        %v1183 = vunpack.c.h.b16 %v1107
        %v1184 = vunpack.c.l.b16 %v1108
        %v1185 = vunpack.c.h.b16 %v1108
        %v1186 = vunpack.c.l.b16 %v1109
        %v1187 = vunpack.c.h.b16 %v1109
        %v1188 = vunpack.c.l.b16 %v1110
        %v1189 = vunpack.c.h.b16 %v1110
        %v1190 = vunpack.c.l.b16 %v1111
        %v1191 = vunpack.c.h.b16 %v1111
        %v1192 = vunpack.c.l.b16 %v1112
        %v1193 = vunpack.c.h.b16 %v1112
        %v1194 = vunpack.c.l.b16 %v1113
        %v1195 = vunpack.c.h.b16 %v1113
        %v1196 = vunpack.c.l.b16 %v1114
        %v1197 = vunpack.c.h.b16 %v1114
        %v1198 = vunpack.c.l.b16 %v1115
        %v1199 = vunpack.c.h.b16 %v1115
        %v1200 = vunpack.c.l.b16 %v1116
        %v1201 = vunpack.c.h.b16 %v1116
        %v1202 = vunpack.c.l.b16 %v1117
        %v1203 = vunpack.c.h.b16 %v1117
        %v1204 = vunpack.c.l.b16 %v1118
        %v1205 = vunpack.c.h.b16 %v1118
        %v1206 = vunpack.c.l.b16 %v1119
        %v1207 = vunpack.c.h.b16 %v1119
        %v1208 = vunpack.c.l.b16 %v1120
        %v1209 = vunpack.c.h.b16 %v1120
        %v1210 = vunpack.c.l.b16 %v1121
        %v1211 = vunpack.c.h.b16 %v1121
        %v1212 = vunpack.c.l.b16 %v1122
        %v1213 = vunpack.c.h.b16 %v1122
        %v1214 = vunpack.c.l.b16 %v1123
        %v1215 = vunpack.c.h.b16 %v1123
        %v1216 = vunpack.c.l.b16 %v1124
        %v1217 = vunpack.c.h.b16 %v1124
        %v1218 = vunpack.c.l.b16 %v1125
        %v1219 = vunpack.c.h.b16 %v1125
        %v1220 = vunpack.c.l.b16 %v1126
        %v1221 = vunpack.c.h.b16 %v1126
        %v1222 = vunpack.c.l.b16 %v1127
        %v1223 = vunpack.c.h.b16 %v1127
        %v1224 = vunpack.c.l.b16 %v1128
        %v1225 = vunpack.c.h.b16 %v1128
        %v1226 = vunpack.c.l.b16 %v1129
        %v1227 = vunpack.c.h.b16 %v1129
        %v1228 = vunpack.c.l.b16 %v1130
        %v1229 = vunpack.c.h.b16 %v1130
        %v1230 = vunpack.c.l.b16 %v1131
        %v1231 = vunpack.c.h.b16 %v1131
        %v1232 = vunpack.c.l.b16 %v1132
        %v1233 = vunpack.c.h.b16 %v1132
        %v1234 = vunpack.c.l.b16 %v1133
        %v1235 = vunpack.c.h.b16 %v1133
        %v1236 = vunpack.c.l.b16 %v1134
        %v1237 = vunpack.c.h.b16 %v1134
        %v1238 = vunpack.c.l.b16 %v1135
        %v1239 = vunpack.c.h.b16 %v1135
        %v1240 = vpack.c.b16 %v1178, %v1176
        %v1241 = vpack.c.b16 %v1179, %v1177
        %v1242 = vpack.c.b16 %v1182, %v1180
        %v1243 = vpack.c.b16 %v1183, %v1181
        %v1244 = vpack.c.b16 %v1186, %v1184
        %v1245 = vpack.c.b16 %v1187, %v1185
        %v1246 = vpack.c.b16 %v1190, %v1188
        %v1247 = vpack.c.b16 %v1191, %v1189
        %v1248 = vpack.c.b16 %v1194, %v1192
        %v1249 = vpack.c.b16 %v1195, %v1193
        %v1250 = vpack.c.b16 %v1198, %v1196
        %v1251 = vpack.c.b16 %v1199, %v1197
        %v1252 = vpack.c.b16 %v1202, %v1200
        %v1253 = vpack.c.b16 %v1203, %v1201
        %v1254 = vpack.c.b16 %v1206, %v1204
        %v1255 = vpack.c.b16 %v1207, %v1205
        %v1256 = vpack.c.b16 %v1210, %v1208
        %v1257 = vpack.c.b16 %v1211, %v1209
        %v1258 = vpack.c.b16 %v1214, %v1212
        %v1259 = vpack.c.b16 %v1215, %v1213
        %v1260 = vpack.c.b16 %v1218, %v1216
        %v1261 = vpack.c.b16 %v1219, %v1217
        %v1262 = vpack.c.b16 %v1222, %v1220
        %v1263 = vpack.c.b16 %v1223, %v1221
        %v1264 = vpack.c.b16 %v1226, %v1224
        %v1265 = vpack.c.b16 %v1227, %v1225
        %v1266 = vpack.c.b16 %v1230, %v1228
        %v1267 = vpack.c.b16 %v1231, %v1229
        %v1268 = vpack.c.b16 %v1234, %v1232
        %v1269 = vpack.c.b16 %v1235, %v1233
        %v1270 = vpack.c.b16 %v1238, %v1236
        %v1271 = vpack.c.b16 %v1239, %v1237
        %1304 = vmatprep.subr.bf16.mxu0 %v1241
        %1305 = vmatpush1.bf16.msra.mxu0 %v1240
        %1306 = vmatprep.subr.bf16.mxu0 %v1243
        %1307 = vmatpush1.bf16.msra.mxu0 %v1242
        %1308 = vmatprep.subr.bf16.mxu0 %v1245
        %1309 = vmatpush1.bf16.msra.mxu0 %v1244
        %1310 = vmatprep.subr.bf16.mxu0 %v1247
        %1311 = vmatpush1.bf16.msra.mxu0 %v1246
        %1312 = vmatprep.subr.bf16.mxu0 %v1249
        %1313 = vmatpush1.bf16.msra.mxu0 %v1248
        %1314 = vmatprep.subr.bf16.mxu0 %v1251
        %1315 = vmatpush1.bf16.msra.mxu0 %v1250
        %1316 = vmatprep.subr.bf16.mxu0 %v1253
        %1317 = vmatpush1.bf16.msra.mxu0 %v1252
        %1318 = vmatprep.subr.bf16.mxu0 %v1255
        %1319 = vmatpush1.bf16.msra.mxu0 %v1254
        %1320 = vmatprep.subr.bf16.mxu0 %v1257
        %1321 = vmatpush1.bf16.msra.mxu0 %v1256
        %1322 = vmatprep.subr.bf16.mxu0 %v1259
        %1323 = vmatpush1.bf16.msra.mxu0 %v1258
        %1324 = vmatprep.subr.bf16.mxu0 %v1261
        %1325 = vmatpush1.bf16.msra.mxu0 %v1260
        %1326 = vmatprep.subr.bf16.mxu0 %v1263
        %1327 = vmatpush1.bf16.msra.mxu0 %v1262
        %1328 = vmatprep.subr.bf16.mxu0 %v1265
        %1329 = vmatpush1.bf16.msra.mxu0 %v1264
        %1330 = vmatprep.subr.bf16.mxu0 %v1267
        %1331 = vmatpush1.bf16.msra.mxu0 %v1266
        %1332 = vmatprep.subr.bf16.mxu0 %v1269
        %1333 = vmatpush1.bf16.msra.mxu0 %v1268
        %1334 = vmatprep.subr.bf16.mxu0 %v1271
        %1335 = vmatpush1.bf16.msra.mxu0 %v1270
        %1336 = vmatprep.mubr.bf16.mxu0 %v1101
        %1337 = vmatmul.mubr.bf16.gmra.mrb[0].mxu0 %v1100
        %v1338 = vpop.f32.mrb[0].mxu0
        %v1339 = vadd.f32 %v1139, %v1338
        %v1340 = vpop.f32.mrb[0].mxu0
        %v1341 = vadd.f32 %v1143, %v1340
        %v1342 = vpop.f32.mrb[0].mxu0
        %v1343 = vadd.f32 %v1139, %v1342
        %v1344 = vpop.f32.mrb[0].mxu0
        %v1345 = vadd.f32 %v1143, %v1344
        %1346 = vmatprep.mubr.bf16.mxu0 %v1103
        %1347 = vmatmul.mubr.bf16.gmra.mrb[0].mxu0 %v1102
        %v1348 = vpop.f32.mrb[0].mxu0
        %v1349 = vadd.f32 %v1139, %v1348
        %v1350 = vpop.f32.mrb[0].mxu0
        %v1351 = vadd.f32 %v1143, %v1350
        %v1352 = vpop.f32.mrb[0].mxu0
        %v1353 = vadd.f32 %v1139, %v1352
        %v1354 = vpop.f32.mrb[0].mxu0
        %v1355 = vadd.f32 %v1143, %v1354
        %1356 = vdwg.mxu0
        %v1357 = vpack.c.bf16 %v1086, %v1084
        %v1358 = vpack.c.bf16 %v1087, %v1085
        %v1359 = vpack.c.bf16 %v1090, %v1088
        %v1360 = vpack.c.bf16 %v1091, %v1089
        %v1361 = vpack.c.bf16 %v1094, %v1092
        %v1362 = vpack.c.bf16 %v1095, %v1093
        %v1363 = vpack.c.bf16 %v1098, %v1096
        %v1364 = vpack.c.bf16 %v1099, %v1097
        %v1365 = vld [vmem:[#allocation10] sm:$0xff]
        %v1366 = vld [vmem:[#allocation10 + $0x8] sm:$0xff]
        %v1367 = vld [vmem:[#allocation10 + $0x10] sm:$0xff]
        %v1368 = vld [vmem:[#allocation10 + $0x18] sm:$0xff]
        %v1369 = vld [vmem:[#allocation10 + $0x20] sm:$0xff]
        %v1370 = vld [vmem:[#allocation10 + $0x28] sm:$0xff]
        %v1371 = vld [vmem:[#allocation10 + $0x30] sm:$0xff]
        %v1372 = vld [vmem:[#allocation10 + $0x38] sm:$0xff]
        %v1373 = vld [vmem:[#allocation10 + $0x40] sm:$0xff]
        %v1374 = vld [vmem:[#allocation10 + $0x48] sm:$0xff]
        %v1375 = vld [vmem:[#allocation10 + $0x50] sm:$0xff]
        %v1376 = vld [vmem:[#allocation10 + $0x58] sm:$0xff]
        %v1377 = vld [vmem:[#allocation10 + $0x60] sm:$0xff]
        %v1378 = vld [vmem:[#allocation10 + $0x68] sm:$0xff]
        %v1379 = vld [vmem:[#allocation10 + $0x70] sm:$0xff]
        %v1380 = vld [vmem:[#allocation10 + $0x78] sm:$0xff]
        %v1381 = vld [vmem:[#allocation10 + $0x80] sm:$0xff]
        %v1382 = vld [vmem:[#allocation10 + $0x88] sm:$0xff]
        %v1383 = vld [vmem:[#allocation10 + $0x90] sm:$0xff]
        %v1384 = vld [vmem:[#allocation10 + $0x98] sm:$0xff]
        %v1385 = vld [vmem:[#allocation10 + $0xa0] sm:$0xff]
        %v1386 = vld [vmem:[#allocation10 + $0xa8] sm:$0xff]
        %v1387 = vld [vmem:[#allocation10 + $0xb0] sm:$0xff]
        %v1388 = vld [vmem:[#allocation10 + $0xb8] sm:$0xff]
        %v1389 = vld [vmem:[#allocation10 + $0xc0] sm:$0xff]
        %v1390 = vld [vmem:[#allocation10 + $0xc8] sm:$0xff]
        %v1391 = vld [vmem:[#allocation10 + $0xd0] sm:$0xff]
        %v1392 = vld [vmem:[#allocation10 + $0xd8] sm:$0xff]
        %v1393 = vld [vmem:[#allocation10 + $0xe0] sm:$0xff]
        %v1394 = vld [vmem:[#allocation10 + $0xe8] sm:$0xff]
        %v1395 = vld [vmem:[#allocation10 + $0xf0] sm:$0xff]
        %v1396 = vld [vmem:[#allocation10 + $0xf8] sm:$0xff]
        %v1397 = vld [vmem:[#allocation10 + $0x100] sm:$0xff]
        %v1398 = vld [vmem:[#allocation10 + $0x108] sm:$0xff]
        %v1399 = vld [vmem:[#allocation10 + $0x110] sm:$0xff]
        %v1400 = vld [vmem:[#allocation10 + $0x118] sm:$0xff]
        %v1401 = vld [vmem:[#allocation10 + $0x120] sm:$0xff]
        %v1402 = vld [vmem:[#allocation10 + $0x128] sm:$0xff]
        %v1403 = vld [vmem:[#allocation10 + $0x130] sm:$0xff]
        %v1404 = vld [vmem:[#allocation10 + $0x138] sm:$0xff]
        %v1405 = vld [vmem:[#allocation10 + $0x140] sm:$0xff]
        %v1406 = vld [vmem:[#allocation10 + $0x148] sm:$0xff]
        %v1407 = vld [vmem:[#allocation10 + $0x150] sm:$0xff]
        %v1408 = vld [vmem:[#allocation10 + $0x158] sm:$0xff]
        %v1409 = vld [vmem:[#allocation10 + $0x160] sm:$0xff]
        %v1410 = vld [vmem:[#allocation10 + $0x168] sm:$0xff]
        %v1411 = vld [vmem:[#allocation10 + $0x170] sm:$0xff]
        %v1412 = vld [vmem:[#allocation10 + $0x178] sm:$0xff]
        %v1413 = vld [vmem:[#allocation10 + $0x180] sm:$0xff]
        %v1414 = vld [vmem:[#allocation10 + $0x188] sm:$0xff]
        %v1415 = vld [vmem:[#allocation10 + $0x190] sm:$0xff]
        %v1416 = vld [vmem:[#allocation10 + $0x198] sm:$0xff]
        %v1417 = vld [vmem:[#allocation10 + $0x1a0] sm:$0xff]
        %v1418 = vld [vmem:[#allocation10 + $0x1a8] sm:$0xff]
        %v1419 = vld [vmem:[#allocation10 + $0x1b0] sm:$0xff]
        %v1420 = vld [vmem:[#allocation10 + $0x1b8] sm:$0xff]
        %v1421 = vld [vmem:[#allocation10 + $0x1c0] sm:$0xff]
        %v1422 = vld [vmem:[#allocation10 + $0x1c8] sm:$0xff]
        %v1423 = vld [vmem:[#allocation10 + $0x1d0] sm:$0xff]
        %v1424 = vld [vmem:[#allocation10 + $0x1d8] sm:$0xff]
        %v1425 = vld [vmem:[#allocation10 + $0x1e0] sm:$0xff]
        %v1426 = vld [vmem:[#allocation10 + $0x1e8] sm:$0xff]
        %v1427 = vld [vmem:[#allocation10 + $0x1f0] sm:$0xff]
        %v1428 = vld [vmem:[#allocation10 + $0x1f8] sm:$0xff]
        %v1429 = vld [vmem:[%s7] ss:$2 sm:$0xf]
        %v1431 = vlaneseq
        %v1432 = vshrl.u32 %v1431, 7
        %v1433 = vsub.s32 0, %v1432
        %v1434 = vrot.slane %v1429, %v1433
        %v1435 = vlaneseq
        %v1436 = vshrl.u32 %v1435, 7
        %v1437 = vsub.s32 1, %v1436
        %v1438 = vrot.slane %v1429, %v1437
        %v1439 = vlaneseq
        %v1440 = vshrl.u32 %v1439, 7
        %v1441 = vsub.s32 2, %v1440
        %v1442 = vrot.slane %v1429, %v1441
        %v1443 = vlaneseq
        %v1444 = vshrl.u32 %v1443, 7
        %v1445 = vsub.s32 3, %v1444
        %v1446 = vrot.slane %v1429, %v1445
        %v1515 = vunpack.c.l.b16 %v1365
        %v1516 = vunpack.c.h.b16 %v1365
        %v1517 = vunpack.c.l.b16 %v1366
        %v1518 = vunpack.c.h.b16 %v1366
        %v1519 = vunpack.c.l.b16 %v1367
        %v1520 = vunpack.c.h.b16 %v1367
        %v1521 = vunpack.c.l.b16 %v1368
        %v1522 = vunpack.c.h.b16 %v1368
        %v1523 = vunpack.c.l.b16 %v1369
        %v1524 = vunpack.c.h.b16 %v1369
        %v1525 = vunpack.c.l.b16 %v1370
        %v1526 = vunpack.c.h.b16 %v1370
        %v1527 = vunpack.c.l.b16 %v1371
        %v1528 = vunpack.c.h.b16 %v1371
        %v1529 = vunpack.c.l.b16 %v1372
        %v1530 = vunpack.c.h.b16 %v1372
        %v1531 = vunpack.c.l.b16 %v1373
        %v1532 = vunpack.c.h.b16 %v1373
        %v1533 = vunpack.c.l.b16 %v1374
        %v1534 = vunpack.c.h.b16 %v1374
        %v1535 = vunpack.c.l.b16 %v1375
        %v1536 = vunpack.c.h.b16 %v1375
        %v1537 = vunpack.c.l.b16 %v1376
        %v1538 = vunpack.c.h.b16 %v1376
        %v1539 = vunpack.c.l.b16 %v1377
        %v1540 = vunpack.c.h.b16 %v1377
        %v1541 = vunpack.c.l.b16 %v1378
        %v1542 = vunpack.c.h.b16 %v1378
        %v1543 = vunpack.c.l.b16 %v1379
        %v1544 = vunpack.c.h.b16 %v1379
        %v1545 = vunpack.c.l.b16 %v1380
        %v1546 = vunpack.c.h.b16 %v1380
        %v1547 = vunpack.c.l.b16 %v1381
        %v1548 = vunpack.c.h.b16 %v1381
        %v1549 = vunpack.c.l.b16 %v1382
        %v1550 = vunpack.c.h.b16 %v1382
        %v1551 = vunpack.c.l.b16 %v1383
        %v1552 = vunpack.c.h.b16 %v1383
        %v1553 = vunpack.c.l.b16 %v1384
        %v1554 = vunpack.c.h.b16 %v1384
        %v1555 = vunpack.c.l.b16 %v1385
        %v1556 = vunpack.c.h.b16 %v1385
        %v1557 = vunpack.c.l.b16 %v1386
        %v1558 = vunpack.c.h.b16 %v1386
        %v1559 = vunpack.c.l.b16 %v1387
        %v1560 = vunpack.c.h.b16 %v1387
        %v1561 = vunpack.c.l.b16 %v1388
        %v1562 = vunpack.c.h.b16 %v1388
        %v1563 = vunpack.c.l.b16 %v1389
        %v1564 = vunpack.c.h.b16 %v1389
        %v1565 = vunpack.c.l.b16 %v1390
        %v1566 = vunpack.c.h.b16 %v1390
        %v1567 = vunpack.c.l.b16 %v1391
        %v1568 = vunpack.c.h.b16 %v1391
        %v1569 = vunpack.c.l.b16 %v1392
        %v1570 = vunpack.c.h.b16 %v1392
        %v1571 = vunpack.c.l.b16 %v1393
        %v1572 = vunpack.c.h.b16 %v1393
        %v1573 = vunpack.c.l.b16 %v1394
        %v1574 = vunpack.c.h.b16 %v1394
        %v1575 = vunpack.c.l.b16 %v1395
        %v1576 = vunpack.c.h.b16 %v1395
        %v1577 = vunpack.c.l.b16 %v1396
        %v1578 = vunpack.c.h.b16 %v1396
        %v1579 = vunpack.c.l.b16 %v1397
        %v1580 = vunpack.c.h.b16 %v1397
        %v1581 = vunpack.c.l.b16 %v1398
        %v1582 = vunpack.c.h.b16 %v1398
        %v1583 = vunpack.c.l.b16 %v1399
        %v1584 = vunpack.c.h.b16 %v1399
        %v1585 = vunpack.c.l.b16 %v1400
        %v1586 = vunpack.c.h.b16 %v1400
        %v1587 = vunpack.c.l.b16 %v1401
        %v1588 = vunpack.c.h.b16 %v1401
        %v1589 = vunpack.c.l.b16 %v1402
        %v1590 = vunpack.c.h.b16 %v1402
        %v1591 = vunpack.c.l.b16 %v1403
        %v1592 = vunpack.c.h.b16 %v1403
        %v1593 = vunpack.c.l.b16 %v1404
        %v1594 = vunpack.c.h.b16 %v1404
        %v1595 = vunpack.c.l.b16 %v1405
        %v1596 = vunpack.c.h.b16 %v1405
        %v1597 = vunpack.c.l.b16 %v1406
        %v1598 = vunpack.c.h.b16 %v1406
        %v1599 = vunpack.c.l.b16 %v1407
        %v1600 = vunpack.c.h.b16 %v1407
        %v1601 = vunpack.c.l.b16 %v1408
        %v1602 = vunpack.c.h.b16 %v1408
        %v1603 = vunpack.c.l.b16 %v1409
        %v1604 = vunpack.c.h.b16 %v1409
        %v1605 = vunpack.c.l.b16 %v1410
        %v1606 = vunpack.c.h.b16 %v1410
        %v1607 = vunpack.c.l.b16 %v1411
        %v1608 = vunpack.c.h.b16 %v1411
        %v1609 = vunpack.c.l.b16 %v1412
        %v1610 = vunpack.c.h.b16 %v1412
        %v1611 = vunpack.c.l.b16 %v1413
        %v1612 = vunpack.c.h.b16 %v1413
        %v1613 = vunpack.c.l.b16 %v1414
        %v1614 = vunpack.c.h.b16 %v1414
        %v1615 = vunpack.c.l.b16 %v1415
        %v1616 = vunpack.c.h.b16 %v1415
        %v1617 = vunpack.c.l.b16 %v1416
        %v1618 = vunpack.c.h.b16 %v1416
        %v1619 = vunpack.c.l.b16 %v1417
        %v1620 = vunpack.c.h.b16 %v1417
        %v1621 = vunpack.c.l.b16 %v1418
        %v1622 = vunpack.c.h.b16 %v1418
        %v1623 = vunpack.c.l.b16 %v1419
        %v1624 = vunpack.c.h.b16 %v1419
        %v1625 = vunpack.c.l.b16 %v1420
        %v1626 = vunpack.c.h.b16 %v1420
        %v1627 = vunpack.c.l.b16 %v1421
        %v1628 = vunpack.c.h.b16 %v1421
        %v1629 = vunpack.c.l.b16 %v1422
        %v1630 = vunpack.c.h.b16 %v1422
        %v1631 = vunpack.c.l.b16 %v1423
        %v1632 = vunpack.c.h.b16 %v1423
        %v1633 = vunpack.c.l.b16 %v1424
        %v1634 = vunpack.c.h.b16 %v1424
        %v1635 = vunpack.c.l.b16 %v1425
        %v1636 = vunpack.c.h.b16 %v1425
        %v1637 = vunpack.c.l.b16 %v1426
        %v1638 = vunpack.c.h.b16 %v1426
        %v1639 = vunpack.c.l.b16 %v1427
        %v1640 = vunpack.c.h.b16 %v1427
        %v1641 = vunpack.c.l.b16 %v1428
        %v1642 = vunpack.c.h.b16 %v1428
        %v1643 = vpack.c.b16 %v1519, %v1515
        %v1644 = vpack.c.b16 %v1520, %v1516
        %v1645 = vpack.c.b16 %v1521, %v1517
        %v1646 = vpack.c.b16 %v1522, %v1518
        %v1647 = vpack.c.b16 %v1527, %v1523
        %v1648 = vpack.c.b16 %v1528, %v1524
        %v1649 = vpack.c.b16 %v1529, %v1525
        %v1650 = vpack.c.b16 %v1530, %v1526
        %v1651 = vpack.c.b16 %v1535, %v1531
        %v1652 = vpack.c.b16 %v1536, %v1532
        %v1653 = vpack.c.b16 %v1537, %v1533
        %v1654 = vpack.c.b16 %v1538, %v1534
        %v1655 = vpack.c.b16 %v1543, %v1539
        %v1656 = vpack.c.b16 %v1544, %v1540
        %v1657 = vpack.c.b16 %v1545, %v1541
        %v1658 = vpack.c.b16 %v1546, %v1542
        %v1659 = vpack.c.b16 %v1551, %v1547
        %v1660 = vpack.c.b16 %v1552, %v1548
        %v1661 = vpack.c.b16 %v1553, %v1549
        %v1662 = vpack.c.b16 %v1554, %v1550
        %v1663 = vpack.c.b16 %v1559, %v1555
        %v1664 = vpack.c.b16 %v1560, %v1556
        %v1665 = vpack.c.b16 %v1561, %v1557
        %v1666 = vpack.c.b16 %v1562, %v1558
        %v1667 = vpack.c.b16 %v1567, %v1563
        %v1668 = vpack.c.b16 %v1568, %v1564
        %v1669 = vpack.c.b16 %v1569, %v1565
        %v1670 = vpack.c.b16 %v1570, %v1566
        %v1671 = vpack.c.b16 %v1575, %v1571
        %v1672 = vpack.c.b16 %v1576, %v1572
        %v1673 = vpack.c.b16 %v1577, %v1573
        %v1674 = vpack.c.b16 %v1578, %v1574
        %v1675 = vpack.c.b16 %v1583, %v1579
        %v1676 = vpack.c.b16 %v1584, %v1580
        %v1677 = vpack.c.b16 %v1585, %v1581
        %v1678 = vpack.c.b16 %v1586, %v1582
        %v1679 = vpack.c.b16 %v1591, %v1587
        %v1680 = vpack.c.b16 %v1592, %v1588
        %v1681 = vpack.c.b16 %v1593, %v1589
        %v1682 = vpack.c.b16 %v1594, %v1590
        %v1683 = vpack.c.b16 %v1599, %v1595
        %v1684 = vpack.c.b16 %v1600, %v1596
        %v1685 = vpack.c.b16 %v1601, %v1597
        %v1686 = vpack.c.b16 %v1602, %v1598
        %v1687 = vpack.c.b16 %v1607, %v1603
        %v1688 = vpack.c.b16 %v1608, %v1604
        %v1689 = vpack.c.b16 %v1609, %v1605
        %v1690 = vpack.c.b16 %v1610, %v1606
        %v1691 = vpack.c.b16 %v1615, %v1611
        %v1692 = vpack.c.b16 %v1616, %v1612
        %v1693 = vpack.c.b16 %v1617, %v1613
        %v1694 = vpack.c.b16 %v1618, %v1614
        %v1695 = vpack.c.b16 %v1623, %v1619
        %v1696 = vpack.c.b16 %v1624, %v1620
        %v1697 = vpack.c.b16 %v1625, %v1621
        %v1698 = vpack.c.b16 %v1626, %v1622
        %v1699 = vpack.c.b16 %v1631, %v1627
        %v1700 = vpack.c.b16 %v1632, %v1628
        %v1701 = vpack.c.b16 %v1633, %v1629
        %v1702 = vpack.c.b16 %v1634, %v1630
        %v1703 = vpack.c.b16 %v1639, %v1635
        %v1704 = vpack.c.b16 %v1640, %v1636
        %v1705 = vpack.c.b16 %v1641, %v1637
        %v1706 = vpack.c.b16 %v1642, %v1638
        %1771 = vmatprep.subr.bf16.mxu0 %v1644
        %1772 = vmatpush1.bf16.msra.mxu0 %v1643
        %1773 = vmatprep.subr.bf16.mxu0 %v1648
        %1774 = vmatpush1.bf16.msra.mxu0 %v1647
        %1775 = vmatprep.subr.bf16.mxu0 %v1652
        %1776 = vmatpush1.bf16.msra.mxu0 %v1651
        %1777 = vmatprep.subr.bf16.mxu0 %v1656
        %1778 = vmatpush1.bf16.msra.mxu0 %v1655
        %1779 = vmatprep.subr.bf16.mxu0 %v1660
        %1780 = vmatpush1.bf16.msra.mxu0 %v1659
        %1781 = vmatprep.subr.bf16.mxu0 %v1664
        %1782 = vmatpush1.bf16.msra.mxu0 %v1663
        %1783 = vmatprep.subr.bf16.mxu0 %v1668
        %1784 = vmatpush1.bf16.msra.mxu0 %v1667
        %1785 = vmatprep.subr.bf16.mxu0 %v1672
        %1786 = vmatpush1.bf16.msra.mxu0 %v1671
        %1787 = vmatprep.subr.bf16.mxu0 %v1676
        %1788 = vmatpush1.bf16.msra.mxu0 %v1675
        %1789 = vmatprep.subr.bf16.mxu0 %v1680
        %1790 = vmatpush1.bf16.msra.mxu0 %v1679
        %1791 = vmatprep.subr.bf16.mxu0 %v1684
        %1792 = vmatpush1.bf16.msra.mxu0 %v1683
        %1793 = vmatprep.subr.bf16.mxu0 %v1688
        %1794 = vmatpush1.bf16.msra.mxu0 %v1687
        %1795 = vmatprep.subr.bf16.mxu0 %v1692
        %1796 = vmatpush1.bf16.msra.mxu0 %v1691
        %1797 = vmatprep.subr.bf16.mxu0 %v1696
        %1798 = vmatpush1.bf16.msra.mxu0 %v1695
        %1799 = vmatprep.subr.bf16.mxu0 %v1700
        %1800 = vmatpush1.bf16.msra.mxu0 %v1699
        %1801 = vmatprep.subr.bf16.mxu0 %v1704
        %1802 = vmatpush1.bf16.msra.mxu0 %v1703
        %1803 = vmatprep.mubr.bf16.mxu0 %v1358
        %1804 = vmatmul.mubr.bf16.gmra.mrb[0].mxu0 %v1357
        %v1805 = vpop.f32.mrb[0].mxu0
        %v1806 = vadd.f32 %v1434, %v1805
        %v1807 = vpop.f32.mrb[0].mxu0
        %v1808 = vadd.f32 %v1438, %v1807
        %v1809 = vpop.f32.mrb[0].mxu0
        %v1810 = vadd.f32 %v1434, %v1809
        %v1811 = vpop.f32.mrb[0].mxu0
        %v1812 = vadd.f32 %v1438, %v1811
        %1813 = vmatprep.mubr.bf16.mxu0 %v1360
        %1814 = vmatmul.mubr.bf16.gmra.mrb[0].mxu0 %v1359
        %v1815 = vpop.f32.mrb[0].mxu0
        %v1816 = vadd.f32 %v1434, %v1815
        %v1817 = vpop.f32.mrb[0].mxu0
        %v1818 = vadd.f32 %v1438, %v1817
        %v1819 = vpop.f32.mrb[0].mxu0
        %v1820 = vadd.f32 %v1434, %v1819
        %v1821 = vpop.f32.mrb[0].mxu0
        %v1822 = vadd.f32 %v1438, %v1821
        %1823 = vmatprep.mubr.bf16.mxu0 %v1362
        %1824 = vmatmul.mubr.bf16.gmra.mrb[0].mxu0 %v1361
        %v1825 = vpop.f32.mrb[0].mxu0
        %v1826 = vadd.f32 %v1434, %v1825
        %v1827 = vpop.f32.mrb[0].mxu0
        %v1828 = vadd.f32 %v1438, %v1827
        %v1829 = vpop.f32.mrb[0].mxu0
        %v1830 = vadd.f32 %v1434, %v1829
        %v1831 = vpop.f32.mrb[0].mxu0
        %v1832 = vadd.f32 %v1438, %v1831
        %1833 = vmatprep.mubr.bf16.mxu0 %v1364
        %1834 = vmatmul.mubr.bf16.gmra.mrb[0].mxu0 %v1363
        %v1835 = vpop.f32.mrb[0].mxu0
        %v1836 = vadd.f32 %v1434, %v1835
        %v1837 = vpop.f32.mrb[0].mxu0
        %v1838 = vadd.f32 %v1438, %v1837
        %v1839 = vpop.f32.mrb[0].mxu0
        %v1840 = vadd.f32 %v1434, %v1839
        %v1841 = vpop.f32.mrb[0].mxu0
        %v1842 = vadd.f32 %v1438, %v1841
        %1843 = vdwg.mxu0
        %1844 = vmatprep.subr.bf16.mxu0 %v1646
        %1845 = vmatpush1.bf16.msra.mxu0 %v1645
        %1846 = vmatprep.subr.bf16.mxu0 %v1650
        %1847 = vmatpush1.bf16.msra.mxu0 %v1649
        %1848 = vmatprep.subr.bf16.mxu0 %v1654
        %1849 = vmatpush1.bf16.msra.mxu0 %v1653
        %1850 = vmatprep.subr.bf16.mxu0 %v1658
        %1851 = vmatpush1.bf16.msra.mxu0 %v1657
        %1852 = vmatprep.subr.bf16.mxu0 %v1662
        %1853 = vmatpush1.bf16.msra.mxu0 %v1661
        %1854 = vmatprep.subr.bf16.mxu0 %v1666
        %1855 = vmatpush1.bf16.msra.mxu0 %v1665
        %1856 = vmatprep.subr.bf16.mxu0 %v1670
        %1857 = vmatpush1.bf16.msra.mxu0 %v1669
        %1858 = vmatprep.subr.bf16.mxu0 %v1674
        %1859 = vmatpush1.bf16.msra.mxu0 %v1673
        %1860 = vmatprep.subr.bf16.mxu0 %v1678
        %1861 = vmatpush1.bf16.msra.mxu0 %v1677
        %1862 = vmatprep.subr.bf16.mxu0 %v1682
        %1863 = vmatpush1.bf16.msra.mxu0 %v1681
        %1864 = vmatprep.subr.bf16.mxu0 %v1686
        %1865 = vmatpush1.bf16.msra.mxu0 %v1685
        %1866 = vmatprep.subr.bf16.mxu0 %v1690
        %1867 = vmatpush1.bf16.msra.mxu0 %v1689
        %1868 = vmatprep.subr.bf16.mxu0 %v1694
        %1869 = vmatpush1.bf16.msra.mxu0 %v1693
        %1870 = vmatprep.subr.bf16.mxu0 %v1698
        %1871 = vmatpush1.bf16.msra.mxu0 %v1697
        %1872 = vmatprep.subr.bf16.mxu0 %v1702
        %1873 = vmatpush1.bf16.msra.mxu0 %v1701
        %1874 = vmatprep.subr.bf16.mxu0 %v1706
        %1875 = vmatpush1.bf16.msra.mxu0 %v1705
        %1876 = vmatprep.mubr.bf16.mxu0 %v1358
        %1877 = vmatmul.mubr.bf16.gmra.mrb[0].mxu0 %v1357
        %v1878 = vpop.f32.mrb[0].mxu0
        %v1879 = vadd.f32 %v1442, %v1878
        %v1880 = vpop.f32.mrb[0].mxu0
        %v1881 = vadd.f32 %v1446, %v1880
        %v1882 = vpop.f32.mrb[0].mxu0
        %v1883 = vadd.f32 %v1442, %v1882
        %v1884 = vpop.f32.mrb[0].mxu0
        %v1885 = vadd.f32 %v1446, %v1884
        %1886 = vmatprep.mubr.bf16.mxu0 %v1360
        %1887 = vmatmul.mubr.bf16.gmra.mrb[0].mxu0 %v1359
        %v1888 = vpop.f32.mrb[0].mxu0
        %v1889 = vadd.f32 %v1442, %v1888
        %v1890 = vpop.f32.mrb[0].mxu0
        %v1891 = vadd.f32 %v1446, %v1890
        %v1892 = vpop.f32.mrb[0].mxu0
        %v1893 = vadd.f32 %v1442, %v1892
        %v1894 = vpop.f32.mrb[0].mxu0
        %v1895 = vadd.f32 %v1446, %v1894
        %1896 = vmatprep.mubr.bf16.mxu0 %v1362
        %1897 = vmatmul.mubr.bf16.gmra.mrb[0].mxu0 %v1361
        %v1898 = vpop.f32.mrb[0].mxu0
        %v1899 = vadd.f32 %v1442, %v1898
        %v1900 = vpop.f32.mrb[0].mxu0
        %v1901 = vadd.f32 %v1446, %v1900
        %v1902 = vpop.f32.mrb[0].mxu0
        %v1903 = vadd.f32 %v1442, %v1902
        %v1904 = vpop.f32.mrb[0].mxu0
        %v1905 = vadd.f32 %v1446, %v1904
        %1906 = vmatprep.mubr.bf16.mxu0 %v1364
        %1907 = vmatmul.mubr.bf16.gmra.mrb[0].mxu0 %v1363
        %v1908 = vpop.f32.mrb[0].mxu0
        %v1909 = vadd.f32 %v1442, %v1908
        %v1910 = vpop.f32.mrb[0].mxu0
        %v1911 = vadd.f32 %v1446, %v1910
        %v1912 = vpop.f32.mrb[0].mxu0
        %v1913 = vadd.f32 %v1442, %v1912
        %v1914 = vpop.f32.mrb[0].mxu0
        %v1915 = vadd.f32 %v1446, %v1914
        %1916 = vdwg.mxu0
        %v1917 = vpack.c.bf16 %v1343, %v1339
        %v1918 = vpack.c.bf16 %v1353, %v1349
        %v1919 = vpack.c.bf16 %v1345, %v1341
        %v1920 = vpack.c.bf16 %v1355, %v1351
        %v1921 = vpack.c.bf16 %v1810, %v1806
        %v1922 = vpack.c.bf16 %v1820, %v1816
        %v1923 = vpack.c.bf16 %v1830, %v1826
        %v1924 = vpack.c.bf16 %v1840, %v1836
        %v1925 = vpack.c.bf16 %v1812, %v1808
        %v1926 = vpack.c.bf16 %v1822, %v1818
        %v1927 = vpack.c.bf16 %v1832, %v1828
        %v1928 = vpack.c.bf16 %v1842, %v1838
        %v1929 = vpack.c.bf16 %v1883, %v1879
        %v1930 = vpack.c.bf16 %v1893, %v1889
        %v1931 = vpack.c.bf16 %v1903, %v1899
        %v1932 = vpack.c.bf16 %v1913, %v1909
        %v1933 = vpack.c.bf16 %v1885, %v1881
        %v1934 = vpack.c.bf16 %v1895, %v1891
        %v1935 = vpack.c.bf16 %v1905, %v1901
        %v1936 = vpack.c.bf16 %v1915, %v1911
        %1937 = vmatprep.subr.bf16.mxu0 0
        %1938 = vmatpush1.bf16.xpose.msra.mxu0 %v1921
        %1939 = vmatprep.subr.bf16.mxu0 0
        %1940 = vmatpush1.bf16.xpose.msra.mxu0 %v1922
        %1941 = vmatprep.subr.bf16.mxu0 0
        %1942 = vmatpush1.bf16.xpose.msra.mxu0 %v1923
        %1943 = vmatprep.subr.bf16.mxu0 0
        %1944 = vmatpush1.bf16.xpose.msra.mxu0 %v1924
        %1945 = vmatprep.subr.bf16.mxu0 0
        %1946 = vmatpush1.bf16.xpose.msra.mxu0 0
        %1947 = vmatprep.subr.bf16.mxu0 0
        %1948 = vmatpush1.bf16.xpose.msra.mxu0 0
        %1949 = vmatprep.subr.bf16.mxu0 0
        %1950 = vmatpush1.bf16.xpose.msra.mxu0 0
        %1951 = vmatprep.subr.bf16.mxu0 0
        %1952 = vmatpush1.bf16.xpose.msra.mxu0 0
        %1953 = vmatprep.subr.bf16.mxu0 0
        %1954 = vmatpush1.bf16.xpose.msra.mxu0 0
        %1955 = vmatprep.subr.bf16.mxu0 0
        %1956 = vmatpush1.bf16.xpose.msra.mxu0 0
        %1957 = vmatprep.subr.bf16.mxu0 0
        %1958 = vmatpush1.bf16.xpose.msra.mxu0 0
        %1959 = vmatprep.subr.bf16.mxu0 0
        %1960 = vmatpush1.bf16.xpose.msra.mxu0 0
        %1961 = vmatprep.subr.bf16.mxu0 0
        %1962 = vmatpush1.bf16.xpose.msra.mxu0 0
        %1963 = vmatprep.subr.bf16.mxu0 0
        %1964 = vmatpush1.bf16.xpose.msra.mxu0 0
        %1965 = vmatprep.subr.bf16.mxu0 0
        %1966 = vmatpush1.bf16.xpose.msra.mxu0 0
        %1967 = vmatprep.subr.bf16.mxu0 0
        %1968 = vmatpush1.bf16.xpose.msra.mxu0 0
        %1969 = vmatprep.mubr.bf16.mxu0 0
        %1970 = vmatmul.mubr.bf16.gmra.mrb[0].mxu0 %v1917
        %v1971 = vpop.f32.mrb[0].mxu0
        %v1972 = vadd.f32 %v800, %v1971
        %v1973 = vpop.f32.mrb[0].mxu0
        %v1974 = vpop.f32.mrb[0].mxu0
        %v1975 = vadd.f32 %v801, %v1974
        %v1976 = vpop.f32.mrb[0].mxu0
        %1977 = vmatprep.mubr.bf16.mxu0 0
        %1978 = vmatmul.mubr.bf16.gmra.mrb[0].mxu0 %v1918
        %v1979 = vpop.f32.mrb[0].mxu0
        %v1980 = vadd.f32 %v802, %v1979
        %v1981 = vpop.f32.mrb[0].mxu0
        %v1982 = vpop.f32.mrb[0].mxu0
        %v1983 = vadd.f32 %v803, %v1982
        %v1984 = vpop.f32.mrb[0].mxu0
        %1985 = vdwg.mxu0
        %1986 = vmatprep.subr.bf16.mxu0 0
        %1987 = vmatpush1.bf16.xpose.msra.mxu0 %v1925
        %1988 = vmatprep.subr.bf16.mxu0 0
        %1989 = vmatpush1.bf16.xpose.msra.mxu0 %v1926
        %1990 = vmatprep.subr.bf16.mxu0 0
        %1991 = vmatpush1.bf16.xpose.msra.mxu0 %v1927
        %1992 = vmatprep.subr.bf16.mxu0 0
        %1993 = vmatpush1.bf16.xpose.msra.mxu0 %v1928
        %1994 = vmatprep.subr.bf16.mxu0 0
        %1995 = vmatpush1.bf16.xpose.msra.mxu0 0
        %1996 = vmatprep.subr.bf16.mxu0 0
        %1997 = vmatpush1.bf16.xpose.msra.mxu0 0
        %1998 = vmatprep.subr.bf16.mxu0 0
        %1999 = vmatpush1.bf16.xpose.msra.mxu0 0
        %2000 = vmatprep.subr.bf16.mxu0 0
        %2001 = vmatpush1.bf16.xpose.msra.mxu0 0
        %2002 = vmatprep.subr.bf16.mxu0 0
        %2003 = vmatpush1.bf16.xpose.msra.mxu0 0
        %2004 = vmatprep.subr.bf16.mxu0 0
        %2005 = vmatpush1.bf16.xpose.msra.mxu0 0
        %2006 = vmatprep.subr.bf16.mxu0 0
        %2007 = vmatpush1.bf16.xpose.msra.mxu0 0
        %2008 = vmatprep.subr.bf16.mxu0 0
        %2009 = vmatpush1.bf16.xpose.msra.mxu0 0
        %2010 = vmatprep.subr.bf16.mxu0 0
        %2011 = vmatpush1.bf16.xpose.msra.mxu0 0
        %2012 = vmatprep.subr.bf16.mxu0 0
        %2013 = vmatpush1.bf16.xpose.msra.mxu0 0
        %2014 = vmatprep.subr.bf16.mxu0 0
        %2015 = vmatpush1.bf16.xpose.msra.mxu0 0
        %2016 = vmatprep.subr.bf16.mxu0 0
        %2017 = vmatpush1.bf16.xpose.msra.mxu0 0
        %2018 = vmatprep.mubr.bf16.mxu0 0
        %2019 = vmatmul.mubr.bf16.gmra.mrb[0].mxu0 %v1919
        %v2020 = vpop.f32.mrb[0].mxu0
        %v2021 = vadd.f32 %v800, %v2020
        %v2022 = vpop.f32.mrb[0].mxu0
        %v2023 = vpop.f32.mrb[0].mxu0
        %v2024 = vadd.f32 %v801, %v2023
        %v2025 = vpop.f32.mrb[0].mxu0
        %2026 = vmatprep.mubr.bf16.mxu0 0
        %2027 = vmatmul.mubr.bf16.gmra.mrb[0].mxu0 %v1920
        %v2028 = vpop.f32.mrb[0].mxu0
        %v2029 = vadd.f32 %v802, %v2028
        %v2030 = vpop.f32.mrb[0].mxu0
        %v2031 = vpop.f32.mrb[0].mxu0
        %v2032 = vadd.f32 %v803, %v2031
        %v2033 = vpop.f32.mrb[0].mxu0
        %2034 = vdwg.mxu0
        %vm2035 = vcmask 523264
        %v2036 = vsel %vm2035, %v1972, -inf
        %2037 = vmax.xlane.f32.xlu0 %v2036
        %v2038 = vpop.xlane.xlu0 %2037
        %v2039 = vsel %vm2035, %v1975, -inf
        %2040 = vmax.xlane.f32.xlu0 %v2039
        %v2041 = vpop.xlane.xlu0 %2040
        %v2042 = vsel %vm2035, %v1980, -inf
        %2043 = vmax.xlane.f32.xlu0 %v2042
        %v2044 = vpop.xlane.xlu0 %2043
        %v2045 = vsel %vm2035, %v1983, -inf
        %2046 = vmax.xlane.f32.xlu0 %v2045
        %v2047 = vpop.xlane.xlu0 %2046
        %v2048 = vsel %vm2035, %v2021, -inf
        %2049 = vmax.xlane.f32.xlu0 %v2048
        %v2050 = vpop.xlane.xlu0 %2049
        %v2051 = vsel %vm2035, %v2024, -inf
        %2052 = vmax.xlane.f32.xlu0 %v2051
        %v2053 = vpop.xlane.xlu0 %2052
        %v2054 = vsel %vm2035, %v2029, -inf
        %2055 = vmax.xlane.f32.xlu0 %v2054
        %v2056 = vpop.xlane.xlu0 %2055
        %v2057 = vsel %vm2035, %v2032, -inf
        %2058 = vmax.xlane.f32.xlu0 %v2057
        %v2059 = vpop.xlane.xlu0 %2058
        %v2060 = vsub.f32 %v1972, %v2038
        %v2061 = vsub.f32 %v1975, %v2041
        %v2062 = vsub.f32 %v1980, %v2044
        %v2063 = vsub.f32 %v1983, %v2047
        %v2064 = vsub.f32 %v2021, %v2050
        %v2065 = vsub.f32 %v2024, %v2053
        %v2066 = vsub.f32 %v2029, %v2056
        %v2067 = vsub.f32 %v2032, %v2059
        %v2068 = vmul.f32 %v2060, 1.442695
        %v2069 = vpow.pop %v2068
        %v2070 = vmul.f32 %v2061, 1.442695
        %v2071 = vpow.pop %v2070
        %v2072 = vmul.f32 %v2062, 1.442695
        %v2073 = vpow.pop %v2072
        %v2074 = vmul.f32 %v2063, 1.442695
        %v2075 = vpow.pop %v2074
        %v2076 = vmul.f32 %v2064, 1.442695
        %v2077 = vpow.pop %v2076
        %v2078 = vmul.f32 %v2065, 1.442695
        %v2079 = vpow.pop %v2078
        %v2080 = vmul.f32 %v2066, 1.442695
        %v2081 = vpow.pop %v2080
        %v2082 = vmul.f32 %v2067, 1.442695
        %v2083 = vpow.pop %v2082
        %v2084 = vsel %vm2035, %v2069, 0.0
        %2085 = vadd.xlane.f32.xlu0 %v2084
        %v2086 = vpop.xlane.xlu0 %2085
        %v2087 = vsel %vm2035, %v2071, 0.0
        %2088 = vadd.xlane.f32.xlu0 %v2087
        %v2089 = vpop.xlane.xlu0 %2088
        %v2090 = vsel %vm2035, %v2073, 0.0
        %2091 = vadd.xlane.f32.xlu0 %v2090
        %v2092 = vpop.xlane.xlu0 %2091
        %v2093 = vsel %vm2035, %v2075, 0.0
        %2094 = vadd.xlane.f32.xlu0 %v2093
        %v2095 = vpop.xlane.xlu0 %2094
        %v2096 = vsel %vm2035, %v2077, 0.0
        %2097 = vadd.xlane.f32.xlu0 %v2096
        %v2098 = vpop.xlane.xlu0 %2097
        %v2099 = vsel %vm2035, %v2079, 0.0
        %2100 = vadd.xlane.f32.xlu0 %v2099
        %v2101 = vpop.xlane.xlu0 %2100
        %v2102 = vsel %vm2035, %v2081, 0.0
        %2103 = vadd.xlane.f32.xlu0 %v2102
        %v2104 = vpop.xlane.xlu0 %2103
        %v2105 = vsel %vm2035, %v2083, 0.0
        %2106 = vadd.xlane.f32.xlu0 %v2105
        %v2107 = vpop.xlane.xlu0 %2106
        %v2108 = vrcp.pop %v2086
        %v2109 = vrcp.pop %v2089
        %v2110 = vrcp.pop %v2092
        %v2111 = vrcp.pop %v2095
        %v2112 = vrcp.pop %v2098
        %v2113 = vrcp.pop %v2101
        %v2114 = vrcp.pop %v2104
        %v2115 = vrcp.pop %v2107
        %v2116 = vmul.f32 %v2069, %v2108
        %v2117 = vmul.f32 %v2071, %v2109
        %v2118 = vmul.f32 %v2073, %v2110
        %v2119 = vmul.f32 %v2075, %v2111
        %v2120 = vmul.f32 %v2077, %v2112
        %v2121 = vmul.f32 %v2079, %v2113
        %v2122 = vmul.f32 %v2081, %v2114
        %v2123 = vmul.f32 %v2083, %v2115
        %v2124 = vpack.c.bf16 %v2117, %v2116
        %v2125 = vpack.c.bf16 %v2119, %v2118
        %v2126 = vpack.c.bf16 %v2121, %v2120
        %v2127 = vpack.c.bf16 %v2123, %v2122
        %v2129 = vsel %vm2035, %v2124, 0
        %v2132 = vsel %vm2035, %v2125, 0
        %2134 = vmatprep.subr.bf16.mxu0 0
        %2135 = vmatpush1.bf16.msra.mxu0 %v1929
        %2136 = vmatprep.subr.bf16.mxu0 0
        %2137 = vmatpush1.bf16.msra.mxu0 %v1930
        %2138 = vmatprep.subr.bf16.mxu0 0
        %2139 = vmatpush1.bf16.msra.mxu0 %v1931
        %2140 = vmatprep.subr.bf16.mxu0 0
        %2141 = vmatpush1.bf16.msra.mxu0 %v1932
        %2142 = vmatprep.subr.bf16.mxu0 0
        %2143 = vmatpush1.bf16.msra.mxu0 0
        %2144 = vmatprep.subr.bf16.mxu0 0
        %2145 = vmatpush1.bf16.msra.mxu0 0
        %2146 = vmatprep.subr.bf16.mxu0 0
        %2147 = vmatpush1.bf16.msra.mxu0 0
        %2148 = vmatprep.subr.bf16.mxu0 0
        %2149 = vmatpush1.bf16.msra.mxu0 0
        %2150 = vmatprep.subr.bf16.mxu0 0
        %2151 = vmatpush1.bf16.msra.mxu0 0
        %2152 = vmatprep.subr.bf16.mxu0 0
        %2153 = vmatpush1.bf16.msra.mxu0 0
        %2154 = vmatprep.subr.bf16.mxu0 0
        %2155 = vmatpush1.bf16.msra.mxu0 0
        %2156 = vmatprep.subr.bf16.mxu0 0
        %2157 = vmatpush1.bf16.msra.mxu0 0
        %2158 = vmatprep.subr.bf16.mxu0 0
        %2159 = vmatpush1.bf16.msra.mxu0 0
        %2160 = vmatprep.subr.bf16.mxu0 0
        %2161 = vmatpush1.bf16.msra.mxu0 0
        %2162 = vmatprep.subr.bf16.mxu0 0
        %2163 = vmatpush1.bf16.msra.mxu0 0
        %2164 = vmatprep.subr.bf16.mxu0 0
        %2165 = vmatpush1.bf16.msra.mxu0 0
        %2166 = vmatprep.mubr.bf16.mxu0 0
        %2167 = vmatmul.mubr.bf16.gmra.mrb[0].mxu0 %v2129
        %v2168 = vpop.f32.mrb[0].mxu0
        %v2169 = vadd.f32 0.0, %v2168
        %v2170 = vpop.f32.mrb[0].mxu0
        %v2171 = vpop.f32.mrb[0].mxu0
        %v2172 = vadd.f32 0.0, %v2171
        %v2173 = vpop.f32.mrb[0].mxu0
        %2174 = vmatprep.mubr.bf16.mxu0 0
        %2175 = vmatmul.mubr.bf16.gmra.mrb[0].mxu0 %v2132
        %v2176 = vpop.f32.mrb[0].mxu0
        %v2177 = vadd.f32 0.0, %v2176
        %v2178 = vpop.f32.mrb[0].mxu0
        %v2179 = vpop.f32.mrb[0].mxu0
        %v2180 = vadd.f32 0.0, %v2179
        %v2181 = vpop.f32.mrb[0].mxu0
        %2182 = vdwg.mxu0
        %v2184 = vsel %vm2035, %v2126, 0
        %v2187 = vsel %vm2035, %v2127, 0
        %2189 = vmatprep.subr.bf16.mxu0 0
        %2190 = vmatpush1.bf16.msra.mxu0 %v1933
        %2191 = vmatprep.subr.bf16.mxu0 0
        %2192 = vmatpush1.bf16.msra.mxu0 %v1934
        %2193 = vmatprep.subr.bf16.mxu0 0
        %2194 = vmatpush1.bf16.msra.mxu0 %v1935
        %2195 = vmatprep.subr.bf16.mxu0 0
        %2196 = vmatpush1.bf16.msra.mxu0 %v1936
        %2197 = vmatprep.subr.bf16.mxu0 0
        %2198 = vmatpush1.bf16.msra.mxu0 0
        %2199 = vmatprep.subr.bf16.mxu0 0
        %2200 = vmatpush1.bf16.msra.mxu0 0
        %2201 = vmatprep.subr.bf16.mxu0 0
        %2202 = vmatpush1.bf16.msra.mxu0 0
        %2203 = vmatprep.subr.bf16.mxu0 0
        %2204 = vmatpush1.bf16.msra.mxu0 0
        %2205 = vmatprep.subr.bf16.mxu0 0
        %2206 = vmatpush1.bf16.msra.mxu0 0
        %2207 = vmatprep.subr.bf16.mxu0 0
        %2208 = vmatpush1.bf16.msra.mxu0 0
        %2209 = vmatprep.subr.bf16.mxu0 0
        %2210 = vmatpush1.bf16.msra.mxu0 0
        %2211 = vmatprep.subr.bf16.mxu0 0
        %2212 = vmatpush1.bf16.msra.mxu0 0
        %2213 = vmatprep.subr.bf16.mxu0 0
        %2214 = vmatpush1.bf16.msra.mxu0 0
        %2215 = vmatprep.subr.bf16.mxu0 0
        %2216 = vmatpush1.bf16.msra.mxu0 0
        %2217 = vmatprep.subr.bf16.mxu0 0
        %2218 = vmatpush1.bf16.msra.mxu0 0
        %2219 = vmatprep.subr.bf16.mxu0 0
        %2220 = vmatpush1.bf16.msra.mxu0 0
        %2221 = vmatprep.mubr.bf16.mxu0 0
        %2222 = vmatmul.mubr.bf16.gmra.mrb[0].mxu0 %v2184
        %v2223 = vpop.f32.mrb[0].mxu0
        %v2224 = vadd.f32 0.0, %v2223
        %v2225 = vpop.f32.mrb[0].mxu0
        %v2226 = vpop.f32.mrb[0].mxu0
        %v2227 = vadd.f32 0.0, %v2226
        %v2228 = vpop.f32.mrb[0].mxu0
        %2229 = vmatprep.mubr.bf16.mxu0 0
        %2230 = vmatmul.mubr.bf16.gmra.mrb[0].mxu0 %v2187
        %v2231 = vpop.f32.mrb[0].mxu0
        %v2232 = vadd.f32 0.0, %v2231
        %v2233 = vpop.f32.mrb[0].mxu0
        %v2234 = vpop.f32.mrb[0].mxu0
        %v2235 = vadd.f32 0.0, %v2234
        %v2236 = vpop.f32.mrb[0].mxu0
        %2237 = vdwg.mxu0
        %v2238 = vld [vmem:[#allocation11] sm:$0xff]
        %v2239 = vld [vmem:[#allocation11 + $0x8] sm:$0xff]
        %v2240 = vld [vmem:[#allocation11 + $0x10] sm:$0xff]
        %v2241 = vld [vmem:[#allocation11 + $0x18] sm:$0xff]
        %v2242 = vld [vmem:[#allocation11 + $0x20] sm:$0xff]
        %v2243 = vld [vmem:[#allocation11 + $0x28] sm:$0xff]
        %v2244 = vld [vmem:[#allocation11 + $0x30] sm:$0xff]
        %v2245 = vld [vmem:[#allocation11 + $0x38] sm:$0xff]
        %v2246 = vld [vmem:[#allocation11 + $0x40] sm:$0xff]
        %v2247 = vld [vmem:[#allocation11 + $0x48] sm:$0xff]
        %v2248 = vld [vmem:[#allocation11 + $0x50] sm:$0xff]
        %v2249 = vld [vmem:[#allocation11 + $0x58] sm:$0xff]
        %v2250 = vld [vmem:[#allocation11 + $0x60] sm:$0xff]
        %v2251 = vld [vmem:[#allocation11 + $0x68] sm:$0xff]
        %v2252 = vld [vmem:[#allocation11 + $0x70] sm:$0xff]
        %v2253 = vld [vmem:[#allocation11 + $0x78] sm:$0xff]
        %v2254 = vld [vmem:[#allocation11 + $0x80] sm:$0xff]
        %v2255 = vld [vmem:[#allocation11 + $0x88] sm:$0xff]
        %v2256 = vld [vmem:[#allocation11 + $0x90] sm:$0xff]
        %v2257 = vld [vmem:[#allocation11 + $0x98] sm:$0xff]
        %v2258 = vld [vmem:[#allocation11 + $0xa0] sm:$0xff]
        %v2259 = vld [vmem:[#allocation11 + $0xa8] sm:$0xff]
        %v2260 = vld [vmem:[#allocation11 + $0xb0] sm:$0xff]
        %v2261 = vld [vmem:[#allocation11 + $0xb8] sm:$0xff]
        %v2262 = vld [vmem:[#allocation11 + $0xc0] sm:$0xff]
        %v2263 = vld [vmem:[#allocation11 + $0xc8] sm:$0xff]
        %v2264 = vld [vmem:[#allocation11 + $0xd0] sm:$0xff]
        %v2265 = vld [vmem:[#allocation11 + $0xd8] sm:$0xff]
        %v2266 = vld [vmem:[#allocation11 + $0xe0] sm:$0xff]
        %v2267 = vld [vmem:[#allocation11 + $0xe8] sm:$0xff]
        %v2268 = vld [vmem:[#allocation11 + $0xf0] sm:$0xff]
        %v2269 = vld [vmem:[#allocation11 + $0xf8] sm:$0xff]
        %v2270 = vpack.c.bf16 %v2172, %v2169
        %v2271 = vpack.c.bf16 %v2180, %v2177
        %v2272 = vpack.c.bf16 %v2227, %v2224
        %v2273 = vpack.c.bf16 %v2235, %v2232
        %v2290 = vunpack.c.l.b16 %v2238
        %v2291 = vunpack.c.h.b16 %v2238
        %v2292 = vunpack.c.l.b16 %v2239
        %v2293 = vunpack.c.h.b16 %v2239
        %v2294 = vunpack.c.l.b16 %v2240
        %v2295 = vunpack.c.h.b16 %v2240
        %v2296 = vunpack.c.l.b16 %v2241
        %v2297 = vunpack.c.h.b16 %v2241
        %v2298 = vunpack.c.l.b16 %v2242
        %v2299 = vunpack.c.h.b16 %v2242
        %v2300 = vunpack.c.l.b16 %v2243
        %v2301 = vunpack.c.h.b16 %v2243
        %v2302 = vunpack.c.l.b16 %v2244
        %v2303 = vunpack.c.h.b16 %v2244
        %v2304 = vunpack.c.l.b16 %v2245
        %v2305 = vunpack.c.h.b16 %v2245
        %v2306 = vunpack.c.l.b16 %v2246
        %v2307 = vunpack.c.h.b16 %v2246
        %v2308 = vunpack.c.l.b16 %v2247
        %v2309 = vunpack.c.h.b16 %v2247
        %v2310 = vunpack.c.l.b16 %v2248
        %v2311 = vunpack.c.h.b16 %v2248
        %v2312 = vunpack.c.l.b16 %v2249
        %v2313 = vunpack.c.h.b16 %v2249
        %v2314 = vunpack.c.l.b16 %v2250
        %v2315 = vunpack.c.h.b16 %v2250
        %v2316 = vunpack.c.l.b16 %v2251
        %v2317 = vunpack.c.h.b16 %v2251
        %v2318 = vunpack.c.l.b16 %v2252
        %v2319 = vunpack.c.h.b16 %v2252
        %v2320 = vunpack.c.l.b16 %v2253
        %v2321 = vunpack.c.h.b16 %v2253
        %v2322 = vpack.c.b16 %v2292, %v2290
        %v2323 = vpack.c.b16 %v2293, %v2291
        %v2324 = vpack.c.b16 %v2296, %v2294
        %v2325 = vpack.c.b16 %v2297, %v2295
        %v2326 = vpack.c.b16 %v2300, %v2298
        %v2327 = vpack.c.b16 %v2301, %v2299
        %v2328 = vpack.c.b16 %v2304, %v2302
        %v2329 = vpack.c.b16 %v2305, %v2303
        %v2330 = vpack.c.b16 %v2308, %v2306
        %v2331 = vpack.c.b16 %v2309, %v2307
        %v2332 = vpack.c.b16 %v2312, %v2310
        %v2333 = vpack.c.b16 %v2313, %v2311
        %v2334 = vpack.c.b16 %v2316, %v2314
        %v2335 = vpack.c.b16 %v2317, %v2315
        %v2336 = vpack.c.b16 %v2320, %v2318
        %v2337 = vpack.c.b16 %v2321, %v2319
        %2354 = vmatprep.subr.bf16.mxu0 %v2323
        %2355 = vmatpush1.bf16.msra.mxu0 %v2322
        %2356 = vmatprep.subr.bf16.mxu0 %v2325
        %2357 = vmatpush1.bf16.msra.mxu0 %v2324
        %2358 = vmatprep.subr.bf16.mxu0 %v2327
        %2359 = vmatpush1.bf16.msra.mxu0 %v2326
        %2360 = vmatprep.subr.bf16.mxu0 %v2329
        %2361 = vmatpush1.bf16.msra.mxu0 %v2328
        %2362 = vmatprep.subr.bf16.mxu0 %v2331
        %2363 = vmatpush1.bf16.msra.mxu0 %v2330
        %2364 = vmatprep.subr.bf16.mxu0 %v2333
        %2365 = vmatpush1.bf16.msra.mxu0 %v2332
        %2366 = vmatprep.subr.bf16.mxu0 %v2335
        %2367 = vmatpush1.bf16.msra.mxu0 %v2334
        %2368 = vmatprep.subr.bf16.mxu0 %v2337
        %2369 = vmatpush1.bf16.msra.mxu0 %v2336
        %2370 = vmatprep.subr.bf16.mxu0 0
        %2371 = vmatpush1.bf16.msra.mxu0 0
        %2372 = vmatprep.subr.bf16.mxu0 0
        %2373 = vmatpush1.bf16.msra.mxu0 0
        %2374 = vmatprep.subr.bf16.mxu0 0
        %2375 = vmatpush1.bf16.msra.mxu0 0
        %2376 = vmatprep.subr.bf16.mxu0 0
        %2377 = vmatpush1.bf16.msra.mxu0 0
        %2378 = vmatprep.subr.bf16.mxu0 0
        %2379 = vmatpush1.bf16.msra.mxu0 0
        %2380 = vmatprep.subr.bf16.mxu0 0
        %2381 = vmatpush1.bf16.msra.mxu0 0
        %2382 = vmatprep.subr.bf16.mxu0 0
        %2383 = vmatpush1.bf16.msra.mxu0 0
        %2384 = vmatprep.subr.bf16.mxu0 0
        %2385 = vmatpush1.bf16.msra.mxu0 0
        %2386 = vmatprep.mubr.bf16.mxu0 0
        %2387 = vmatmul.mubr.bf16.gmra.mrb[0].mxu0 %v2270
        %v2388 = vpop.f32.mrb[0].mxu0
        %v2389 = vadd.f32 0.0, %v2388
        %v2390 = vpop.f32.mrb[0].mxu0
        %v2391 = vadd.f32 0.0, %v2390
        %v2392 = vpop.f32.mrb[0].mxu0
        %v2393 = vadd.f32 0.0, %v2392
        %v2394 = vpop.f32.mrb[0].mxu0
        %v2395 = vadd.f32 0.0, %v2394
        %2396 = vmatprep.mubr.bf16.mxu0 0
        %2397 = vmatmul.mubr.bf16.gmra.mrb[0].mxu0 %v2271
        %v2398 = vpop.f32.mrb[0].mxu0
        %v2399 = vadd.f32 0.0, %v2398
        %v2400 = vpop.f32.mrb[0].mxu0
        %v2401 = vadd.f32 0.0, %v2400
        %v2402 = vpop.f32.mrb[0].mxu0
        %v2403 = vadd.f32 0.0, %v2402
        %v2404 = vpop.f32.mrb[0].mxu0
        %v2405 = vadd.f32 0.0, %v2404
        %2406 = vdwg.mxu0
        %v2423 = vunpack.c.l.b16 %v2254
        %v2424 = vunpack.c.h.b16 %v2254
        %v2425 = vunpack.c.l.b16 %v2255
        %v2426 = vunpack.c.h.b16 %v2255
        %v2427 = vunpack.c.l.b16 %v2256
        %v2428 = vunpack.c.h.b16 %v2256
        %v2429 = vunpack.c.l.b16 %v2257
        %v2430 = vunpack.c.h.b16 %v2257
        %v2431 = vunpack.c.l.b16 %v2258
        %v2432 = vunpack.c.h.b16 %v2258
        %v2433 = vunpack.c.l.b16 %v2259
        %v2434 = vunpack.c.h.b16 %v2259
        %v2435 = vunpack.c.l.b16 %v2260
        %v2436 = vunpack.c.h.b16 %v2260
        %v2437 = vunpack.c.l.b16 %v2261
        %v2438 = vunpack.c.h.b16 %v2261
        %v2439 = vunpack.c.l.b16 %v2262
        %v2440 = vunpack.c.h.b16 %v2262
        %v2441 = vunpack.c.l.b16 %v2263
        %v2442 = vunpack.c.h.b16 %v2263
        %v2443 = vunpack.c.l.b16 %v2264
        %v2444 = vunpack.c.h.b16 %v2264
        %v2445 = vunpack.c.l.b16 %v2265
        %v2446 = vunpack.c.h.b16 %v2265
        %v2447 = vunpack.c.l.b16 %v2266
        %v2448 = vunpack.c.h.b16 %v2266
        %v2449 = vunpack.c.l.b16 %v2267
        %v2450 = vunpack.c.h.b16 %v2267
        %v2451 = vunpack.c.l.b16 %v2268
        %v2452 = vunpack.c.h.b16 %v2268
        %v2453 = vunpack.c.l.b16 %v2269
        %v2454 = vunpack.c.h.b16 %v2269
        %v2455 = vpack.c.b16 %v2425, %v2423
        %v2456 = vpack.c.b16 %v2426, %v2424
        %v2457 = vpack.c.b16 %v2429, %v2427
        %v2458 = vpack.c.b16 %v2430, %v2428
        %v2459 = vpack.c.b16 %v2433, %v2431
        %v2460 = vpack.c.b16 %v2434, %v2432
        %v2461 = vpack.c.b16 %v2437, %v2435
        %v2462 = vpack.c.b16 %v2438, %v2436
        %v2463 = vpack.c.b16 %v2441, %v2439
        %v2464 = vpack.c.b16 %v2442, %v2440
        %v2465 = vpack.c.b16 %v2445, %v2443
        %v2466 = vpack.c.b16 %v2446, %v2444
        %v2467 = vpack.c.b16 %v2449, %v2447
        %v2468 = vpack.c.b16 %v2450, %v2448
        %v2469 = vpack.c.b16 %v2453, %v2451
        %v2470 = vpack.c.b16 %v2454, %v2452
        %2487 = vmatprep.subr.bf16.mxu0 %v2456
        %2488 = vmatpush1.bf16.msra.mxu0 %v2455
        %2489 = vmatprep.subr.bf16.mxu0 %v2458
        %2490 = vmatpush1.bf16.msra.mxu0 %v2457
        %2491 = vmatprep.subr.bf16.mxu0 %v2460
        %2492 = vmatpush1.bf16.msra.mxu0 %v2459
        %2493 = vmatprep.subr.bf16.mxu0 %v2462
        %2494 = vmatpush1.bf16.msra.mxu0 %v2461
        %2495 = vmatprep.subr.bf16.mxu0 %v2464
        %2496 = vmatpush1.bf16.msra.mxu0 %v2463
        %2497 = vmatprep.subr.bf16.mxu0 %v2466
        %2498 = vmatpush1.bf16.msra.mxu0 %v2465
        %2499 = vmatprep.subr.bf16.mxu0 %v2468
        %2500 = vmatpush1.bf16.msra.mxu0 %v2467
        %2501 = vmatprep.subr.bf16.mxu0 %v2470
        %2502 = vmatpush1.bf16.msra.mxu0 %v2469
        %2503 = vmatprep.subr.bf16.mxu0 0
        %2504 = vmatpush1.bf16.msra.mxu0 0
        %2505 = vmatprep.subr.bf16.mxu0 0
        %2506 = vmatpush1.bf16.msra.mxu0 0
        %2507 = vmatprep.subr.bf16.mxu0 0
        %2508 = vmatpush1.bf16.msra.mxu0 0
        %2509 = vmatprep.subr.bf16.mxu0 0
        %2510 = vmatpush1.bf16.msra.mxu0 0
        %2511 = vmatprep.subr.bf16.mxu0 0
        %2512 = vmatpush1.bf16.msra.mxu0 0
        %2513 = vmatprep.subr.bf16.mxu0 0
        %2514 = vmatpush1.bf16.msra.mxu0 0
        %2515 = vmatprep.subr.bf16.mxu0 0
        %2516 = vmatpush1.bf16.msra.mxu0 0
        %2517 = vmatprep.subr.bf16.mxu0 0
        %2518 = vmatpush1.bf16.msra.mxu0 0
        %2519 = vmatprep.mubr.bf16.mxu0 0
        %2520 = vmatmul.mubr.bf16.gmra.mrb[0].mxu0 %v2272
        %v2521 = vpop.f32.mrb[0].mxu0
        %v2522 = vadd.f32 0.0, %v2521
        %v2523 = vpop.f32.mrb[0].mxu0
        %v2524 = vadd.f32 0.0, %v2523
        %v2525 = vpop.f32.mrb[0].mxu0
        %v2526 = vadd.f32 0.0, %v2525
        %v2527 = vpop.f32.mrb[0].mxu0
        %v2528 = vadd.f32 0.0, %v2527
        %2529 = vmatprep.mubr.bf16.mxu0 0
        %2530 = vmatmul.mubr.bf16.gmra.mrb[0].mxu0 %v2273
        %v2531 = vpop.f32.mrb[0].mxu0
        %v2532 = vadd.f32 0.0, %v2531
        %v2533 = vpop.f32.mrb[0].mxu0
        %v2534 = vadd.f32 0.0, %v2533
        %v2535 = vpop.f32.mrb[0].mxu0
        %v2536 = vadd.f32 0.0, %v2535
        %v2537 = vpop.f32.mrb[0].mxu0
        %v2538 = vadd.f32 0.0, %v2537
        %2539 = vdwg.mxu0
        %v2540 = vadd.f32 %v2389, %v2522
        %v2541 = vadd.f32 %v2391, %v2524
        %v2542 = vadd.f32 %v2393, %v2526
        %v2543 = vadd.f32 %v2395, %v2528
        %v2544 = vadd.f32 %v2399, %v2532
        %v2545 = vadd.f32 %v2401, %v2534
        %v2546 = vadd.f32 %v2403, %v2536
        %v2547 = vadd.f32 %v2405, %v2538
        %v2548 = vlaneseq
        %v2549 = vshrl.u32 %v2548, 7
        %v2550 = vsub.s32 1, %v2549
        %v2551 = vrot.slane %v785, %v2550
        %v2552 = vlaneseq
        %v2553 = vshrl.u32 %v2552, 7
        %v2554 = vsub.s32 1, %v2553
        %v2555 = vrot.slane %v786, %v2554
        %v2556 = vadd.f32 %v2540, %v2551
        %v2557 = vadd.f32 %v2541, %v2555
        %v2558 = vadd.f32 %v2542, %v2551
        %v2559 = vadd.f32 %v2543, %v2555
        %v2560 = vadd.f32 %v2544, %v2551
        %v2561 = vadd.f32 %v2545, %v2555
        %v2562 = vadd.f32 %v2546, %v2551
        %v2563 = vadd.f32 %v2547, %v2555
        %v2564 = vadd.f32 %v747, %v2556
        %v2565 = vadd.f32 %v748, %v2557
        %v2566 = vadd.f32 %v749, %v2558
        %v2567 = vadd.f32 %v750, %v2559
        %v2568 = vadd.f32 %v751, %v2560
        %v2569 = vadd.f32 %v752, %v2561
        %v2570 = vadd.f32 %v753, %v2562
        %v2571 = vadd.f32 %v754, %v2563
        %v2572 = vadd.f32 %v2564, %v2565
        %2573 = vadd.xlane.f32.xlu0 %v2572
        %v2574 = vpop.xlane.xlu0 %2573
        %v2575 = vadd.f32 %v2566, %v2567
        %2576 = vadd.xlane.f32.xlu0 %v2575
        %v2577 = vpop.xlane.xlu0 %2576
        %v2578 = vadd.f32 %v2568, %v2569
        %2579 = vadd.xlane.f32.xlu0 %v2578
        %v2580 = vpop.xlane.xlu0 %2579
        %v2581 = vadd.f32 %v2570, %v2571
        %2582 = vadd.xlane.f32.xlu0 %v2581
        %v2583 = vpop.xlane.xlu0 %2582
        %v2584 = vmul.f32 %v2574, %v833
        %v2585 = vmul.f32 %v2577, %v833
        %v2586 = vmul.f32 %v2580, %v833
        %v2587 = vmul.f32 %v2583, %v833
        %v2588 = vsub.f32 %v2564, %v2584
        %v2589 = vsub.f32 %v2565, %v2584
        %v2590 = vsub.f32 %v2566, %v2585
        %v2591 = vsub.f32 %v2567, %v2585
        %v2592 = vsub.f32 %v2568, %v2586
        %v2593 = vsub.f32 %v2569, %v2586
        %v2594 = vsub.f32 %v2570, %v2587
        %v2595 = vsub.f32 %v2571, %v2587
        %v2596 = vmul.f32 %v2588, %v2588
        %v2597 = vmul.f32 %v2589, %v2589
        %v2598 = vmul.f32 %v2590, %v2590
        %v2599 = vmul.f32 %v2591, %v2591
        %v2600 = vmul.f32 %v2592, %v2592
        %v2601 = vmul.f32 %v2593, %v2593
        %v2602 = vmul.f32 %v2594, %v2594
        %v2603 = vmul.f32 %v2595, %v2595
        %v2604 = vadd.f32 %v2596, %v2597
        %2605 = vadd.xlane.f32.xlu0 %v2604
        %v2606 = vpop.xlane.xlu0 %2605
        %v2607 = vadd.f32 %v2598, %v2599
        %2608 = vadd.xlane.f32.xlu0 %v2607
        %v2609 = vpop.xlane.xlu0 %2608
        %v2610 = vadd.f32 %v2600, %v2601
        %2611 = vadd.xlane.f32.xlu0 %v2610
        %v2612 = vpop.xlane.xlu0 %2611
        %v2613 = vadd.f32 %v2602, %v2603
        %2614 = vadd.xlane.f32.xlu0 %v2613
        %v2615 = vpop.xlane.xlu0 %2614
        %v2616 = vmul.f32 %v2606, %v833
        %v2617 = vmul.f32 %v2609, %v833
        %v2618 = vmul.f32 %v2612, %v833
        %v2619 = vmul.f32 %v2615, %v833
        %v2620 = vlaneseq
        %v2621 = vshrl.u32 %v2620, 7
        %v2622 = vsub.s32 1, %v2621
        %v2623 = vrot.slane %v783, %v2622
        %v2624 = vlaneseq
        %v2625 = vshrl.u32 %v2624, 7
        %v2626 = vsub.s32 5, %v2625
        %v2627 = vrot.slane %v783, %v2626
        %v2630 = vlaneseq
        %v2631 = vshrl.u32 %v2630, 7
        %v2632 = vsub.s32 1, %v2631
        %v2633 = vrot.slane %v2623, %v2632
        %v2634 = vlaneseq
        %v2635 = vshrl.u32 %v2634, 7
        %v2636 = vsub.s32 1, %v2635
        %v2637 = vrot.slane %v2627, %v2636
        %v2638 = vmul.f32 %v2633, %v2588
        %v2639 = vmul.f32 %v2637, %v2589
        %v2640 = vmul.f32 %v2633, %v2590
        %v2641 = vmul.f32 %v2637, %v2591
        %v2642 = vmul.f32 %v2633, %v2592
        %v2643 = vmul.f32 %v2637, %v2593
        %v2644 = vmul.f32 %v2633, %v2594
        %v2645 = vmul.f32 %v2637, %v2595
        %v2646 = vadd.f32 %v2616, 1e-06
        %v2647 = vadd.f32 %v2617, 1e-06
        %v2648 = vadd.f32 %v2618, 1e-06
        %v2649 = vadd.f32 %v2619, 1e-06
        %v2650 = vrsqrt.pop %v2646
        %v2651 = vrsqrt.pop %v2647
        %v2652 = vrsqrt.pop %v2648
        %v2653 = vrsqrt.pop %v2649
        %v2654 = vmul.f32 %v2638, %v2650
        %v2655 = vmul.f32 %v2639, %v2650
        %v2656 = vmul.f32 %v2640, %v2651
        %v2657 = vmul.f32 %v2641, %v2651
        %v2658 = vmul.f32 %v2642, %v2652
        %v2659 = vmul.f32 %v2643, %v2652
        %v2660 = vmul.f32 %v2644, %v2653
        %v2661 = vmul.f32 %v2645, %v2653
        %v2662 = vlaneseq
        %v2663 = vshrl.u32 %v2662, 7
        %v2664 = vsub.s32 1, %v2663
        %v2665 = vrot.slane %v784, %v2664
        %v2666 = vlaneseq
        %v2667 = vshrl.u32 %v2666, 7
        %v2668 = vsub.s32 5, %v2667
        %v2669 = vrot.slane %v784, %v2668
        %v2672 = vlaneseq
        %v2673 = vshrl.u32 %v2672, 7
        %v2674 = vsub.s32 1, %v2673
        %v2675 = vrot.slane %v2665, %v2674
        %v2676 = vlaneseq
        %v2677 = vshrl.u32 %v2676, 7
        %v2678 = vsub.s32 1, %v2677
        %v2679 = vrot.slane %v2669, %v2678
        %v2680 = vadd.f32 %v2654, %v2675
        %v2681 = vadd.f32 %v2655, %v2679
        %v2682 = vadd.f32 %v2656, %v2675
        %v2683 = vadd.f32 %v2657, %v2679
        %v2684 = vadd.f32 %v2658, %v2675
        %v2685 = vadd.f32 %v2659, %v2679
        %v2686 = vadd.f32 %v2660, %v2675
        %v2687 = vadd.f32 %v2661, %v2679
        %v2688 = vpack.c.bf16 %v2682, %v2680
        %v2689 = vpack.c.bf16 %v2683, %v2681
        %v2690 = vpack.c.bf16 %v2686, %v2684
        %v2691 = vpack.c.bf16 %v2687, %v2685
        %s2692 = scalar_lea.vmem [#allocation8], 256
        %v2693 = vld [vmem:[%s2692] sm:$0xff]
        %v2694 = vld [vmem:[%s2692 + $0x8] sm:$0xff]
        %v2695 = vld [vmem:[%s2692 + $0x10] sm:$0xff]
        %v2696 = vld [vmem:[%s2692 + $0x18] sm:$0xff]
        %v2697 = vld [vmem:[%s2692 + $0x20] sm:$0xff]
        %v2698 = vld [vmem:[%s2692 + $0x28] sm:$0xff]
        %v2699 = vld [vmem:[%s2692 + $0x30] sm:$0xff]
        %v2700 = vld [vmem:[%s2692 + $0x38] sm:$0xff]
        %v2701 = vld [vmem:[%s2692 + $0x40] sm:$0xff]
        %v2702 = vld [vmem:[%s2692 + $0x48] sm:$0xff]
        %v2703 = vld [vmem:[%s2692 + $0x50] sm:$0xff]
        %v2704 = vld [vmem:[%s2692 + $0x58] sm:$0xff]
        %v2705 = vld [vmem:[%s2692 + $0x60] sm:$0xff]
        %v2706 = vld [vmem:[%s2692 + $0x68] sm:$0xff]
        %v2707 = vld [vmem:[%s2692 + $0x70] sm:$0xff]
        %v2708 = vld [vmem:[%s2692 + $0x78] sm:$0xff]
        %v2709 = vld [vmem:[%s2692 + $0x80] sm:$0xff]
        %v2710 = vld [vmem:[%s2692 + $0x88] sm:$0xff]
        %v2711 = vld [vmem:[%s2692 + $0x90] sm:$0xff]
        %v2712 = vld [vmem:[%s2692 + $0x98] sm:$0xff]
        %v2713 = vld [vmem:[%s2692 + $0xa0] sm:$0xff]
        %v2714 = vld [vmem:[%s2692 + $0xa8] sm:$0xff]
        %v2715 = vld [vmem:[%s2692 + $0xb0] sm:$0xff]
        %v2716 = vld [vmem:[%s2692 + $0xb8] sm:$0xff]
        %v2717 = vld [vmem:[%s2692 + $0xc0] sm:$0xff]
        %v2718 = vld [vmem:[%s2692 + $0xc8] sm:$0xff]
        %v2719 = vld [vmem:[%s2692 + $0xd0] sm:$0xff]
        %v2720 = vld [vmem:[%s2692 + $0xd8] sm:$0xff]
        %v2721 = vld [vmem:[%s2692 + $0xe0] sm:$0xff]
        %v2722 = vld [vmem:[%s2692 + $0xe8] sm:$0xff]
        %v2723 = vld [vmem:[%s2692 + $0xf0] sm:$0xff]
        %v2724 = vld [vmem:[%s2692 + $0xf8] sm:$0xff]
        %v2725 = vlaneseq
        %v2726 = vshrl.u32 %v2725, 7
        %v2727 = vsub.s32 2, %v2726
        %v2728 = vrot.slane %v785, %v2727
        %v2729 = vlaneseq
        %v2730 = vshrl.u32 %v2729, 7
        %v2731 = vsub.s32 2, %v2730
        %v2732 = vrot.slane %v786, %v2731
        %v2765 = vunpack.c.l.b16 %v2693
        %v2766 = vunpack.c.h.b16 %v2693
        %v2767 = vunpack.c.l.b16 %v2694
        %v2768 = vunpack.c.h.b16 %v2694
        %v2769 = vunpack.c.l.b16 %v2695
        %v2770 = vunpack.c.h.b16 %v2695
        %v2771 = vunpack.c.l.b16 %v2696
        %v2772 = vunpack.c.h.b16 %v2696
        %v2773 = vunpack.c.l.b16 %v2697
        %v2774 = vunpack.c.h.b16 %v2697
        %v2775 = vunpack.c.l.b16 %v2698
        %v2776 = vunpack.c.h.b16 %v2698
        %v2777 = vunpack.c.l.b16 %v2699
        %v2778 = vunpack.c.h.b16 %v2699
        %v2779 = vunpack.c.l.b16 %v2700
        %v2780 = vunpack.c.h.b16 %v2700
        %v2781 = vunpack.c.l.b16 %v2701
        %v2782 = vunpack.c.h.b16 %v2701
        %v2783 = vunpack.c.l.b16 %v2702
        %v2784 = vunpack.c.h.b16 %v2702
        %v2785 = vunpack.c.l.b16 %v2703
        %v2786 = vunpack.c.h.b16 %v2703
        %v2787 = vunpack.c.l.b16 %v2704
        %v2788 = vunpack.c.h.b16 %v2704
        %v2789 = vunpack.c.l.b16 %v2705
        %v2790 = vunpack.c.h.b16 %v2705
        %v2791 = vunpack.c.l.b16 %v2706
        %v2792 = vunpack.c.h.b16 %v2706
        %v2793 = vunpack.c.l.b16 %v2707
        %v2794 = vunpack.c.h.b16 %v2707
        %v2795 = vunpack.c.l.b16 %v2708
        %v2796 = vunpack.c.h.b16 %v2708
        %v2797 = vunpack.c.l.b16 %v2709
        %v2798 = vunpack.c.h.b16 %v2709
        %v2799 = vunpack.c.l.b16 %v2710
        %v2800 = vunpack.c.h.b16 %v2710
        %v2801 = vunpack.c.l.b16 %v2711
        %v2802 = vunpack.c.h.b16 %v2711
        %v2803 = vunpack.c.l.b16 %v2712
        %v2804 = vunpack.c.h.b16 %v2712
        %v2805 = vunpack.c.l.b16 %v2713
        %v2806 = vunpack.c.h.b16 %v2713
        %v2807 = vunpack.c.l.b16 %v2714
        %v2808 = vunpack.c.h.b16 %v2714
        %v2809 = vunpack.c.l.b16 %v2715
        %v2810 = vunpack.c.h.b16 %v2715
        %v2811 = vunpack.c.l.b16 %v2716
        %v2812 = vunpack.c.h.b16 %v2716
        %v2813 = vunpack.c.l.b16 %v2717
        %v2814 = vunpack.c.h.b16 %v2717
        %v2815 = vunpack.c.l.b16 %v2718
        %v2816 = vunpack.c.h.b16 %v2718
        %v2817 = vunpack.c.l.b16 %v2719
        %v2818 = vunpack.c.h.b16 %v2719
        %v2819 = vunpack.c.l.b16 %v2720
        %v2820 = vunpack.c.h.b16 %v2720
        %v2821 = vunpack.c.l.b16 %v2721
        %v2822 = vunpack.c.h.b16 %v2721
        %v2823 = vunpack.c.l.b16 %v2722
        %v2824 = vunpack.c.h.b16 %v2722
        %v2825 = vunpack.c.l.b16 %v2723
        %v2826 = vunpack.c.h.b16 %v2723
        %v2827 = vunpack.c.l.b16 %v2724
        %v2828 = vunpack.c.h.b16 %v2724
        %v2829 = vpack.c.b16 %v2767, %v2765
        %v2830 = vpack.c.b16 %v2768, %v2766
        %v2831 = vpack.c.b16 %v2771, %v2769
        %v2832 = vpack.c.b16 %v2772, %v2770
        %v2833 = vpack.c.b16 %v2775, %v2773
        %v2834 = vpack.c.b16 %v2776, %v2774
        %v2835 = vpack.c.b16 %v2779, %v2777
        %v2836 = vpack.c.b16 %v2780, %v2778
        %v2837 = vpack.c.b16 %v2783, %v2781
        %v2838 = vpack.c.b16 %v2784, %v2782
        %v2839 = vpack.c.b16 %v2787, %v2785
        %v2840 = vpack.c.b16 %v2788, %v2786
        %v2841 = vpack.c.b16 %v2791, %v2789
        %v2842 = vpack.c.b16 %v2792, %v2790
        %v2843 = vpack.c.b16 %v2795, %v2793
        %v2844 = vpack.c.b16 %v2796, %v2794
        %v2845 = vpack.c.b16 %v2799, %v2797
        %v2846 = vpack.c.b16 %v2800, %v2798
        %v2847 = vpack.c.b16 %v2803, %v2801
        %v2848 = vpack.c.b16 %v2804, %v2802
        %v2849 = vpack.c.b16 %v2807, %v2805
        %v2850 = vpack.c.b16 %v2808, %v2806
        %v2851 = vpack.c.b16 %v2811, %v2809
        %v2852 = vpack.c.b16 %v2812, %v2810
        %v2853 = vpack.c.b16 %v2815, %v2813
        %v2854 = vpack.c.b16 %v2816, %v2814
        %v2855 = vpack.c.b16 %v2819, %v2817
        %v2856 = vpack.c.b16 %v2820, %v2818
        %v2857 = vpack.c.b16 %v2823, %v2821
        %v2858 = vpack.c.b16 %v2824, %v2822
        %v2859 = vpack.c.b16 %v2827, %v2825
        %v2860 = vpack.c.b16 %v2828, %v2826
        %2893 = vmatprep.subr.bf16.mxu0 %v2830
        %2894 = vmatpush1.bf16.msra.mxu0 %v2829
        %2895 = vmatprep.subr.bf16.mxu0 %v2832
        %2896 = vmatpush1.bf16.msra.mxu0 %v2831
        %2897 = vmatprep.subr.bf16.mxu0 %v2834
        %2898 = vmatpush1.bf16.msra.mxu0 %v2833
        %2899 = vmatprep.subr.bf16.mxu0 %v2836
        %2900 = vmatpush1.bf16.msra.mxu0 %v2835
        %2901 = vmatprep.subr.bf16.mxu0 %v2838
        %2902 = vmatpush1.bf16.msra.mxu0 %v2837
        %2903 = vmatprep.subr.bf16.mxu0 %v2840
        %2904 = vmatpush1.bf16.msra.mxu0 %v2839
        %2905 = vmatprep.subr.bf16.mxu0 %v2842
        %2906 = vmatpush1.bf16.msra.mxu0 %v2841
        %2907 = vmatprep.subr.bf16.mxu0 %v2844
        %2908 = vmatpush1.bf16.msra.mxu0 %v2843
        %2909 = vmatprep.subr.bf16.mxu0 %v2846
        %2910 = vmatpush1.bf16.msra.mxu0 %v2845
        %2911 = vmatprep.subr.bf16.mxu0 %v2848
        %2912 = vmatpush1.bf16.msra.mxu0 %v2847
        %2913 = vmatprep.subr.bf16.mxu0 %v2850
        %2914 = vmatpush1.bf16.msra.mxu0 %v2849
        %2915 = vmatprep.subr.bf16.mxu0 %v2852
        %2916 = vmatpush1.bf16.msra.mxu0 %v2851
        %2917 = vmatprep.subr.bf16.mxu0 %v2854
        %2918 = vmatpush1.bf16.msra.mxu0 %v2853
        %2919 = vmatprep.subr.bf16.mxu0 %v2856
        %2920 = vmatpush1.bf16.msra.mxu0 %v2855
        %2921 = vmatprep.subr.bf16.mxu0 %v2858
        %2922 = vmatpush1.bf16.msra.mxu0 %v2857
        %2923 = vmatprep.subr.bf16.mxu0 %v2860
        %2924 = vmatpush1.bf16.msra.mxu0 %v2859
        %2925 = vmatprep.mubr.bf16.mxu0 %v2689
        %2926 = vmatmul.mubr.bf16.gmra.mrb[0].mxu0 %v2688
        %v2927 = vpop.f32.mrb[0].mxu0
        %v2928 = vadd.f32 %v2728, %v2927
        %v2929 = vpop.f32.mrb[0].mxu0
        %v2930 = vadd.f32 %v2732, %v2929
        %v2931 = vpop.f32.mrb[0].mxu0
        %v2932 = vadd.f32 %v2728, %v2931
        %v2933 = vpop.f32.mrb[0].mxu0
        %v2934 = vadd.f32 %v2732, %v2933
        %2935 = vmatprep.mubr.bf16.mxu0 %v2691
        %2936 = vmatmul.mubr.bf16.gmra.mrb[0].mxu0 %v2690
        %v2937 = vpop.f32.mrb[0].mxu0
        %v2938 = vadd.f32 %v2728, %v2937
        %v2939 = vpop.f32.mrb[0].mxu0
        %v2940 = vadd.f32 %v2732, %v2939
        %v2941 = vpop.f32.mrb[0].mxu0
        %v2942 = vadd.f32 %v2728, %v2941
        %v2943 = vpop.f32.mrb[0].mxu0
        %v2944 = vadd.f32 %v2732, %v2943
        %2945 = vdwg.mxu0
        %v2946 = vpack.c.bf16 %v773, %v771
        %v2947 = vpack.c.bf16 %v774, %v772
        %v2948 = vpack.c.bf16 %v777, %v775
        %v2949 = vpack.c.bf16 %v778, %v776
        %v2950 = vpack.c.bf16 %v781, %v779
        %v2951 = vpack.c.bf16 %v782, %v780
        %s2952 = scalar_lea.vmem [#allocation10], 512
        %v2953 = vld [vmem:[%s2952] sm:$0xff]
        %v2954 = vld [vmem:[%s2952 + $0x8] sm:$0xff]
        %v2955 = vld [vmem:[%s2952 + $0x10] sm:$0xff]
        %v2956 = vld [vmem:[%s2952 + $0x18] sm:$0xff]
        %v2957 = vld [vmem:[%s2952 + $0x20] sm:$0xff]
        %v2958 = vld [vmem:[%s2952 + $0x28] sm:$0xff]
        %v2959 = vld [vmem:[%s2952 + $0x30] sm:$0xff]
        %v2960 = vld [vmem:[%s2952 + $0x38] sm:$0xff]
        %v2961 = vld [vmem:[%s2952 + $0x40] sm:$0xff]
        %v2962 = vld [vmem:[%s2952 + $0x48] sm:$0xff]
        %v2963 = vld [vmem:[%s2952 + $0x50] sm:$0xff]
        %v2964 = vld [vmem:[%s2952 + $0x58] sm:$0xff]
        %v2965 = vld [vmem:[%s2952 + $0x60] sm:$0xff]
        %v2966 = vld [vmem:[%s2952 + $0x68] sm:$0xff]
        %v2967 = vld [vmem:[%s2952 + $0x70] sm:$0xff]
        %v2968 = vld [vmem:[%s2952 + $0x78] sm:$0xff]
        %v2969 = vld [vmem:[%s2952 + $0x80] sm:$0xff]
        %v2970 = vld [vmem:[%s2952 + $0x88] sm:$0xff]
        %v2971 = vld [vmem:[%s2952 + $0x90] sm:$0xff]
        %v2972 = vld [vmem:[%s2952 + $0x98] sm:$0xff]
        %v2973 = vld [vmem:[%s2952 + $0xa0] sm:$0xff]
        %v2974 = vld [vmem:[%s2952 + $0xa8] sm:$0xff]
        %v2975 = vld [vmem:[%s2952 + $0xb0] sm:$0xff]
        %v2976 = vld [vmem:[%s2952 + $0xb8] sm:$0xff]
        %v2977 = vld [vmem:[%s2952 + $0xc0] sm:$0xff]
        %v2978 = vld [vmem:[%s2952 + $0xc8] sm:$0xff]
        %v2979 = vld [vmem:[%s2952 + $0xd0] sm:$0xff]
        %v2980 = vld [vmem:[%s2952 + $0xd8] sm:$0xff]
        %v2981 = vld [vmem:[%s2952 + $0xe0] sm:$0xff]
        %v2982 = vld [vmem:[%s2952 + $0xe8] sm:$0xff]
        %v2983 = vld [vmem:[%s2952 + $0xf0] sm:$0xff]
        %v2984 = vld [vmem:[%s2952 + $0xf8] sm:$0xff]
        %v2985 = vld [vmem:[%s2952 + $0x100] sm:$0xff]
        %v2986 = vld [vmem:[%s2952 + $0x108] sm:$0xff]
        %v2987 = vld [vmem:[%s2952 + $0x110] sm:$0xff]
        %v2988 = vld [vmem:[%s2952 + $0x118] sm:$0xff]
        %v2989 = vld [vmem:[%s2952 + $0x120] sm:$0xff]
        %v2990 = vld [vmem:[%s2952 + $0x128] sm:$0xff]
        %v2991 = vld [vmem:[%s2952 + $0x130] sm:$0xff]
        %v2992 = vld [vmem:[%s2952 + $0x138] sm:$0xff]
        %v2993 = vld [vmem:[%s2952 + $0x140] sm:$0xff]
        %v2994 = vld [vmem:[%s2952 + $0x148] sm:$0xff]
        %v2995 = vld [vmem:[%s2952 + $0x150] sm:$0xff]
        %v2996 = vld [vmem:[%s2952 + $0x158] sm:$0xff]
        %v2997 = vld [vmem:[%s2952 + $0x160] sm:$0xff]
        %v2998 = vld [vmem:[%s2952 + $0x168] sm:$0xff]
        %v2999 = vld [vmem:[%s2952 + $0x170] sm:$0xff]
        %v3000 = vld [vmem:[%s2952 + $0x178] sm:$0xff]
        %v3001 = vld [vmem:[%s2952 + $0x180] sm:$0xff]
        %v3002 = vld [vmem:[%s2952 + $0x188] sm:$0xff]
        %v3003 = vld [vmem:[%s2952 + $0x190] sm:$0xff]
        %v3004 = vld [vmem:[%s2952 + $0x198] sm:$0xff]
        %v3005 = vld [vmem:[%s2952 + $0x1a0] sm:$0xff]
        %v3006 = vld [vmem:[%s2952 + $0x1a8] sm:$0xff]
        %v3007 = vld [vmem:[%s2952 + $0x1b0] sm:$0xff]
        %v3008 = vld [vmem:[%s2952 + $0x1b8] sm:$0xff]
        %v3009 = vld [vmem:[%s2952 + $0x1c0] sm:$0xff]
        %v3010 = vld [vmem:[%s2952 + $0x1c8] sm:$0xff]
        %v3011 = vld [vmem:[%s2952 + $0x1d0] sm:$0xff]
        %v3012 = vld [vmem:[%s2952 + $0x1d8] sm:$0xff]
        %v3013 = vld [vmem:[%s2952 + $0x1e0] sm:$0xff]
        %v3014 = vld [vmem:[%s2952 + $0x1e8] sm:$0xff]
        %v3015 = vld [vmem:[%s2952 + $0x1f0] sm:$0xff]
        %v3016 = vld [vmem:[%s2952 + $0x1f8] sm:$0xff]
        %s3017 = scalar_lea.vmem %s7, 1
        %v3018 = vld [vmem:[%s3017] ss:$2 sm:$0xf]
        %v3020 = vlaneseq
        %v3021 = vshrl.u32 %v3020, 7
        %v3022 = vsub.s32 0, %v3021
        %v3023 = vrot.slane %v3018, %v3022
        %v3024 = vlaneseq
        %v3025 = vshrl.u32 %v3024, 7
        %v3026 = vsub.s32 1, %v3025
        %v3027 = vrot.slane %v3018, %v3026
        %v3028 = vlaneseq
        %v3029 = vshrl.u32 %v3028, 7
        %v3030 = vsub.s32 2, %v3029
        %v3031 = vrot.slane %v3018, %v3030
        %v3032 = vlaneseq
        %v3033 = vshrl.u32 %v3032, 7
        %v3034 = vsub.s32 3, %v3033
        %v3035 = vrot.slane %v3018, %v3034
        %v3104 = vunpack.c.l.b16 %v2953
        %v3105 = vunpack.c.h.b16 %v2953
        %v3106 = vunpack.c.l.b16 %v2954
        %v3107 = vunpack.c.h.b16 %v2954
        %v3108 = vunpack.c.l.b16 %v2955
        %v3109 = vunpack.c.h.b16 %v2955
        %v3110 = vunpack.c.l.b16 %v2956
        %v3111 = vunpack.c.h.b16 %v2956
        %v3112 = vunpack.c.l.b16 %v2957
        %v3113 = vunpack.c.h.b16 %v2957
        %v3114 = vunpack.c.l.b16 %v2958
        %v3115 = vunpack.c.h.b16 %v2958
        %v3116 = vunpack.c.l.b16 %v2959
        %v3117 = vunpack.c.h.b16 %v2959
        %v3118 = vunpack.c.l.b16 %v2960
        %v3119 = vunpack.c.h.b16 %v2960
        %v3120 = vunpack.c.l.b16 %v2961
        %v3121 = vunpack.c.h.b16 %v2961
        %v3122 = vunpack.c.l.b16 %v2962
        %v3123 = vunpack.c.h.b16 %v2962
        %v3124 = vunpack.c.l.b16 %v2963
        %v3125 = vunpack.c.h.b16 %v2963
        %v3126 = vunpack.c.l.b16 %v2964
        %v3127 = vunpack.c.h.b16 %v2964
        %v3128 = vunpack.c.l.b16 %v2965
        %v3129 = vunpack.c.h.b16 %v2965
        %v3130 = vunpack.c.l.b16 %v2966
        %v3131 = vunpack.c.h.b16 %v2966
        %v3132 = vunpack.c.l.b16 %v2967
        %v3133 = vunpack.c.h.b16 %v2967
        %v3134 = vunpack.c.l.b16 %v2968
        %v3135 = vunpack.c.h.b16 %v2968
        %v3136 = vunpack.c.l.b16 %v2969
        %v3137 = vunpack.c.h.b16 %v2969
        %v3138 = vunpack.c.l.b16 %v2970
        %v3139 = vunpack.c.h.b16 %v2970
        %v3140 = vunpack.c.l.b16 %v2971
        %v3141 = vunpack.c.h.b16 %v2971
        %v3142 = vunpack.c.l.b16 %v2972
        %v3143 = vunpack.c.h.b16 %v2972
        %v3144 = vunpack.c.l.b16 %v2973
        %v3145 = vunpack.c.h.b16 %v2973
        %v3146 = vunpack.c.l.b16 %v2974
        %v3147 = vunpack.c.h.b16 %v2974
        %v3148 = vunpack.c.l.b16 %v2975
        %v3149 = vunpack.c.h.b16 %v2975
        %v3150 = vunpack.c.l.b16 %v2976
        %v3151 = vunpack.c.h.b16 %v2976
        %v3152 = vunpack.c.l.b16 %v2977
        %v3153 = vunpack.c.h.b16 %v2977
        %v3154 = vunpack.c.l.b16 %v2978
        %v3155 = vunpack.c.h.b16 %v2978
        %v3156 = vunpack.c.l.b16 %v2979
        %v3157 = vunpack.c.h.b16 %v2979
        %v3158 = vunpack.c.l.b16 %v2980
        %v3159 = vunpack.c.h.b16 %v2980
        %v3160 = vunpack.c.l.b16 %v2981
        %v3161 = vunpack.c.h.b16 %v2981
        %v3162 = vunpack.c.l.b16 %v2982
        %v3163 = vunpack.c.h.b16 %v2982
        %v3164 = vunpack.c.l.b16 %v2983
        %v3165 = vunpack.c.h.b16 %v2983
        %v3166 = vunpack.c.l.b16 %v2984
        %v3167 = vunpack.c.h.b16 %v2984
        %v3168 = vunpack.c.l.b16 %v2985
        %v3169 = vunpack.c.h.b16 %v2985
        %v3170 = vunpack.c.l.b16 %v2986
        %v3171 = vunpack.c.h.b16 %v2986
        %v3172 = vunpack.c.l.b16 %v2987
        %v3173 = vunpack.c.h.b16 %v2987
        %v3174 = vunpack.c.l.b16 %v2988
        %v3175 = vunpack.c.h.b16 %v2988
        %v3176 = vunpack.c.l.b16 %v2989
        %v3177 = vunpack.c.h.b16 %v2989
        %v3178 = vunpack.c.l.b16 %v2990
        %v3179 = vunpack.c.h.b16 %v2990
        %v3180 = vunpack.c.l.b16 %v2991
        %v3181 = vunpack.c.h.b16 %v2991
        %v3182 = vunpack.c.l.b16 %v2992
        %v3183 = vunpack.c.h.b16 %v2992
        %v3184 = vunpack.c.l.b16 %v2993
        %v3185 = vunpack.c.h.b16 %v2993
        %v3186 = vunpack.c.l.b16 %v2994
        %v3187 = vunpack.c.h.b16 %v2994
        %v3188 = vunpack.c.l.b16 %v2995
        %v3189 = vunpack.c.h.b16 %v2995
        %v3190 = vunpack.c.l.b16 %v2996
        %v3191 = vunpack.c.h.b16 %v2996
        %v3192 = vunpack.c.l.b16 %v2997
        %v3193 = vunpack.c.h.b16 %v2997
        %v3194 = vunpack.c.l.b16 %v2998
        %v3195 = vunpack.c.h.b16 %v2998
        %v3196 = vunpack.c.l.b16 %v2999
        %v3197 = vunpack.c.h.b16 %v2999
        %v3198 = vunpack.c.l.b16 %v3000
        %v3199 = vunpack.c.h.b16 %v3000
        %v3200 = vunpack.c.l.b16 %v3001
        %v3201 = vunpack.c.h.b16 %v3001
        %v3202 = vunpack.c.l.b16 %v3002
        %v3203 = vunpack.c.h.b16 %v3002
        %v3204 = vunpack.c.l.b16 %v3003
        %v3205 = vunpack.c.h.b16 %v3003
        %v3206 = vunpack.c.l.b16 %v3004
        %v3207 = vunpack.c.h.b16 %v3004
        %v3208 = vunpack.c.l.b16 %v3005
        %v3209 = vunpack.c.h.b16 %v3005
        %v3210 = vunpack.c.l.b16 %v3006
        %v3211 = vunpack.c.h.b16 %v3006
        %v3212 = vunpack.c.l.b16 %v3007
        %v3213 = vunpack.c.h.b16 %v3007
        %v3214 = vunpack.c.l.b16 %v3008
        %v3215 = vunpack.c.h.b16 %v3008
        %v3216 = vunpack.c.l.b16 %v3009
        %v3217 = vunpack.c.h.b16 %v3009
        %v3218 = vunpack.c.l.b16 %v3010
        %v3219 = vunpack.c.h.b16 %v3010
        %v3220 = vunpack.c.l.b16 %v3011
        %v3221 = vunpack.c.h.b16 %v3011
        %v3222 = vunpack.c.l.b16 %v3012
        %v3223 = vunpack.c.h.b16 %v3012
        %v3224 = vunpack.c.l.b16 %v3013
        %v3225 = vunpack.c.h.b16 %v3013
        %v3226 = vunpack.c.l.b16 %v3014
        %v3227 = vunpack.c.h.b16 %v3014
        %v3228 = vunpack.c.l.b16 %v3015
        %v3229 = vunpack.c.h.b16 %v3015
        %v3230 = vunpack.c.l.b16 %v3016
        %v3231 = vunpack.c.h.b16 %v3016
        %v3232 = vpack.c.b16 %v3108, %v3104
        %v3233 = vpack.c.b16 %v3109, %v3105
        %v3234 = vpack.c.b16 %v3110, %v3106
        %v3235 = vpack.c.b16 %v3111, %v3107
        %v3236 = vpack.c.b16 %v3116, %v3112
        %v3237 = vpack.c.b16 %v3117, %v3113
        %v3238 = vpack.c.b16 %v3118, %v3114
        %v3239 = vpack.c.b16 %v3119, %v3115
        %v3240 = vpack.c.b16 %v3124, %v3120
        %v3241 = vpack.c.b16 %v3125, %v3121
        %v3242 = vpack.c.b16 %v3126, %v3122
        %v3243 = vpack.c.b16 %v3127, %v3123
        %v3244 = vpack.c.b16 %v3132, %v3128
        %v3245 = vpack.c.b16 %v3133, %v3129
        %v3246 = vpack.c.b16 %v3134, %v3130
        %v3247 = vpack.c.b16 %v3135, %v3131
        %v3248 = vpack.c.b16 %v3140, %v3136
        %v3249 = vpack.c.b16 %v3141, %v3137
        %v3250 = vpack.c.b16 %v3142, %v3138
        %v3251 = vpack.c.b16 %v3143, %v3139
        %v3252 = vpack.c.b16 %v3148, %v3144
        %v3253 = vpack.c.b16 %v3149, %v3145
        %v3254 = vpack.c.b16 %v3150, %v3146
        %v3255 = vpack.c.b16 %v3151, %v3147
        %v3256 = vpack.c.b16 %v3156, %v3152
        %v3257 = vpack.c.b16 %v3157, %v3153
        %v3258 = vpack.c.b16 %v3158, %v3154
        %v3259 = vpack.c.b16 %v3159, %v3155
        %v3260 = vpack.c.b16 %v3164, %v3160
        %v3261 = vpack.c.b16 %v3165, %v3161
        %v3262 = vpack.c.b16 %v3166, %v3162
        %v3263 = vpack.c.b16 %v3167, %v3163
        %v3264 = vpack.c.b16 %v3172, %v3168
        %v3265 = vpack.c.b16 %v3173, %v3169
        %v3266 = vpack.c.b16 %v3174, %v3170
        %v3267 = vpack.c.b16 %v3175, %v3171
        %v3268 = vpack.c.b16 %v3180, %v3176
        %v3269 = vpack.c.b16 %v3181, %v3177
        %v3270 = vpack.c.b16 %v3182, %v3178
        %v3271 = vpack.c.b16 %v3183, %v3179
        %v3272 = vpack.c.b16 %v3188, %v3184
        %v3273 = vpack.c.b16 %v3189, %v3185
        %v3274 = vpack.c.b16 %v3190, %v3186
        %v3275 = vpack.c.b16 %v3191, %v3187
        %v3276 = vpack.c.b16 %v3196, %v3192
        %v3277 = vpack.c.b16 %v3197, %v3193
        %v3278 = vpack.c.b16 %v3198, %v3194
        %v3279 = vpack.c.b16 %v3199, %v3195
        %v3280 = vpack.c.b16 %v3204, %v3200
        %v3281 = vpack.c.b16 %v3205, %v3201
        %v3282 = vpack.c.b16 %v3206, %v3202
        %v3283 = vpack.c.b16 %v3207, %v3203
        %v3284 = vpack.c.b16 %v3212, %v3208
        %v3285 = vpack.c.b16 %v3213, %v3209
        %v3286 = vpack.c.b16 %v3214, %v3210
        %v3287 = vpack.c.b16 %v3215, %v3211
        %v3288 = vpack.c.b16 %v3220, %v3216
        %v3289 = vpack.c.b16 %v3221, %v3217
        %v3290 = vpack.c.b16 %v3222, %v3218
        %v3291 = vpack.c.b16 %v3223, %v3219
        %v3292 = vpack.c.b16 %v3228, %v3224
        %v3293 = vpack.c.b16 %v3229, %v3225
        %v3294 = vpack.c.b16 %v3230, %v3226
        %v3295 = vpack.c.b16 %v3231, %v3227
        %3360 = vmatprep.subr.bf16.mxu0 %v3233
        %3361 = vmatpush1.bf16.msra.mxu0 %v3232
        %3362 = vmatprep.subr.bf16.mxu0 %v3237
        %3363 = vmatpush1.bf16.msra.mxu0 %v3236
        %3364 = vmatprep.subr.bf16.mxu0 %v3241
        %3365 = vmatpush1.bf16.msra.mxu0 %v3240
        %3366 = vmatprep.subr.bf16.mxu0 %v3245
        %3367 = vmatpush1.bf16.msra.mxu0 %v3244
        %3368 = vmatprep.subr.bf16.mxu0 %v3249
        %3369 = vmatpush1.bf16.msra.mxu0 %v3248
        %3370 = vmatprep.subr.bf16.mxu0 %v3253
        %3371 = vmatpush1.bf16.msra.mxu0 %v3252
        %3372 = vmatprep.subr.bf16.mxu0 %v3257
        %3373 = vmatpush1.bf16.msra.mxu0 %v3256
        %3374 = vmatprep.subr.bf16.mxu0 %v3261
        %3375 = vmatpush1.bf16.msra.mxu0 %v3260
        %3376 = vmatprep.subr.bf16.mxu0 %v3265
        %3377 = vmatpush1.bf16.msra.mxu0 %v3264
        %3378 = vmatprep.subr.bf16.mxu0 %v3269
        %3379 = vmatpush1.bf16.msra.mxu0 %v3268
        %3380 = vmatprep.subr.bf16.mxu0 %v3273
        %3381 = vmatpush1.bf16.msra.mxu0 %v3272
        %3382 = vmatprep.subr.bf16.mxu0 %v3277
        %3383 = vmatpush1.bf16.msra.mxu0 %v3276
        %3384 = vmatprep.subr.bf16.mxu0 %v3281
        %3385 = vmatpush1.bf16.msra.mxu0 %v3280
        %3386 = vmatprep.subr.bf16.mxu0 %v3285
        %3387 = vmatpush1.bf16.msra.mxu0 %v3284
        %3388 = vmatprep.subr.bf16.mxu0 %v3289
        %3389 = vmatpush1.bf16.msra.mxu0 %v3288
        %3390 = vmatprep.subr.bf16.mxu0 %v3293
        %3391 = vmatpush1.bf16.msra.mxu0 %v3292
        %3392 = vmatprep.mubr.bf16.mxu0 %v2947
        %3393 = vmatmul.mubr.bf16.gmra.mrb[0].mxu0 %v2946
        %v3394 = vpop.f32.mrb[0].mxu0
        %v3395 = vadd.f32 %v3023, %v3394
        %v3396 = vpop.f32.mrb[0].mxu0
        %v3397 = vadd.f32 %v3027, %v3396
        %v3398 = vpop.f32.mrb[0].mxu0
        %v3399 = vadd.f32 %v3023, %v3398
        %v3400 = vpop.f32.mrb[0].mxu0
        %v3401 = vadd.f32 %v3027, %v3400
        %3402 = vmatprep.mubr.bf16.mxu0 %v2949
        %3403 = vmatmul.mubr.bf16.gmra.mrb[0].mxu0 %v2948
        %v3404 = vpop.f32.mrb[0].mxu0
        %v3405 = vadd.f32 %v3023, %v3404
        %v3406 = vpop.f32.mrb[0].mxu0
        %v3407 = vadd.f32 %v3027, %v3406
        %v3408 = vpop.f32.mrb[0].mxu0
        %v3409 = vadd.f32 %v3023, %v3408
        %v3410 = vpop.f32.mrb[0].mxu0
        %v3411 = vadd.f32 %v3027, %v3410
        %3412 = vmatprep.mubr.bf16.mxu0 %v2951
        %3413 = vmatmul.mubr.bf16.gmra.mrb[0].mxu0 %v2950
        %v3414 = vpop.f32.mrb[0].mxu0
        %v3415 = vadd.f32 %v3023, %v3414
        %v3416 = vpop.f32.mrb[0].mxu0
        %v3417 = vadd.f32 %v3027, %v3416
        %v3418 = vpop.f32.mrb[0].mxu0
        %v3419 = vadd.f32 %v3023, %v3418
        %v3420 = vpop.f32.mrb[0].mxu0
        %v3421 = vadd.f32 %v3027, %v3420
        %3422 = vdwg.mxu0
        %3423 = vmatprep.subr.bf16.mxu0 %v3235
        %3424 = vmatpush1.bf16.msra.mxu0 %v3234
        %3425 = vmatprep.subr.bf16.mxu0 %v3239
        %3426 = vmatpush1.bf16.msra.mxu0 %v3238
        %3427 = vmatprep.subr.bf16.mxu0 %v3243
        %3428 = vmatpush1.bf16.msra.mxu0 %v3242
        %3429 = vmatprep.subr.bf16.mxu0 %v3247
        %3430 = vmatpush1.bf16.msra.mxu0 %v3246
        %3431 = vmatprep.subr.bf16.mxu0 %v3251
        %3432 = vmatpush1.bf16.msra.mxu0 %v3250
        %3433 = vmatprep.subr.bf16.mxu0 %v3255
        %3434 = vmatpush1.bf16.msra.mxu0 %v3254
        %3435 = vmatprep.subr.bf16.mxu0 %v3259
        %3436 = vmatpush1.bf16.msra.mxu0 %v3258
        %3437 = vmatprep.subr.bf16.mxu0 %v3263
        %3438 = vmatpush1.bf16.msra.mxu0 %v3262
        %3439 = vmatprep.subr.bf16.mxu0 %v3267
        %3440 = vmatpush1.bf16.msra.mxu0 %v3266
        %3441 = vmatprep.subr.bf16.mxu0 %v3271
        %3442 = vmatpush1.bf16.msra.mxu0 %v3270
        %3443 = vmatprep.subr.bf16.mxu0 %v3275
        %3444 = vmatpush1.bf16.msra.mxu0 %v3274
        %3445 = vmatprep.subr.bf16.mxu0 %v3279
        %3446 = vmatpush1.bf16.msra.mxu0 %v3278
        %3447 = vmatprep.subr.bf16.mxu0 %v3283
        %3448 = vmatpush1.bf16.msra.mxu0 %v3282
        %3449 = vmatprep.subr.bf16.mxu0 %v3287
        %3450 = vmatpush1.bf16.msra.mxu0 %v3286
        %3451 = vmatprep.subr.bf16.mxu0 %v3291
        %3452 = vmatpush1.bf16.msra.mxu0 %v3290
        %3453 = vmatprep.subr.bf16.mxu0 %v3295
        %3454 = vmatpush1.bf16.msra.mxu0 %v3294
        %3455 = vmatprep.mubr.bf16.mxu0 %v2947
        %3456 = vmatmul.mubr.bf16.gmra.mrb[0].mxu0 %v2946
        %v3457 = vpop.f32.mrb[0].mxu0
        %v3458 = vadd.f32 %v3031, %v3457
        %v3459 = vpop.f32.mrb[0].mxu0
        %v3460 = vadd.f32 %v3035, %v3459
        %v3461 = vpop.f32.mrb[0].mxu0
        %v3462 = vadd.f32 %v3031, %v3461
        %v3463 = vpop.f32.mrb[0].mxu0
        %v3464 = vadd.f32 %v3035, %v3463
        %3465 = vmatprep.mubr.bf16.mxu0 %v2949
        %3466 = vmatmul.mubr.bf16.gmra.mrb[0].mxu0 %v2948
        %v3467 = vpop.f32.mrb[0].mxu0
        %v3468 = vadd.f32 %v3031, %v3467
        %v3469 = vpop.f32.mrb[0].mxu0
        %v3470 = vadd.f32 %v3035, %v3469
        %v3471 = vpop.f32.mrb[0].mxu0
        %v3472 = vadd.f32 %v3031, %v3471
        %v3473 = vpop.f32.mrb[0].mxu0
        %v3474 = vadd.f32 %v3035, %v3473
        %3475 = vmatprep.mubr.bf16.mxu0 %v2951
        %3476 = vmatmul.mubr.bf16.gmra.mrb[0].mxu0 %v2950
        %v3477 = vpop.f32.mrb[0].mxu0
        %v3478 = vadd.f32 %v3031, %v3477
        %v3479 = vpop.f32.mrb[0].mxu0
        %v3480 = vadd.f32 %v3035, %v3479
        %v3481 = vpop.f32.mrb[0].mxu0
        %v3482 = vadd.f32 %v3031, %v3481
        %v3483 = vpop.f32.mrb[0].mxu0
        %v3484 = vadd.f32 %v3035, %v3483
        %3485 = vdwg.mxu0
        %v3486 = vpack.c.bf16 %v2932, %v2928
        %v3487 = vpack.c.bf16 %v2942, %v2938
        %v3488 = vpack.c.bf16 %v2934, %v2930
        %v3489 = vpack.c.bf16 %v2944, %v2940
        %v3490 = vpack.c.bf16 %v3399, %v3395
        %v3491 = vpack.c.bf16 %v3409, %v3405
        %v3492 = vpack.c.bf16 %v3419, %v3415
        %v3493 = vpack.c.bf16 %v3401, %v3397
        %v3494 = vpack.c.bf16 %v3411, %v3407
        %v3495 = vpack.c.bf16 %v3421, %v3417
        %v3496 = vpack.c.bf16 %v3462, %v3458
        %v3497 = vpack.c.bf16 %v3472, %v3468
        %v3498 = vpack.c.bf16 %v3482, %v3478
        %v3499 = vpack.c.bf16 %v3464, %v3460
        %v3500 = vpack.c.bf16 %v3474, %v3470
        %v3501 = vpack.c.bf16 %v3484, %v3480
        %3502 = vmatprep.subr.bf16.mxu0 0
        %3503 = vmatpush1.bf16.xpose.msra.mxu0 %v3490
        %3504 = vmatprep.subr.bf16.mxu0 0
        %3505 = vmatpush1.bf16.xpose.msra.mxu0 %v3491
        %3506 = vmatprep.subr.bf16.mxu0 0
        %3507 = vmatpush1.bf16.xpose.msra.mxu0 %v3492
        %3508 = vmatprep.subr.bf16.mxu0 0
        %3509 = vmatpush1.bf16.xpose.msra.mxu0 0
        %3510 = vmatprep.subr.bf16.mxu0 0
        %3511 = vmatpush1.bf16.xpose.msra.mxu0 0
        %3512 = vmatprep.subr.bf16.mxu0 0
        %3513 = vmatpush1.bf16.xpose.msra.mxu0 0
        %3514 = vmatprep.subr.bf16.mxu0 0
        %3515 = vmatpush1.bf16.xpose.msra.mxu0 0
        %3516 = vmatprep.subr.bf16.mxu0 0
        %3517 = vmatpush1.bf16.xpose.msra.mxu0 0
        %3518 = vmatprep.subr.bf16.mxu0 0
        %3519 = vmatpush1.bf16.xpose.msra.mxu0 0
        %3520 = vmatprep.subr.bf16.mxu0 0
        %3521 = vmatpush1.bf16.xpose.msra.mxu0 0
        %3522 = vmatprep.subr.bf16.mxu0 0
        %3523 = vmatpush1.bf16.xpose.msra.mxu0 0
        %3524 = vmatprep.subr.bf16.mxu0 0
        %3525 = vmatpush1.bf16.xpose.msra.mxu0 0
        %3526 = vmatprep.subr.bf16.mxu0 0
        %3527 = vmatpush1.bf16.xpose.msra.mxu0 0
        %3528 = vmatprep.subr.bf16.mxu0 0
        %3529 = vmatpush1.bf16.xpose.msra.mxu0 0
        %3530 = vmatprep.subr.bf16.mxu0 0
        %3531 = vmatpush1.bf16.xpose.msra.mxu0 0
        %3532 = vmatprep.subr.bf16.mxu0 0
        %3533 = vmatpush1.bf16.xpose.msra.mxu0 0
        %3534 = vmatprep.mubr.bf16.mxu0 0
        %3535 = vmatmul.mubr.bf16.gmra.mrb[0].mxu0 %v3486
        %v3536 = vpop.f32.mrb[0].mxu0
        %v3537 = vadd.f32 %v817, %v3536
        %v3538 = vpop.f32.mrb[0].mxu0
        %v3539 = vpop.f32.mrb[0].mxu0
        %v3540 = vadd.f32 %v818, %v3539
        %v3541 = vpop.f32.mrb[0].mxu0
        %3542 = vmatprep.mubr.bf16.mxu0 0
        %3543 = vmatmul.mubr.bf16.gmra.mrb[0].mxu0 %v3487
        %v3544 = vpop.f32.mrb[0].mxu0
        %v3545 = vadd.f32 %v819, %v3544
        %v3546 = vpop.f32.mrb[0].mxu0
        %v3547 = vpop.f32.mrb[0].mxu0
        %v3548 = vadd.f32 %v820, %v3547
        %v3549 = vpop.f32.mrb[0].mxu0
        %3550 = vdwg.mxu0
        %3551 = vmatprep.subr.bf16.mxu0 0
        %3552 = vmatpush1.bf16.xpose.msra.mxu0 %v3493
        %3553 = vmatprep.subr.bf16.mxu0 0
        %3554 = vmatpush1.bf16.xpose.msra.mxu0 %v3494
        %3555 = vmatprep.subr.bf16.mxu0 0
        %3556 = vmatpush1.bf16.xpose.msra.mxu0 %v3495
        %3557 = vmatprep.subr.bf16.mxu0 0
        %3558 = vmatpush1.bf16.xpose.msra.mxu0 0
        %3559 = vmatprep.subr.bf16.mxu0 0
        %3560 = vmatpush1.bf16.xpose.msra.mxu0 0
        %3561 = vmatprep.subr.bf16.mxu0 0
        %3562 = vmatpush1.bf16.xpose.msra.mxu0 0
        %3563 = vmatprep.subr.bf16.mxu0 0
        %3564 = vmatpush1.bf16.xpose.msra.mxu0 0
        %3565 = vmatprep.subr.bf16.mxu0 0
        %3566 = vmatpush1.bf16.xpose.msra.mxu0 0
        %3567 = vmatprep.subr.bf16.mxu0 0
        %3568 = vmatpush1.bf16.xpose.msra.mxu0 0
        %3569 = vmatprep.subr.bf16.mxu0 0
        %3570 = vmatpush1.bf16.xpose.msra.mxu0 0
        %3571 = vmatprep.subr.bf16.mxu0 0
        %3572 = vmatpush1.bf16.xpose.msra.mxu0 0
        %3573 = vmatprep.subr.bf16.mxu0 0
        %3574 = vmatpush1.bf16.xpose.msra.mxu0 0
        %3575 = vmatprep.subr.bf16.mxu0 0
        %3576 = vmatpush1.bf16.xpose.msra.mxu0 0
        %3577 = vmatprep.subr.bf16.mxu0 0
        %3578 = vmatpush1.bf16.xpose.msra.mxu0 0
        %3579 = vmatprep.subr.bf16.mxu0 0
        %3580 = vmatpush1.bf16.xpose.msra.mxu0 0
        %3581 = vmatprep.subr.bf16.mxu0 0
        %3582 = vmatpush1.bf16.xpose.msra.mxu0 0
        %3583 = vmatprep.mubr.bf16.mxu0 0
        %3584 = vmatmul.mubr.bf16.gmra.mrb[0].mxu0 %v3488
        %v3585 = vpop.f32.mrb[0].mxu0
        %v3586 = vadd.f32 %v817, %v3585
        %v3587 = vpop.f32.mrb[0].mxu0
        %v3588 = vpop.f32.mrb[0].mxu0
        %v3589 = vadd.f32 %v818, %v3588
        %v3590 = vpop.f32.mrb[0].mxu0
        %3591 = vmatprep.mubr.bf16.mxu0 0
        %3592 = vmatmul.mubr.bf16.gmra.mrb[0].mxu0 %v3489
        %v3593 = vpop.f32.mrb[0].mxu0
        %v3594 = vadd.f32 %v819, %v3593
        %v3595 = vpop.f32.mrb[0].mxu0
        %v3596 = vpop.f32.mrb[0].mxu0
        %v3597 = vadd.f32 %v820, %v3596
        %v3598 = vpop.f32.mrb[0].mxu0
        %3599 = vdwg.mxu0
        %vm3600 = vcmask 392192
        %v3601 = vsel %vm3600, %v3537, -inf
        %3602 = vmax.xlane.f32.xlu0 %v3601
        %v3603 = vpop.xlane.xlu0 %3602
        %v3604 = vsel %vm3600, %v3540, -inf
        %3605 = vmax.xlane.f32.xlu0 %v3604
        %v3606 = vpop.xlane.xlu0 %3605
        %v3607 = vsel %vm3600, %v3545, -inf
        %3608 = vmax.xlane.f32.xlu0 %v3607
        %v3609 = vpop.xlane.xlu0 %3608
        %v3610 = vsel %vm3600, %v3548, -inf
        %3611 = vmax.xlane.f32.xlu0 %v3610
        %v3612 = vpop.xlane.xlu0 %3611
        %v3613 = vsel %vm3600, %v3586, -inf
        %3614 = vmax.xlane.f32.xlu0 %v3613
        %v3615 = vpop.xlane.xlu0 %3614
        %v3616 = vsel %vm3600, %v3589, -inf
        %3617 = vmax.xlane.f32.xlu0 %v3616
        %v3618 = vpop.xlane.xlu0 %3617
        %v3619 = vsel %vm3600, %v3594, -inf
        %3620 = vmax.xlane.f32.xlu0 %v3619
        %v3621 = vpop.xlane.xlu0 %3620
        %v3622 = vsel %vm3600, %v3597, -inf
        %3623 = vmax.xlane.f32.xlu0 %v3622
        %v3624 = vpop.xlane.xlu0 %3623
        %v3625 = vsub.f32 %v3537, %v3603
        %v3626 = vsub.f32 %v3540, %v3606
        %v3627 = vsub.f32 %v3545, %v3609
        %v3628 = vsub.f32 %v3548, %v3612
        %v3629 = vsub.f32 %v3586, %v3615
        %v3630 = vsub.f32 %v3589, %v3618
        %v3631 = vsub.f32 %v3594, %v3621
        %v3632 = vsub.f32 %v3597, %v3624
        %v3633 = vmul.f32 %v3625, 1.442695
        %v3634 = vpow.pop %v3633
        %v3635 = vmul.f32 %v3626, 1.442695
        %v3636 = vpow.pop %v3635
        %v3637 = vmul.f32 %v3627, 1.442695
        %v3638 = vpow.pop %v3637
        %v3639 = vmul.f32 %v3628, 1.442695
        %v3640 = vpow.pop %v3639
        %v3641 = vmul.f32 %v3629, 1.442695
        %v3642 = vpow.pop %v3641
        %v3643 = vmul.f32 %v3630, 1.442695
        %v3644 = vpow.pop %v3643
        %v3645 = vmul.f32 %v3631, 1.442695
        %v3646 = vpow.pop %v3645
        %v3647 = vmul.f32 %v3632, 1.442695
        %v3648 = vpow.pop %v3647
        %v3649 = vsel %vm3600, %v3634, 0.0
        %3650 = vadd.xlane.f32.xlu0 %v3649
        %v3651 = vpop.xlane.xlu0 %3650
        %v3652 = vsel %vm3600, %v3636, 0.0
        %3653 = vadd.xlane.f32.xlu0 %v3652
        %v3654 = vpop.xlane.xlu0 %3653
        %v3655 = vsel %vm3600, %v3638, 0.0
        %3656 = vadd.xlane.f32.xlu0 %v3655
        %v3657 = vpop.xlane.xlu0 %3656
        %v3658 = vsel %vm3600, %v3640, 0.0
        %3659 = vadd.xlane.f32.xlu0 %v3658
        %v3660 = vpop.xlane.xlu0 %3659
        %v3661 = vsel %vm3600, %v3642, 0.0
        %3662 = vadd.xlane.f32.xlu0 %v3661
        %v3663 = vpop.xlane.xlu0 %3662
        %v3664 = vsel %vm3600, %v3644, 0.0
        %3665 = vadd.xlane.f32.xlu0 %v3664
        %v3666 = vpop.xlane.xlu0 %3665
        %v3667 = vsel %vm3600, %v3646, 0.0
        %3668 = vadd.xlane.f32.xlu0 %v3667
        %v3669 = vpop.xlane.xlu0 %3668
        %v3670 = vsel %vm3600, %v3648, 0.0
        %3671 = vadd.xlane.f32.xlu0 %v3670
        %v3672 = vpop.xlane.xlu0 %3671
        %v3673 = vrcp.pop %v3651
        %v3674 = vrcp.pop %v3654
        %v3675 = vrcp.pop %v3657
        %v3676 = vrcp.pop %v3660
        %v3677 = vrcp.pop %v3663
        %v3678 = vrcp.pop %v3666
        %v3679 = vrcp.pop %v3669
        %v3680 = vrcp.pop %v3672
        %v3681 = vmul.f32 %v3634, %v3673
        %v3682 = vmul.f32 %v3636, %v3674
        %v3683 = vmul.f32 %v3638, %v3675
        %v3684 = vmul.f32 %v3640, %v3676
        %v3685 = vmul.f32 %v3642, %v3677
        %v3686 = vmul.f32 %v3644, %v3678
        %v3687 = vmul.f32 %v3646, %v3679
        %v3688 = vmul.f32 %v3648, %v3680
        %v3689 = vpack.c.bf16 %v3682, %v3681
        %v3690 = vpack.c.bf16 %v3684, %v3683
        %v3691 = vpack.c.bf16 %v3686, %v3685
        %v3692 = vpack.c.bf16 %v3688, %v3687
        %v3694 = vsel %vm3600, %v3689, 0
        %v3697 = vsel %vm3600, %v3690, 0
        %3699 = vmatprep.subr.bf16.mxu0 0
        %3700 = vmatpush1.bf16.msra.mxu0 %v3496
        %3701 = vmatprep.subr.bf16.mxu0 0
        %3702 = vmatpush1.bf16.msra.mxu0 %v3497
        %3703 = vmatprep.subr.bf16.mxu0 0
        %3704 = vmatpush1.bf16.msra.mxu0 %v3498
        %3705 = vmatprep.subr.bf16.mxu0 0
        %3706 = vmatpush1.bf16.msra.mxu0 0
        %3707 = vmatprep.subr.bf16.mxu0 0
        %3708 = vmatpush1.bf16.msra.mxu0 0
        %3709 = vmatprep.subr.bf16.mxu0 0
        %3710 = vmatpush1.bf16.msra.mxu0 0
        %3711 = vmatprep.subr.bf16.mxu0 0
        %3712 = vmatpush1.bf16.msra.mxu0 0
        %3713 = vmatprep.subr.bf16.mxu0 0
        %3714 = vmatpush1.bf16.msra.mxu0 0
        %3715 = vmatprep.subr.bf16.mxu0 0
        %3716 = vmatpush1.bf16.msra.mxu0 0
        %3717 = vmatprep.subr.bf16.mxu0 0
        %3718 = vmatpush1.bf16.msra.mxu0 0
        %3719 = vmatprep.subr.bf16.mxu0 0
        %3720 = vmatpush1.bf16.msra.mxu0 0
        %3721 = vmatprep.subr.bf16.mxu0 0
        %3722 = vmatpush1.bf16.msra.mxu0 0
        %3723 = vmatprep.subr.bf16.mxu0 0
        %3724 = vmatpush1.bf16.msra.mxu0 0
        %3725 = vmatprep.subr.bf16.mxu0 0
        %3726 = vmatpush1.bf16.msra.mxu0 0
        %3727 = vmatprep.subr.bf16.mxu0 0
        %3728 = vmatpush1.bf16.msra.mxu0 0
        %3729 = vmatprep.subr.bf16.mxu0 0
        %3730 = vmatpush1.bf16.msra.mxu0 0
        %3731 = vmatprep.mubr.bf16.mxu0 0
        %3732 = vmatmul.mubr.bf16.gmra.mrb[0].mxu0 %v3694
        %v3733 = vpop.f32.mrb[0].mxu0
        %v3734 = vadd.f32 0.0, %v3733
        %v3735 = vpop.f32.mrb[0].mxu0
        %v3736 = vpop.f32.mrb[0].mxu0
        %v3737 = vadd.f32 0.0, %v3736
        %v3738 = vpop.f32.mrb[0].mxu0
        %3739 = vmatprep.mubr.bf16.mxu0 0
        %3740 = vmatmul.mubr.bf16.gmra.mrb[0].mxu0 %v3697
        %v3741 = vpop.f32.mrb[0].mxu0
        %v3742 = vadd.f32 0.0, %v3741
        %v3743 = vpop.f32.mrb[0].mxu0
        %v3744 = vpop.f32.mrb[0].mxu0
        %v3745 = vadd.f32 0.0, %v3744
        %v3746 = vpop.f32.mrb[0].mxu0
        %3747 = vdwg.mxu0
        %v3749 = vsel %vm3600, %v3691, 0
        %v3752 = vsel %vm3600, %v3692, 0
        %3754 = vmatprep.subr.bf16.mxu0 0
        %3755 = vmatpush1.bf16.msra.mxu0 %v3499
        %3756 = vmatprep.subr.bf16.mxu0 0
        %3757 = vmatpush1.bf16.msra.mxu0 %v3500
        %3758 = vmatprep.subr.bf16.mxu0 0
        %3759 = vmatpush1.bf16.msra.mxu0 %v3501
        %3760 = vmatprep.subr.bf16.mxu0 0
        %3761 = vmatpush1.bf16.msra.mxu0 0
        %3762 = vmatprep.subr.bf16.mxu0 0
        %3763 = vmatpush1.bf16.msra.mxu0 0
        %3764 = vmatprep.subr.bf16.mxu0 0
        %3765 = vmatpush1.bf16.msra.mxu0 0
        %3766 = vmatprep.subr.bf16.mxu0 0
        %3767 = vmatpush1.bf16.msra.mxu0 0
        %3768 = vmatprep.subr.bf16.mxu0 0
        %3769 = vmatpush1.bf16.msra.mxu0 0
        %3770 = vmatprep.subr.bf16.mxu0 0
        %3771 = vmatpush1.bf16.msra.mxu0 0
        %3772 = vmatprep.subr.bf16.mxu0 0
        %3773 = vmatpush1.bf16.msra.mxu0 0
        %3774 = vmatprep.subr.bf16.mxu0 0
        %3775 = vmatpush1.bf16.msra.mxu0 0
        %3776 = vmatprep.subr.bf16.mxu0 0
        %3777 = vmatpush1.bf16.msra.mxu0 0
        %3778 = vmatprep.subr.bf16.mxu0 0
        %3779 = vmatpush1.bf16.msra.mxu0 0
        %3780 = vmatprep.subr.bf16.mxu0 0
        %3781 = vmatpush1.bf16.msra.mxu0 0
        %3782 = vmatprep.subr.bf16.mxu0 0
        %3783 = vmatpush1.bf16.msra.mxu0 0
        %3784 = vmatprep.subr.bf16.mxu0 0
        %3785 = vmatpush1.bf16.msra.mxu0 0
        %3786 = vmatprep.mubr.bf16.mxu0 0
        %3787 = vmatmul.mubr.bf16.gmra.mrb[0].mxu0 %v3749
        %v3788 = vpop.f32.mrb[0].mxu0
        %v3789 = vadd.f32 0.0, %v3788
        %v3790 = vpop.f32.mrb[0].mxu0
        %v3791 = vpop.f32.mrb[0].mxu0
        %v3792 = vadd.f32 0.0, %v3791
        %v3793 = vpop.f32.mrb[0].mxu0
        %3794 = vmatprep.mubr.bf16.mxu0 0
        %3795 = vmatmul.mubr.bf16.gmra.mrb[0].mxu0 %v3752
        %v3796 = vpop.f32.mrb[0].mxu0
        %v3797 = vadd.f32 0.0, %v3796
        %v3798 = vpop.f32.mrb[0].mxu0
        %v3799 = vpop.f32.mrb[0].mxu0
        %v3800 = vadd.f32 0.0, %v3799
        %v3801 = vpop.f32.mrb[0].mxu0
        %3802 = vdwg.mxu0
        %s3803 = scalar_lea.vmem [#allocation11], 256
        %v3804 = vld [vmem:[%s3803] sm:$0xff]
        %v3805 = vld [vmem:[%s3803 + $0x8] sm:$0xff]
        %v3806 = vld [vmem:[%s3803 + $0x10] sm:$0xff]
        %v3807 = vld [vmem:[%s3803 + $0x18] sm:$0xff]
        %v3808 = vld [vmem:[%s3803 + $0x20] sm:$0xff]
        %v3809 = vld [vmem:[%s3803 + $0x28] sm:$0xff]
        %v3810 = vld [vmem:[%s3803 + $0x30] sm:$0xff]
        %v3811 = vld [vmem:[%s3803 + $0x38] sm:$0xff]
        %v3812 = vld [vmem:[%s3803 + $0x40] sm:$0xff]
        %v3813 = vld [vmem:[%s3803 + $0x48] sm:$0xff]
        %v3814 = vld [vmem:[%s3803 + $0x50] sm:$0xff]
        %v3815 = vld [vmem:[%s3803 + $0x58] sm:$0xff]
        %v3816 = vld [vmem:[%s3803 + $0x60] sm:$0xff]
        %v3817 = vld [vmem:[%s3803 + $0x68] sm:$0xff]
        %v3818 = vld [vmem:[%s3803 + $0x70] sm:$0xff]
        %v3819 = vld [vmem:[%s3803 + $0x78] sm:$0xff]
        %v3820 = vld [vmem:[%s3803 + $0x80] sm:$0xff]
        %v3821 = vld [vmem:[%s3803 + $0x88] sm:$0xff]
        %v3822 = vld [vmem:[%s3803 + $0x90] sm:$0xff]
        %v3823 = vld [vmem:[%s3803 + $0x98] sm:$0xff]
        %v3824 = vld [vmem:[%s3803 + $0xa0] sm:$0xff]
        %v3825 = vld [vmem:[%s3803 + $0xa8] sm:$0xff]
        %v3826 = vld [vmem:[%s3803 + $0xb0] sm:$0xff]
        %v3827 = vld [vmem:[%s3803 + $0xb8] sm:$0xff]
        %v3828 = vld [vmem:[%s3803 + $0xc0] sm:$0xff]
        %v3829 = vld [vmem:[%s3803 + $0xc8] sm:$0xff]
        %v3830 = vld [vmem:[%s3803 + $0xd0] sm:$0xff]
        %v3831 = vld [vmem:[%s3803 + $0xd8] sm:$0xff]
        %v3832 = vld [vmem:[%s3803 + $0xe0] sm:$0xff]
        %v3833 = vld [vmem:[%s3803 + $0xe8] sm:$0xff]
        %v3834 = vld [vmem:[%s3803 + $0xf0] sm:$0xff]
        %v3835 = vld [vmem:[%s3803 + $0xf8] sm:$0xff]
        %v3836 = vpack.c.bf16 %v3737, %v3734
        %v3837 = vpack.c.bf16 %v3745, %v3742
        %v3838 = vpack.c.bf16 %v3792, %v3789
        %v3839 = vpack.c.bf16 %v3800, %v3797
        %v3856 = vunpack.c.l.b16 %v3804
        %v3857 = vunpack.c.h.b16 %v3804
        %v3858 = vunpack.c.l.b16 %v3805
        %v3859 = vunpack.c.h.b16 %v3805
        %v3860 = vunpack.c.l.b16 %v3806
        %v3861 = vunpack.c.h.b16 %v3806
        %v3862 = vunpack.c.l.b16 %v3807
        %v3863 = vunpack.c.h.b16 %v3807
        %v3864 = vunpack.c.l.b16 %v3808
        %v3865 = vunpack.c.h.b16 %v3808
        %v3866 = vunpack.c.l.b16 %v3809
        %v3867 = vunpack.c.h.b16 %v3809
        %v3868 = vunpack.c.l.b16 %v3810
        %v3869 = vunpack.c.h.b16 %v3810
        %v3870 = vunpack.c.l.b16 %v3811
        %v3871 = vunpack.c.h.b16 %v3811
        %v3872 = vunpack.c.l.b16 %v3812
        %v3873 = vunpack.c.h.b16 %v3812
        %v3874 = vunpack.c.l.b16 %v3813
        %v3875 = vunpack.c.h.b16 %v3813
        %v3876 = vunpack.c.l.b16 %v3814
        %v3877 = vunpack.c.h.b16 %v3814
        %v3878 = vunpack.c.l.b16 %v3815
        %v3879 = vunpack.c.h.b16 %v3815
        %v3880 = vunpack.c.l.b16 %v3816
        %v3881 = vunpack.c.h.b16 %v3816
        %v3882 = vunpack.c.l.b16 %v3817
        %v3883 = vunpack.c.h.b16 %v3817
        %v3884 = vunpack.c.l.b16 %v3818
        %v3885 = vunpack.c.h.b16 %v3818
        %v3886 = vunpack.c.l.b16 %v3819
        %v3887 = vunpack.c.h.b16 %v3819
        %v3888 = vpack.c.b16 %v3858, %v3856
        %v3889 = vpack.c.b16 %v3859, %v3857
        %v3890 = vpack.c.b16 %v3862, %v3860
        %v3891 = vpack.c.b16 %v3863, %v3861
        %v3892 = vpack.c.b16 %v3866, %v3864
        %v3893 = vpack.c.b16 %v3867, %v3865
        %v3894 = vpack.c.b16 %v3870, %v3868
        %v3895 = vpack.c.b16 %v3871, %v3869
        %v3896 = vpack.c.b16 %v3874, %v3872
        %v3897 = vpack.c.b16 %v3875, %v3873
        %v3898 = vpack.c.b16 %v3878, %v3876
        %v3899 = vpack.c.b16 %v3879, %v3877
        %v3900 = vpack.c.b16 %v3882, %v3880
        %v3901 = vpack.c.b16 %v3883, %v3881
        %v3902 = vpack.c.b16 %v3886, %v3884
        %v3903 = vpack.c.b16 %v3887, %v3885
        %3920 = vmatprep.subr.bf16.mxu0 %v3889
        %3921 = vmatpush1.bf16.msra.mxu0 %v3888
        %3922 = vmatprep.subr.bf16.mxu0 %v3891
        %3923 = vmatpush1.bf16.msra.mxu0 %v3890
        %3924 = vmatprep.subr.bf16.mxu0 %v3893
        %3925 = vmatpush1.bf16.msra.mxu0 %v3892
        %3926 = vmatprep.subr.bf16.mxu0 %v3895
        %3927 = vmatpush1.bf16.msra.mxu0 %v3894
        %3928 = vmatprep.subr.bf16.mxu0 %v3897
        %3929 = vmatpush1.bf16.msra.mxu0 %v3896
        %3930 = vmatprep.subr.bf16.mxu0 %v3899
        %3931 = vmatpush1.bf16.msra.mxu0 %v3898
        %3932 = vmatprep.subr.bf16.mxu0 %v3901
        %3933 = vmatpush1.bf16.msra.mxu0 %v3900
        %3934 = vmatprep.subr.bf16.mxu0 %v3903
        %3935 = vmatpush1.bf16.msra.mxu0 %v3902
        %3936 = vmatprep.subr.bf16.mxu0 0
        %3937 = vmatpush1.bf16.msra.mxu0 0
        %3938 = vmatprep.subr.bf16.mxu0 0
        %3939 = vmatpush1.bf16.msra.mxu0 0
        %3940 = vmatprep.subr.bf16.mxu0 0
        %3941 = vmatpush1.bf16.msra.mxu0 0
        %3942 = vmatprep.subr.bf16.mxu0 0
        %3943 = vmatpush1.bf16.msra.mxu0 0
        %3944 = vmatprep.subr.bf16.mxu0 0
        %3945 = vmatpush1.bf16.msra.mxu0 0
        %3946 = vmatprep.subr.bf16.mxu0 0
        %3947 = vmatpush1.bf16.msra.mxu0 0
        %3948 = vmatprep.subr.bf16.mxu0 0
        %3949 = vmatpush1.bf16.msra.mxu0 0
        %3950 = vmatprep.subr.bf16.mxu0 0
        %3951 = vmatpush1.bf16.msra.mxu0 0
        %3952 = vmatprep.mubr.bf16.mxu0 0
        %3953 = vmatmul.mubr.bf16.gmra.mrb[0].mxu0 %v3836
        %v3954 = vpop.f32.mrb[0].mxu0
        %v3955 = vadd.f32 0.0, %v3954
        %v3956 = vpop.f32.mrb[0].mxu0
        %v3957 = vadd.f32 0.0, %v3956
        %v3958 = vpop.f32.mrb[0].mxu0
        %v3959 = vadd.f32 0.0, %v3958
        %v3960 = vpop.f32.mrb[0].mxu0
        %v3961 = vadd.f32 0.0, %v3960
        %3962 = vmatprep.mubr.bf16.mxu0 0
        %3963 = vmatmul.mubr.bf16.gmra.mrb[0].mxu0 %v3837
        %v3964 = vpop.f32.mrb[0].mxu0
        %v3965 = vadd.f32 0.0, %v3964
        %v3966 = vpop.f32.mrb[0].mxu0
        %v3967 = vadd.f32 0.0, %v3966
        %v3968 = vpop.f32.mrb[0].mxu0
        %v3969 = vadd.f32 0.0, %v3968
        %v3970 = vpop.f32.mrb[0].mxu0
        %v3971 = vadd.f32 0.0, %v3970
        %3972 = vdwg.mxu0
        %v3989 = vunpack.c.l.b16 %v3820
        %v3990 = vunpack.c.h.b16 %v3820
        %v3991 = vunpack.c.l.b16 %v3821
        %v3992 = vunpack.c.h.b16 %v3821
        %v3993 = vunpack.c.l.b16 %v3822
        %v3994 = vunpack.c.h.b16 %v3822
        %v3995 = vunpack.c.l.b16 %v3823
        %v3996 = vunpack.c.h.b16 %v3823
        %v3997 = vunpack.c.l.b16 %v3824
        %v3998 = vunpack.c.h.b16 %v3824
        %v3999 = vunpack.c.l.b16 %v3825
        %v4000 = vunpack.c.h.b16 %v3825
        %v4001 = vunpack.c.l.b16 %v3826
        %v4002 = vunpack.c.h.b16 %v3826
        %v4003 = vunpack.c.l.b16 %v3827
        %v4004 = vunpack.c.h.b16 %v3827
        %v4005 = vunpack.c.l.b16 %v3828
        %v4006 = vunpack.c.h.b16 %v3828
        %v4007 = vunpack.c.l.b16 %v3829
        %v4008 = vunpack.c.h.b16 %v3829
        %v4009 = vunpack.c.l.b16 %v3830
        %v4010 = vunpack.c.h.b16 %v3830
        %v4011 = vunpack.c.l.b16 %v3831
        %v4012 = vunpack.c.h.b16 %v3831
        %v4013 = vunpack.c.l.b16 %v3832
        %v4014 = vunpack.c.h.b16 %v3832
        %v4015 = vunpack.c.l.b16 %v3833
        %v4016 = vunpack.c.h.b16 %v3833
        %v4017 = vunpack.c.l.b16 %v3834
        %v4018 = vunpack.c.h.b16 %v3834
        %v4019 = vunpack.c.l.b16 %v3835
        %v4020 = vunpack.c.h.b16 %v3835
        %v4021 = vpack.c.b16 %v3991, %v3989
        %v4022 = vpack.c.b16 %v3992, %v3990
        %v4023 = vpack.c.b16 %v3995, %v3993
        %v4024 = vpack.c.b16 %v3996, %v3994
        %v4025 = vpack.c.b16 %v3999, %v3997
        %v4026 = vpack.c.b16 %v4000, %v3998
        %v4027 = vpack.c.b16 %v4003, %v4001
        %v4028 = vpack.c.b16 %v4004, %v4002
        %v4029 = vpack.c.b16 %v4007, %v4005
        %v4030 = vpack.c.b16 %v4008, %v4006
        %v4031 = vpack.c.b16 %v4011, %v4009
        %v4032 = vpack.c.b16 %v4012, %v4010
        %v4033 = vpack.c.b16 %v4015, %v4013
        %v4034 = vpack.c.b16 %v4016, %v4014
        %v4035 = vpack.c.b16 %v4019, %v4017
        %v4036 = vpack.c.b16 %v4020, %v4018
        %4053 = vmatprep.subr.bf16.mxu0 %v4022
        %4054 = vmatpush1.bf16.msra.mxu0 %v4021
        %4055 = vmatprep.subr.bf16.mxu0 %v4024
        %4056 = vmatpush1.bf16.msra.mxu0 %v4023
        %4057 = vmatprep.subr.bf16.mxu0 %v4026
        %4058 = vmatpush1.bf16.msra.mxu0 %v4025
        %4059 = vmatprep.subr.bf16.mxu0 %v4028
        %4060 = vmatpush1.bf16.msra.mxu0 %v4027
        %4061 = vmatprep.subr.bf16.mxu0 %v4030
        %4062 = vmatpush1.bf16.msra.mxu0 %v4029
        %4063 = vmatprep.subr.bf16.mxu0 %v4032
        %4064 = vmatpush1.bf16.msra.mxu0 %v4031
        %4065 = vmatprep.subr.bf16.mxu0 %v4034
        %4066 = vmatpush1.bf16.msra.mxu0 %v4033
        %4067 = vmatprep.subr.bf16.mxu0 %v4036
        %4068 = vmatpush1.bf16.msra.mxu0 %v4035
        %4069 = vmatprep.subr.bf16.mxu0 0
        %4070 = vmatpush1.bf16.msra.mxu0 0
        %4071 = vmatprep.subr.bf16.mxu0 0
        %4072 = vmatpush1.bf16.msra.mxu0 0
        %4073 = vmatprep.subr.bf16.mxu0 0
        %4074 = vmatpush1.bf16.msra.mxu0 0
        %4075 = vmatprep.subr.bf16.mxu0 0
        %4076 = vmatpush1.bf16.msra.mxu0 0
        %4077 = vmatprep.subr.bf16.mxu0 0
        %4078 = vmatpush1.bf16.msra.mxu0 0
        %4079 = vmatprep.subr.bf16.mxu0 0
        %4080 = vmatpush1.bf16.msra.mxu0 0
        %4081 = vmatprep.subr.bf16.mxu0 0
        %4082 = vmatpush1.bf16.msra.mxu0 0
        %4083 = vmatprep.subr.bf16.mxu0 0
        %4084 = vmatpush1.bf16.msra.mxu0 0
        %4085 = vmatprep.mubr.bf16.mxu0 0
        %4086 = vmatmul.mubr.bf16.gmra.mrb[0].mxu0 %v3838
        %v4087 = vpop.f32.mrb[0].mxu0
        %v4088 = vadd.f32 0.0, %v4087
        %v4089 = vpop.f32.mrb[0].mxu0
        %v4090 = vadd.f32 0.0, %v4089
        %v4091 = vpop.f32.mrb[0].mxu0
        %v4092 = vadd.f32 0.0, %v4091
        %v4093 = vpop.f32.mrb[0].mxu0
        %v4094 = vadd.f32 0.0, %v4093
        %4095 = vmatprep.mubr.bf16.mxu0 0
        %4096 = vmatmul.mubr.bf16.gmra.mrb[0].mxu0 %v3839
        %v4097 = vpop.f32.mrb[0].mxu0
        %v4098 = vadd.f32 0.0, %v4097
        %v4099 = vpop.f32.mrb[0].mxu0
        %v4100 = vadd.f32 0.0, %v4099
        %v4101 = vpop.f32.mrb[0].mxu0
        %v4102 = vadd.f32 0.0, %v4101
        %v4103 = vpop.f32.mrb[0].mxu0
        %v4104 = vadd.f32 0.0, %v4103
        %4105 = vdwg.mxu0
        %v4106 = vadd.f32 %v3955, %v4088
        %v4107 = vadd.f32 %v3957, %v4090
        %v4108 = vadd.f32 %v3959, %v4092
        %v4109 = vadd.f32 %v3961, %v4094
        %v4110 = vadd.f32 %v3965, %v4098
        %v4111 = vadd.f32 %v3967, %v4100
        %v4112 = vadd.f32 %v3969, %v4102
        %v4113 = vadd.f32 %v3971, %v4104
        %v4114 = vlaneseq
        %v4115 = vshrl.u32 %v4114, 7
        %v4116 = vsub.s32 3, %v4115
        %v4117 = vrot.slane %v785, %v4116
        %v4118 = vlaneseq
        %v4119 = vshrl.u32 %v4118, 7
        %v4120 = vsub.s32 3, %v4119
        %v4121 = vrot.slane %v786, %v4120
        %v4122 = vadd.f32 %v4106, %v4117
        %v4123 = vadd.f32 %v4107, %v4121
        %v4124 = vadd.f32 %v4108, %v4117
        %v4125 = vadd.f32 %v4109, %v4121
        %v4126 = vadd.f32 %v4110, %v4117
        %v4127 = vadd.f32 %v4111, %v4121
        %v4128 = vadd.f32 %v4112, %v4117
        %v4129 = vadd.f32 %v4113, %v4121
        %v4130 = vadd.f32 %v2564, %v4122
        %v4131 = vadd.f32 %v2565, %v4123
        %v4132 = vadd.f32 %v2566, %v4124
        %v4133 = vadd.f32 %v2567, %v4125
        %v4134 = vadd.f32 %v2568, %v4126
        %v4135 = vadd.f32 %v2569, %v4127
        %v4136 = vadd.f32 %v2570, %v4128
        %v4137 = vadd.f32 %v2571, %v4129
        %v4138 = vadd.f32 %v4130, %v4131
        %4139 = vadd.xlane.f32.xlu0 %v4138
        %v4140 = vpop.xlane.xlu0 %4139
        %v4141 = vadd.f32 %v4132, %v4133
        %4142 = vadd.xlane.f32.xlu0 %v4141
        %v4143 = vpop.xlane.xlu0 %4142
        %v4144 = vadd.f32 %v4134, %v4135
        %4145 = vadd.xlane.f32.xlu0 %v4144
        %v4146 = vpop.xlane.xlu0 %4145
        %v4147 = vadd.f32 %v4136, %v4137
        %4148 = vadd.xlane.f32.xlu0 %v4147
        %v4149 = vpop.xlane.xlu0 %4148
        %v4150 = vmul.f32 %v4140, %v833
        %v4151 = vmul.f32 %v4143, %v833
        %v4152 = vmul.f32 %v4146, %v833
        %v4153 = vmul.f32 %v4149, %v833
        %v4154 = vsub.f32 %v4130, %v4150
        %v4155 = vsub.f32 %v4131, %v4150
        %v4156 = vsub.f32 %v4132, %v4151
        %v4157 = vsub.f32 %v4133, %v4151
        %v4158 = vsub.f32 %v4134, %v4152
        %v4159 = vsub.f32 %v4135, %v4152
        %v4160 = vsub.f32 %v4136, %v4153
        %v4161 = vsub.f32 %v4137, %v4153
        %v4162 = vmul.f32 %v4154, %v4154
        %v4163 = vmul.f32 %v4155, %v4155
        %v4164 = vmul.f32 %v4156, %v4156
        %v4165 = vmul.f32 %v4157, %v4157
        %v4166 = vmul.f32 %v4158, %v4158
        %v4167 = vmul.f32 %v4159, %v4159
        %v4168 = vmul.f32 %v4160, %v4160
        %v4169 = vmul.f32 %v4161, %v4161
        %v4170 = vadd.f32 %v4162, %v4163
        %4171 = vadd.xlane.f32.xlu0 %v4170
        %v4172 = vpop.xlane.xlu0 %4171
        %v4173 = vadd.f32 %v4164, %v4165
        %4174 = vadd.xlane.f32.xlu0 %v4173
        %v4175 = vpop.xlane.xlu0 %4174
        %v4176 = vadd.f32 %v4166, %v4167
        %4177 = vadd.xlane.f32.xlu0 %v4176
        %v4178 = vpop.xlane.xlu0 %4177
        %v4179 = vadd.f32 %v4168, %v4169
        %4180 = vadd.xlane.f32.xlu0 %v4179
        %v4181 = vpop.xlane.xlu0 %4180
        %v4182 = vmul.f32 %v4172, %v833
        %v4183 = vmul.f32 %v4175, %v833
        %v4184 = vmul.f32 %v4178, %v833
        %v4185 = vmul.f32 %v4181, %v833
        %v4186 = vlaneseq
        %v4187 = vshrl.u32 %v4186, 7
        %v4188 = vsub.s32 2, %v4187
        %v4189 = vrot.slane %v783, %v4188
        %v4190 = vlaneseq
        %v4191 = vshrl.u32 %v4190, 7
        %v4192 = vsub.s32 6, %v4191
        %v4193 = vrot.slane %v783, %v4192
        %v4196 = vlaneseq
        %v4197 = vshrl.u32 %v4196, 7
        %v4198 = vsub.s32 2, %v4197
        %v4199 = vrot.slane %v4189, %v4198
        %v4200 = vlaneseq
        %v4201 = vshrl.u32 %v4200, 7
        %v4202 = vsub.s32 2, %v4201
        %v4203 = vrot.slane %v4193, %v4202
        %v4204 = vmul.f32 %v4199, %v4154
        %v4205 = vmul.f32 %v4203, %v4155
        %v4206 = vmul.f32 %v4199, %v4156
        %v4207 = vmul.f32 %v4203, %v4157
        %v4208 = vmul.f32 %v4199, %v4158
        %v4209 = vmul.f32 %v4203, %v4159
        %v4210 = vmul.f32 %v4199, %v4160
        %v4211 = vmul.f32 %v4203, %v4161
        %v4212 = vadd.f32 %v4182, 1e-06
        %v4213 = vadd.f32 %v4183, 1e-06
        %v4214 = vadd.f32 %v4184, 1e-06
        %v4215 = vadd.f32 %v4185, 1e-06
        %v4216 = vrsqrt.pop %v4212
        %v4217 = vrsqrt.pop %v4213
        %v4218 = vrsqrt.pop %v4214
        %v4219 = vrsqrt.pop %v4215
        %v4220 = vmul.f32 %v4204, %v4216
        %v4221 = vmul.f32 %v4205, %v4216
        %v4222 = vmul.f32 %v4206, %v4217
        %v4223 = vmul.f32 %v4207, %v4217
        %v4224 = vmul.f32 %v4208, %v4218
        %v4225 = vmul.f32 %v4209, %v4218
        %v4226 = vmul.f32 %v4210, %v4219
        %v4227 = vmul.f32 %v4211, %v4219
        %v4228 = vlaneseq
        %v4229 = vshrl.u32 %v4228, 7
        %v4230 = vsub.s32 2, %v4229
        %v4231 = vrot.slane %v784, %v4230
        %v4232 = vlaneseq
        %v4233 = vshrl.u32 %v4232, 7
        %v4234 = vsub.s32 6, %v4233
        %v4235 = vrot.slane %v784, %v4234
        %v4238 = vlaneseq
        %v4239 = vshrl.u32 %v4238, 7
        %v4240 = vsub.s32 2, %v4239
        %v4241 = vrot.slane %v4231, %v4240
        %v4242 = vlaneseq
        %v4243 = vshrl.u32 %v4242, 7
        %v4244 = vsub.s32 2, %v4243
        %v4245 = vrot.slane %v4235, %v4244
        %v4246 = vadd.f32 %v4220, %v4241
        %v4247 = vadd.f32 %v4221, %v4245
        %v4248 = vadd.f32 %v4222, %v4241
        %v4249 = vadd.f32 %v4223, %v4245
        %v4250 = vadd.f32 %v4224, %v4241
        %v4251 = vadd.f32 %v4225, %v4245
        %v4252 = vadd.f32 %v4226, %v4241
        %v4253 = vadd.f32 %v4227, %v4245
        %v4254 = vpack.c.bf16 %v4248, %v4246
        %v4255 = vpack.c.bf16 %v4249, %v4247
        %v4256 = vpack.c.bf16 %v4252, %v4250
        %v4257 = vpack.c.bf16 %v4253, %v4251
        %v4258 = vld [vmem:[#allocation13] sm:$0xff]
        %v4259 = vld [vmem:[#allocation13 + $0x8] sm:$0xff]
        %v4260 = vld [vmem:[#allocation13 + $0x10] sm:$0xff]
        %v4261 = vld [vmem:[#allocation13 + $0x18] sm:$0xff]
        %v4262 = vld [vmem:[#allocation13 + $0x20] sm:$0xff]
        %v4263 = vld [vmem:[#allocation13 + $0x28] sm:$0xff]
        %v4264 = vld [vmem:[#allocation13 + $0x30] sm:$0xff]
        %v4265 = vld [vmem:[#allocation13 + $0x38] sm:$0xff]
        %v4266 = vld [vmem:[#allocation13 + $0x40] sm:$0xff]
        %v4267 = vld [vmem:[#allocation13 + $0x48] sm:$0xff]
        %v4268 = vld [vmem:[#allocation13 + $0x50] sm:$0xff]
        %v4269 = vld [vmem:[#allocation13 + $0x58] sm:$0xff]
        %v4270 = vld [vmem:[#allocation13 + $0x60] sm:$0xff]
        %v4271 = vld [vmem:[#allocation13 + $0x68] sm:$0xff]
        %v4272 = vld [vmem:[#allocation13 + $0x70] sm:$0xff]
        %v4273 = vld [vmem:[#allocation13 + $0x78] sm:$0xff]
        %v4274 = vld [vmem:[#allocation13 + $0x80] sm:$0xff]
        %v4275 = vld [vmem:[#allocation13 + $0x88] sm:$0xff]
        %v4276 = vld [vmem:[#allocation13 + $0x90] sm:$0xff]
        %v4277 = vld [vmem:[#allocation13 + $0x98] sm:$0xff]
        %v4278 = vld [vmem:[#allocation13 + $0xa0] sm:$0xff]
        %v4279 = vld [vmem:[#allocation13 + $0xa8] sm:$0xff]
        %v4280 = vld [vmem:[#allocation13 + $0xb0] sm:$0xff]
        %v4281 = vld [vmem:[#allocation13 + $0xb8] sm:$0xff]
        %v4282 = vld [vmem:[#allocation13 + $0xc0] sm:$0xff]
        %v4283 = vld [vmem:[#allocation13 + $0xc8] sm:$0xff]
        %v4284 = vld [vmem:[#allocation13 + $0xd0] sm:$0xff]
        %v4285 = vld [vmem:[#allocation13 + $0xd8] sm:$0xff]
        %v4286 = vld [vmem:[#allocation13 + $0xe0] sm:$0xff]
        %v4287 = vld [vmem:[#allocation13 + $0xe8] sm:$0xff]
        %v4288 = vld [vmem:[#allocation13 + $0xf0] sm:$0xff]
        %v4289 = vld [vmem:[#allocation13 + $0xf8] sm:$0xff]
        %v4290 = vld [vmem:[#allocation13 + $0x100] sm:$0xff]
        %v4291 = vld [vmem:[#allocation13 + $0x108] sm:$0xff]
        %v4292 = vld [vmem:[#allocation13 + $0x110] sm:$0xff]
        %v4293 = vld [vmem:[#allocation13 + $0x118] sm:$0xff]
        %v4294 = vld [vmem:[#allocation13 + $0x120] sm:$0xff]
        %v4295 = vld [vmem:[#allocation13 + $0x128] sm:$0xff]
        %v4296 = vld [vmem:[#allocation13 + $0x130] sm:$0xff]
        %v4297 = vld [vmem:[#allocation13 + $0x138] sm:$0xff]
        %v4298 = vld [vmem:[#allocation13 + $0x140] sm:$0xff]
        %v4299 = vld [vmem:[#allocation13 + $0x148] sm:$0xff]
        %v4300 = vld [vmem:[#allocation13 + $0x150] sm:$0xff]
        %v4301 = vld [vmem:[#allocation13 + $0x158] sm:$0xff]
        %v4302 = vld [vmem:[#allocation13 + $0x160] sm:$0xff]
        %v4303 = vld [vmem:[#allocation13 + $0x168] sm:$0xff]
        %v4304 = vld [vmem:[#allocation13 + $0x170] sm:$0xff]
        %v4305 = vld [vmem:[#allocation13 + $0x178] sm:$0xff]
        %v4306 = vld [vmem:[#allocation13 + $0x180] sm:$0xff]
        %v4307 = vld [vmem:[#allocation13 + $0x188] sm:$0xff]
        %v4308 = vld [vmem:[#allocation13 + $0x190] sm:$0xff]
        %v4309 = vld [vmem:[#allocation13 + $0x198] sm:$0xff]
        %v4310 = vld [vmem:[#allocation13 + $0x1a0] sm:$0xff]
        %v4311 = vld [vmem:[#allocation13 + $0x1a8] sm:$0xff]
        %v4312 = vld [vmem:[#allocation13 + $0x1b0] sm:$0xff]
        %v4313 = vld [vmem:[#allocation13 + $0x1b8] sm:$0xff]
        %v4314 = vld [vmem:[#allocation13 + $0x1c0] sm:$0xff]
        %v4315 = vld [vmem:[#allocation13 + $0x1c8] sm:$0xff]
        %v4316 = vld [vmem:[#allocation13 + $0x1d0] sm:$0xff]
        %v4317 = vld [vmem:[#allocation13 + $0x1d8] sm:$0xff]
        %v4318 = vld [vmem:[#allocation13 + $0x1e0] sm:$0xff]
        %v4319 = vld [vmem:[#allocation13 + $0x1e8] sm:$0xff]
        %v4320 = vld [vmem:[#allocation13 + $0x1f0] sm:$0xff]
        %v4321 = vld [vmem:[#allocation13 + $0x1f8] sm:$0xff]
        %v4322 = vld [vmem:[%s10] sm:$0xf]
        %v4324 = vlaneseq
        %v4325 = vshrl.u32 %v4324, 7
        %v4326 = vsub.s32 0, %v4325
        %v4327 = vrot.slane %v4322, %v4326
        %v4328 = vlaneseq
        %v4329 = vshrl.u32 %v4328, 7
        %v4330 = vsub.s32 1, %v4329
        %v4331 = vrot.slane %v4322, %v4330
        %v4332 = vlaneseq
        %v4333 = vshrl.u32 %v4332, 7
        %v4334 = vsub.s32 2, %v4333
        %v4335 = vrot.slane %v4322, %v4334
        %v4336 = vlaneseq
        %v4337 = vshrl.u32 %v4336, 7
        %v4338 = vsub.s32 3, %v4337
        %v4339 = vrot.slane %v4322, %v4338
        %v4408 = vunpack.c.l.b16 %v4258
        %v4409 = vunpack.c.h.b16 %v4258
        %v4410 = vunpack.c.l.b16 %v4259
        %v4411 = vunpack.c.h.b16 %v4259
        %v4412 = vunpack.c.l.b16 %v4260
        %v4413 = vunpack.c.h.b16 %v4260
        %v4414 = vunpack.c.l.b16 %v4261
        %v4415 = vunpack.c.h.b16 %v4261
        %v4416 = vunpack.c.l.b16 %v4262
        %v4417 = vunpack.c.h.b16 %v4262
        %v4418 = vunpack.c.l.b16 %v4263
        %v4419 = vunpack.c.h.b16 %v4263
        %v4420 = vunpack.c.l.b16 %v4264
        %v4421 = vunpack.c.h.b16 %v4264
        %v4422 = vunpack.c.l.b16 %v4265
        %v4423 = vunpack.c.h.b16 %v4265
        %v4424 = vunpack.c.l.b16 %v4266
        %v4425 = vunpack.c.h.b16 %v4266
        %v4426 = vunpack.c.l.b16 %v4267
        %v4427 = vunpack.c.h.b16 %v4267
        %v4428 = vunpack.c.l.b16 %v4268
        %v4429 = vunpack.c.h.b16 %v4268
        %v4430 = vunpack.c.l.b16 %v4269
        %v4431 = vunpack.c.h.b16 %v4269
        %v4432 = vunpack.c.l.b16 %v4270
        %v4433 = vunpack.c.h.b16 %v4270
        %v4434 = vunpack.c.l.b16 %v4271
        %v4435 = vunpack.c.h.b16 %v4271
        %v4436 = vunpack.c.l.b16 %v4272
        %v4437 = vunpack.c.h.b16 %v4272
        %v4438 = vunpack.c.l.b16 %v4273
        %v4439 = vunpack.c.h.b16 %v4273
        %v4440 = vunpack.c.l.b16 %v4274
        %v4441 = vunpack.c.h.b16 %v4274
        %v4442 = vunpack.c.l.b16 %v4275
        %v4443 = vunpack.c.h.b16 %v4275
        %v4444 = vunpack.c.l.b16 %v4276
        %v4445 = vunpack.c.h.b16 %v4276
        %v4446 = vunpack.c.l.b16 %v4277
        %v4447 = vunpack.c.h.b16 %v4277
        %v4448 = vunpack.c.l.b16 %v4278
        %v4449 = vunpack.c.h.b16 %v4278
        %v4450 = vunpack.c.l.b16 %v4279
        %v4451 = vunpack.c.h.b16 %v4279
        %v4452 = vunpack.c.l.b16 %v4280
        %v4453 = vunpack.c.h.b16 %v4280
        %v4454 = vunpack.c.l.b16 %v4281
        %v4455 = vunpack.c.h.b16 %v4281
        %v4456 = vunpack.c.l.b16 %v4282
        %v4457 = vunpack.c.h.b16 %v4282
        %v4458 = vunpack.c.l.b16 %v4283
        %v4459 = vunpack.c.h.b16 %v4283
        %v4460 = vunpack.c.l.b16 %v4284
        %v4461 = vunpack.c.h.b16 %v4284
        %v4462 = vunpack.c.l.b16 %v4285
        %v4463 = vunpack.c.h.b16 %v4285
        %v4464 = vunpack.c.l.b16 %v4286
        %v4465 = vunpack.c.h.b16 %v4286
        %v4466 = vunpack.c.l.b16 %v4287
        %v4467 = vunpack.c.h.b16 %v4287
        %v4468 = vunpack.c.l.b16 %v4288
        %v4469 = vunpack.c.h.b16 %v4288
        %v4470 = vunpack.c.l.b16 %v4289
        %v4471 = vunpack.c.h.b16 %v4289
        %v4472 = vunpack.c.l.b16 %v4290
        %v4473 = vunpack.c.h.b16 %v4290
        %v4474 = vunpack.c.l.b16 %v4291
        %v4475 = vunpack.c.h.b16 %v4291
        %v4476 = vunpack.c.l.b16 %v4292
        %v4477 = vunpack.c.h.b16 %v4292
        %v4478 = vunpack.c.l.b16 %v4293
        %v4479 = vunpack.c.h.b16 %v4293
        %v4480 = vunpack.c.l.b16 %v4294
        %v4481 = vunpack.c.h.b16 %v4294
        %v4482 = vunpack.c.l.b16 %v4295
        %v4483 = vunpack.c.h.b16 %v4295
        %v4484 = vunpack.c.l.b16 %v4296
        %v4485 = vunpack.c.h.b16 %v4296
        %v4486 = vunpack.c.l.b16 %v4297
        %v4487 = vunpack.c.h.b16 %v4297
        %v4488 = vunpack.c.l.b16 %v4298
        %v4489 = vunpack.c.h.b16 %v4298
        %v4490 = vunpack.c.l.b16 %v4299
        %v4491 = vunpack.c.h.b16 %v4299
        %v4492 = vunpack.c.l.b16 %v4300
        %v4493 = vunpack.c.h.b16 %v4300
        %v4494 = vunpack.c.l.b16 %v4301
        %v4495 = vunpack.c.h.b16 %v4301
        %v4496 = vunpack.c.l.b16 %v4302
        %v4497 = vunpack.c.h.b16 %v4302
        %v4498 = vunpack.c.l.b16 %v4303
        %v4499 = vunpack.c.h.b16 %v4303
        %v4500 = vunpack.c.l.b16 %v4304
        %v4501 = vunpack.c.h.b16 %v4304
        %v4502 = vunpack.c.l.b16 %v4305
        %v4503 = vunpack.c.h.b16 %v4305
        %v4504 = vunpack.c.l.b16 %v4306
        %v4505 = vunpack.c.h.b16 %v4306
        %v4506 = vunpack.c.l.b16 %v4307
        %v4507 = vunpack.c.h.b16 %v4307
        %v4508 = vunpack.c.l.b16 %v4308
        %v4509 = vunpack.c.h.b16 %v4308
        %v4510 = vunpack.c.l.b16 %v4309
        %v4511 = vunpack.c.h.b16 %v4309
        %v4512 = vunpack.c.l.b16 %v4310
        %v4513 = vunpack.c.h.b16 %v4310
        %v4514 = vunpack.c.l.b16 %v4311
        %v4515 = vunpack.c.h.b16 %v4311
        %v4516 = vunpack.c.l.b16 %v4312
        %v4517 = vunpack.c.h.b16 %v4312
        %v4518 = vunpack.c.l.b16 %v4313
        %v4519 = vunpack.c.h.b16 %v4313
        %v4520 = vunpack.c.l.b16 %v4314
        %v4521 = vunpack.c.h.b16 %v4314
        %v4522 = vunpack.c.l.b16 %v4315
        %v4523 = vunpack.c.h.b16 %v4315
        %v4524 = vunpack.c.l.b16 %v4316
        %v4525 = vunpack.c.h.b16 %v4316
        %v4526 = vunpack.c.l.b16 %v4317
        %v4527 = vunpack.c.h.b16 %v4317
        %v4528 = vunpack.c.l.b16 %v4318
        %v4529 = vunpack.c.h.b16 %v4318
        %v4530 = vunpack.c.l.b16 %v4319
        %v4531 = vunpack.c.h.b16 %v4319
        %v4532 = vunpack.c.l.b16 %v4320
        %v4533 = vunpack.c.h.b16 %v4320
        %v4534 = vunpack.c.l.b16 %v4321
        %v4535 = vunpack.c.h.b16 %v4321
        %v4536 = vpack.c.b16 %v4412, %v4408
        %v4537 = vpack.c.b16 %v4413, %v4409
        %v4538 = vpack.c.b16 %v4414, %v4410
        %v4539 = vpack.c.b16 %v4415, %v4411
        %v4540 = vpack.c.b16 %v4420, %v4416
        %v4541 = vpack.c.b16 %v4421, %v4417
        %v4542 = vpack.c.b16 %v4422, %v4418
        %v4543 = vpack.c.b16 %v4423, %v4419
        %v4544 = vpack.c.b16 %v4428, %v4424
        %v4545 = vpack.c.b16 %v4429, %v4425
        %v4546 = vpack.c.b16 %v4430, %v4426
        %v4547 = vpack.c.b16 %v4431, %v4427
        %v4548 = vpack.c.b16 %v4436, %v4432
        %v4549 = vpack.c.b16 %v4437, %v4433
        %v4550 = vpack.c.b16 %v4438, %v4434
        %v4551 = vpack.c.b16 %v4439, %v4435
        %v4552 = vpack.c.b16 %v4444, %v4440
        %v4553 = vpack.c.b16 %v4445, %v4441
        %v4554 = vpack.c.b16 %v4446, %v4442
        %v4555 = vpack.c.b16 %v4447, %v4443
        %v4556 = vpack.c.b16 %v4452, %v4448
        %v4557 = vpack.c.b16 %v4453, %v4449
        %v4558 = vpack.c.b16 %v4454, %v4450
        %v4559 = vpack.c.b16 %v4455, %v4451
        %v4560 = vpack.c.b16 %v4460, %v4456
        %v4561 = vpack.c.b16 %v4461, %v4457
        %v4562 = vpack.c.b16 %v4462, %v4458
        %v4563 = vpack.c.b16 %v4463, %v4459
        %v4564 = vpack.c.b16 %v4468, %v4464
        %v4565 = vpack.c.b16 %v4469, %v4465
        %v4566 = vpack.c.b16 %v4470, %v4466
        %v4567 = vpack.c.b16 %v4471, %v4467
        %v4568 = vpack.c.b16 %v4476, %v4472
        %v4569 = vpack.c.b16 %v4477, %v4473
        %v4570 = vpack.c.b16 %v4478, %v4474
        %v4571 = vpack.c.b16 %v4479, %v4475
        %v4572 = vpack.c.b16 %v4484, %v4480
        %v4573 = vpack.c.b16 %v4485, %v4481
        %v4574 = vpack.c.b16 %v4486, %v4482
        %v4575 = vpack.c.b16 %v4487, %v4483
        %v4576 = vpack.c.b16 %v4492, %v4488
        %v4577 = vpack.c.b16 %v4493, %v4489
        %v4578 = vpack.c.b16 %v4494, %v4490
        %v4579 = vpack.c.b16 %v4495, %v4491
        %v4580 = vpack.c.b16 %v4500, %v4496
        %v4581 = vpack.c.b16 %v4501, %v4497
        %v4582 = vpack.c.b16 %v4502, %v4498
        %v4583 = vpack.c.b16 %v4503, %v4499
        %v4584 = vpack.c.b16 %v4508, %v4504
        %v4585 = vpack.c.b16 %v4509, %v4505
        %v4586 = vpack.c.b16 %v4510, %v4506
        %v4587 = vpack.c.b16 %v4511, %v4507
        %v4588 = vpack.c.b16 %v4516, %v4512
        %v4589 = vpack.c.b16 %v4517, %v4513
        %v4590 = vpack.c.b16 %v4518, %v4514
        %v4591 = vpack.c.b16 %v4519, %v4515
        %v4592 = vpack.c.b16 %v4524, %v4520
        %v4593 = vpack.c.b16 %v4525, %v4521
        %v4594 = vpack.c.b16 %v4526, %v4522
        %v4595 = vpack.c.b16 %v4527, %v4523
        %v4596 = vpack.c.b16 %v4532, %v4528
        %v4597 = vpack.c.b16 %v4533, %v4529
        %v4598 = vpack.c.b16 %v4534, %v4530
        %v4599 = vpack.c.b16 %v4535, %v4531
        %4664 = vmatprep.subr.bf16.mxu0 %v4537
        %4665 = vmatpush1.bf16.msra.mxu0 %v4536
        %4666 = vmatprep.subr.bf16.mxu0 %v4541
        %4667 = vmatpush1.bf16.msra.mxu0 %v4540
        %4668 = vmatprep.subr.bf16.mxu0 %v4545
        %4669 = vmatpush1.bf16.msra.mxu0 %v4544
        %4670 = vmatprep.subr.bf16.mxu0 %v4549
        %4671 = vmatpush1.bf16.msra.mxu0 %v4548
        %4672 = vmatprep.subr.bf16.mxu0 %v4553
        %4673 = vmatpush1.bf16.msra.mxu0 %v4552
        %4674 = vmatprep.subr.bf16.mxu0 %v4557
        %4675 = vmatpush1.bf16.msra.mxu0 %v4556
        %4676 = vmatprep.subr.bf16.mxu0 %v4561
        %4677 = vmatpush1.bf16.msra.mxu0 %v4560
        %4678 = vmatprep.subr.bf16.mxu0 %v4565
        %4679 = vmatpush1.bf16.msra.mxu0 %v4564
        %4680 = vmatprep.subr.bf16.mxu0 %v4569
        %4681 = vmatpush1.bf16.msra.mxu0 %v4568
        %4682 = vmatprep.subr.bf16.mxu0 %v4573
        %4683 = vmatpush1.bf16.msra.mxu0 %v4572
        %4684 = vmatprep.subr.bf16.mxu0 %v4577
        %4685 = vmatpush1.bf16.msra.mxu0 %v4576
        %4686 = vmatprep.subr.bf16.mxu0 %v4581
        %4687 = vmatpush1.bf16.msra.mxu0 %v4580
        %4688 = vmatprep.subr.bf16.mxu0 %v4585
        %4689 = vmatpush1.bf16.msra.mxu0 %v4584
        %4690 = vmatprep.subr.bf16.mxu0 %v4589
        %4691 = vmatpush1.bf16.msra.mxu0 %v4588
        %4692 = vmatprep.subr.bf16.mxu0 %v4593
        %4693 = vmatpush1.bf16.msra.mxu0 %v4592
        %4694 = vmatprep.subr.bf16.mxu0 %v4597
        %4695 = vmatpush1.bf16.msra.mxu0 %v4596
        %4696 = vmatprep.mubr.bf16.mxu0 %v4255
        %4697 = vmatmul.mubr.bf16.gmra.mrb[0].mxu0 %v4254
        %v4698 = vpop.f32.mrb[0].mxu0
        %v4699 = vadd.f32 %v4327, %v4698
        %v4700 = vpop.f32.mrb[0].mxu0
        %v4701 = vadd.f32 %v4331, %v4700
        %v4702 = vpop.f32.mrb[0].mxu0
        %v4703 = vadd.f32 %v4327, %v4702
        %v4704 = vpop.f32.mrb[0].mxu0
        %v4705 = vadd.f32 %v4331, %v4704
        %4706 = vmatprep.mubr.bf16.mxu0 %v4257
        %4707 = vmatmul.mubr.bf16.gmra.mrb[0].mxu0 %v4256
        %v4708 = vpop.f32.mrb[0].mxu0
        %v4709 = vadd.f32 %v4327, %v4708
        %v4710 = vpop.f32.mrb[0].mxu0
        %v4711 = vadd.f32 %v4331, %v4710
        %v4712 = vpop.f32.mrb[0].mxu0
        %v4713 = vadd.f32 %v4327, %v4712
        %v4714 = vpop.f32.mrb[0].mxu0
        %v4715 = vadd.f32 %v4331, %v4714
        %4716 = vdwg.mxu0
        %4717 = vmatprep.subr.bf16.mxu0 %v4539
        %4718 = vmatpush1.bf16.msra.mxu0 %v4538
        %4719 = vmatprep.subr.bf16.mxu0 %v4543
        %4720 = vmatpush1.bf16.msra.mxu0 %v4542
        %4721 = vmatprep.subr.bf16.mxu0 %v4547
        %4722 = vmatpush1.bf16.msra.mxu0 %v4546
        %4723 = vmatprep.subr.bf16.mxu0 %v4551
        %4724 = vmatpush1.bf16.msra.mxu0 %v4550
        %4725 = vmatprep.subr.bf16.mxu0 %v4555
        %4726 = vmatpush1.bf16.msra.mxu0 %v4554
        %4727 = vmatprep.subr.bf16.mxu0 %v4559
        %4728 = vmatpush1.bf16.msra.mxu0 %v4558
        %4729 = vmatprep.subr.bf16.mxu0 %v4563
        %4730 = vmatpush1.bf16.msra.mxu0 %v4562
        %4731 = vmatprep.subr.bf16.mxu0 %v4567
        %4732 = vmatpush1.bf16.msra.mxu0 %v4566
        %4733 = vmatprep.subr.bf16.mxu0 %v4571
        %4734 = vmatpush1.bf16.msra.mxu0 %v4570
        %4735 = vmatprep.subr.bf16.mxu0 %v4575
        %4736 = vmatpush1.bf16.msra.mxu0 %v4574
        %4737 = vmatprep.subr.bf16.mxu0 %v4579
        %4738 = vmatpush1.bf16.msra.mxu0 %v4578
        %4739 = vmatprep.subr.bf16.mxu0 %v4583
        %4740 = vmatpush1.bf16.msra.mxu0 %v4582
        %4741 = vmatprep.subr.bf16.mxu0 %v4587
        %4742 = vmatpush1.bf16.msra.mxu0 %v4586
        %4743 = vmatprep.subr.bf16.mxu0 %v4591
        %4744 = vmatpush1.bf16.msra.mxu0 %v4590
        %4745 = vmatprep.subr.bf16.mxu0 %v4595
        %4746 = vmatpush1.bf16.msra.mxu0 %v4594
        %4747 = vmatprep.subr.bf16.mxu0 %v4599
        %4748 = vmatpush1.bf16.msra.mxu0 %v4598
        %4749 = vmatprep.mubr.bf16.mxu0 %v4255
        %4750 = vmatmul.mubr.bf16.gmra.mrb[0].mxu0 %v4254
        %v4751 = vpop.f32.mrb[0].mxu0
        %v4752 = vadd.f32 %v4335, %v4751
        %v4753 = vpop.f32.mrb[0].mxu0
        %v4754 = vadd.f32 %v4339, %v4753
        %v4755 = vpop.f32.mrb[0].mxu0
        %v4756 = vadd.f32 %v4335, %v4755
        %v4757 = vpop.f32.mrb[0].mxu0
        %v4758 = vadd.f32 %v4339, %v4757
        %4759 = vmatprep.mubr.bf16.mxu0 %v4257
        %4760 = vmatmul.mubr.bf16.gmra.mrb[0].mxu0 %v4256
        %v4761 = vpop.f32.mrb[0].mxu0
        %v4762 = vadd.f32 %v4335, %v4761
        %v4763 = vpop.f32.mrb[0].mxu0
        %v4764 = vadd.f32 %v4339, %v4763
        %v4765 = vpop.f32.mrb[0].mxu0
        %v4766 = vadd.f32 %v4335, %v4765
        %v4767 = vpop.f32.mrb[0].mxu0
        %v4768 = vadd.f32 %v4339, %v4767
        %4769 = vdwg.mxu0
        %v4770 = vmax.f32 %v4699, 0.0
        %v4771 = vmax.f32 %v4701, 0.0
        %v4772 = vmax.f32 %v4752, 0.0
        %v4773 = vmax.f32 %v4754, 0.0
        %v4774 = vmax.f32 %v4703, 0.0
        %v4775 = vmax.f32 %v4705, 0.0
        %v4776 = vmax.f32 %v4756, 0.0
        %v4777 = vmax.f32 %v4758, 0.0
        %v4778 = vmax.f32 %v4709, 0.0
        %v4779 = vmax.f32 %v4711, 0.0
        %v4780 = vmax.f32 %v4762, 0.0
        %v4781 = vmax.f32 %v4764, 0.0
        %v4782 = vmax.f32 %v4713, 0.0
        %v4783 = vmax.f32 %v4715, 0.0
        %v4784 = vmax.f32 %v4766, 0.0
        %v4785 = vmax.f32 %v4768, 0.0
        %v4786 = vpack.c.bf16 %v4774, %v4770
        %v4787 = vpack.c.bf16 %v4775, %v4771
        %v4788 = vpack.c.bf16 %v4776, %v4772
        %v4789 = vpack.c.bf16 %v4777, %v4773
        %v4790 = vpack.c.bf16 %v4782, %v4778
        %v4791 = vpack.c.bf16 %v4783, %v4779
        %v4792 = vpack.c.bf16 %v4784, %v4780
        %v4793 = vpack.c.bf16 %v4785, %v4781
        %v4794 = vld [vmem:[#allocation14] sm:$0xff]
        %v4795 = vld [vmem:[#allocation14 + $0x8] sm:$0xff]
        %v4796 = vld [vmem:[#allocation14 + $0x10] sm:$0xff]
        %v4797 = vld [vmem:[#allocation14 + $0x18] sm:$0xff]
        %v4798 = vld [vmem:[#allocation14 + $0x20] sm:$0xff]
        %v4799 = vld [vmem:[#allocation14 + $0x28] sm:$0xff]
        %v4800 = vld [vmem:[#allocation14 + $0x30] sm:$0xff]
        %v4801 = vld [vmem:[#allocation14 + $0x38] sm:$0xff]
        %v4802 = vld [vmem:[#allocation14 + $0x40] sm:$0xff]
        %v4803 = vld [vmem:[#allocation14 + $0x48] sm:$0xff]
        %v4804 = vld [vmem:[#allocation14 + $0x50] sm:$0xff]
        %v4805 = vld [vmem:[#allocation14 + $0x58] sm:$0xff]
        %v4806 = vld [vmem:[#allocation14 + $0x60] sm:$0xff]
        %v4807 = vld [vmem:[#allocation14 + $0x68] sm:$0xff]
        %v4808 = vld [vmem:[#allocation14 + $0x70] sm:$0xff]
        %v4809 = vld [vmem:[#allocation14 + $0x78] sm:$0xff]
        %v4810 = vld [vmem:[#allocation14 + $0x80] sm:$0xff]
        %v4811 = vld [vmem:[#allocation14 + $0x88] sm:$0xff]
        %v4812 = vld [vmem:[#allocation14 + $0x90] sm:$0xff]
        %v4813 = vld [vmem:[#allocation14 + $0x98] sm:$0xff]
        %v4814 = vld [vmem:[#allocation14 + $0xa0] sm:$0xff]
        %v4815 = vld [vmem:[#allocation14 + $0xa8] sm:$0xff]
        %v4816 = vld [vmem:[#allocation14 + $0xb0] sm:$0xff]
        %v4817 = vld [vmem:[#allocation14 + $0xb8] sm:$0xff]
        %v4818 = vld [vmem:[#allocation14 + $0xc0] sm:$0xff]
        %v4819 = vld [vmem:[#allocation14 + $0xc8] sm:$0xff]
        %v4820 = vld [vmem:[#allocation14 + $0xd0] sm:$0xff]
        %v4821 = vld [vmem:[#allocation14 + $0xd8] sm:$0xff]
        %v4822 = vld [vmem:[#allocation14 + $0xe0] sm:$0xff]
        %v4823 = vld [vmem:[#allocation14 + $0xe8] sm:$0xff]
        %v4824 = vld [vmem:[#allocation14 + $0xf0] sm:$0xff]
        %v4825 = vld [vmem:[#allocation14 + $0xf8] sm:$0xff]
        %v4826 = vld [vmem:[#allocation14 + $0x100] sm:$0xff]
        %v4827 = vld [vmem:[#allocation14 + $0x108] sm:$0xff]
        %v4828 = vld [vmem:[#allocation14 + $0x110] sm:$0xff]
        %v4829 = vld [vmem:[#allocation14 + $0x118] sm:$0xff]
        %v4830 = vld [vmem:[#allocation14 + $0x120] sm:$0xff]
        %v4831 = vld [vmem:[#allocation14 + $0x128] sm:$0xff]
        %v4832 = vld [vmem:[#allocation14 + $0x130] sm:$0xff]
        %v4833 = vld [vmem:[#allocation14 + $0x138] sm:$0xff]
        %v4834 = vld [vmem:[#allocation14 + $0x140] sm:$0xff]
        %v4835 = vld [vmem:[#allocation14 + $0x148] sm:$0xff]
        %v4836 = vld [vmem:[#allocation14 + $0x150] sm:$0xff]
        %v4837 = vld [vmem:[#allocation14 + $0x158] sm:$0xff]
        %v4838 = vld [vmem:[#allocation14 + $0x160] sm:$0xff]
        %v4839 = vld [vmem:[#allocation14 + $0x168] sm:$0xff]
        %v4840 = vld [vmem:[#allocation14 + $0x170] sm:$0xff]
        %v4841 = vld [vmem:[#allocation14 + $0x178] sm:$0xff]
        %v4842 = vld [vmem:[#allocation14 + $0x180] sm:$0xff]
        %v4843 = vld [vmem:[#allocation14 + $0x188] sm:$0xff]
        %v4844 = vld [vmem:[#allocation14 + $0x190] sm:$0xff]
        %v4845 = vld [vmem:[#allocation14 + $0x198] sm:$0xff]
        %v4846 = vld [vmem:[#allocation14 + $0x1a0] sm:$0xff]
        %v4847 = vld [vmem:[#allocation14 + $0x1a8] sm:$0xff]
        %v4848 = vld [vmem:[#allocation14 + $0x1b0] sm:$0xff]
        %v4849 = vld [vmem:[#allocation14 + $0x1b8] sm:$0xff]
        %v4850 = vld [vmem:[#allocation14 + $0x1c0] sm:$0xff]
        %v4851 = vld [vmem:[#allocation14 + $0x1c8] sm:$0xff]
        %v4852 = vld [vmem:[#allocation14 + $0x1d0] sm:$0xff]
        %v4853 = vld [vmem:[#allocation14 + $0x1d8] sm:$0xff]
        %v4854 = vld [vmem:[#allocation14 + $0x1e0] sm:$0xff]
        %v4855 = vld [vmem:[#allocation14 + $0x1e8] sm:$0xff]
        %v4856 = vld [vmem:[#allocation14 + $0x1f0] sm:$0xff]
        %v4857 = vld [vmem:[#allocation14 + $0x1f8] sm:$0xff]
        %v4922 = vunpack.c.l.b16 %v4794
        %v4923 = vunpack.c.h.b16 %v4794
        %v4924 = vunpack.c.l.b16 %v4795
        %v4925 = vunpack.c.h.b16 %v4795
        %v4926 = vunpack.c.l.b16 %v4796
        %v4927 = vunpack.c.h.b16 %v4796
        %v4928 = vunpack.c.l.b16 %v4797
        %v4929 = vunpack.c.h.b16 %v4797
        %v4930 = vunpack.c.l.b16 %v4798
        %v4931 = vunpack.c.h.b16 %v4798
        %v4932 = vunpack.c.l.b16 %v4799
        %v4933 = vunpack.c.h.b16 %v4799
        %v4934 = vunpack.c.l.b16 %v4800
        %v4935 = vunpack.c.h.b16 %v4800
        %v4936 = vunpack.c.l.b16 %v4801
        %v4937 = vunpack.c.h.b16 %v4801
        %v4938 = vunpack.c.l.b16 %v4802
        %v4939 = vunpack.c.h.b16 %v4802
        %v4940 = vunpack.c.l.b16 %v4803
        %v4941 = vunpack.c.h.b16 %v4803
        %v4942 = vunpack.c.l.b16 %v4804
        %v4943 = vunpack.c.h.b16 %v4804
        %v4944 = vunpack.c.l.b16 %v4805
        %v4945 = vunpack.c.h.b16 %v4805
        %v4946 = vunpack.c.l.b16 %v4806
        %v4947 = vunpack.c.h.b16 %v4806
        %v4948 = vunpack.c.l.b16 %v4807
        %v4949 = vunpack.c.h.b16 %v4807
        %v4950 = vunpack.c.l.b16 %v4808
        %v4951 = vunpack.c.h.b16 %v4808
        %v4952 = vunpack.c.l.b16 %v4809
        %v4953 = vunpack.c.h.b16 %v4809
        %v4954 = vunpack.c.l.b16 %v4810
        %v4955 = vunpack.c.h.b16 %v4810
        %v4956 = vunpack.c.l.b16 %v4811
        %v4957 = vunpack.c.h.b16 %v4811
        %v4958 = vunpack.c.l.b16 %v4812
        %v4959 = vunpack.c.h.b16 %v4812
        %v4960 = vunpack.c.l.b16 %v4813
        %v4961 = vunpack.c.h.b16 %v4813
        %v4962 = vunpack.c.l.b16 %v4814
        %v4963 = vunpack.c.h.b16 %v4814
        %v4964 = vunpack.c.l.b16 %v4815
        %v4965 = vunpack.c.h.b16 %v4815
        %v4966 = vunpack.c.l.b16 %v4816
        %v4967 = vunpack.c.h.b16 %v4816
        %v4968 = vunpack.c.l.b16 %v4817
        %v4969 = vunpack.c.h.b16 %v4817
        %v4970 = vunpack.c.l.b16 %v4818
        %v4971 = vunpack.c.h.b16 %v4818
        %v4972 = vunpack.c.l.b16 %v4819
        %v4973 = vunpack.c.h.b16 %v4819
        %v4974 = vunpack.c.l.b16 %v4820
        %v4975 = vunpack.c.h.b16 %v4820
        %v4976 = vunpack.c.l.b16 %v4821
        %v4977 = vunpack.c.h.b16 %v4821
        %v4978 = vunpack.c.l.b16 %v4822
        %v4979 = vunpack.c.h.b16 %v4822
        %v4980 = vunpack.c.l.b16 %v4823
        %v4981 = vunpack.c.h.b16 %v4823
        %v4982 = vunpack.c.l.b16 %v4824
        %v4983 = vunpack.c.h.b16 %v4824
        %v4984 = vunpack.c.l.b16 %v4825
        %v4985 = vunpack.c.h.b16 %v4825
        %v4986 = vunpack.c.l.b16 %v4826
        %v4987 = vunpack.c.h.b16 %v4826
        %v4988 = vunpack.c.l.b16 %v4827
        %v4989 = vunpack.c.h.b16 %v4827
        %v4990 = vunpack.c.l.b16 %v4828
        %v4991 = vunpack.c.h.b16 %v4828
        %v4992 = vunpack.c.l.b16 %v4829
        %v4993 = vunpack.c.h.b16 %v4829
        %v4994 = vunpack.c.l.b16 %v4830
        %v4995 = vunpack.c.h.b16 %v4830
        %v4996 = vunpack.c.l.b16 %v4831
        %v4997 = vunpack.c.h.b16 %v4831
        %v4998 = vunpack.c.l.b16 %v4832
        %v4999 = vunpack.c.h.b16 %v4832
        %v5000 = vunpack.c.l.b16 %v4833
        %v5001 = vunpack.c.h.b16 %v4833
        %v5002 = vunpack.c.l.b16 %v4834
        %v5003 = vunpack.c.h.b16 %v4834
        %v5004 = vunpack.c.l.b16 %v4835
        %v5005 = vunpack.c.h.b16 %v4835
        %v5006 = vunpack.c.l.b16 %v4836
        %v5007 = vunpack.c.h.b16 %v4836
        %v5008 = vunpack.c.l.b16 %v4837
        %v5009 = vunpack.c.h.b16 %v4837
        %v5010 = vunpack.c.l.b16 %v4838
        %v5011 = vunpack.c.h.b16 %v4838
        %v5012 = vunpack.c.l.b16 %v4839
        %v5013 = vunpack.c.h.b16 %v4839
        %v5014 = vunpack.c.l.b16 %v4840
        %v5015 = vunpack.c.h.b16 %v4840
        %v5016 = vunpack.c.l.b16 %v4841
        %v5017 = vunpack.c.h.b16 %v4841
        %v5018 = vunpack.c.l.b16 %v4842
        %v5019 = vunpack.c.h.b16 %v4842
        %v5020 = vunpack.c.l.b16 %v4843
        %v5021 = vunpack.c.h.b16 %v4843
        %v5022 = vunpack.c.l.b16 %v4844
        %v5023 = vunpack.c.h.b16 %v4844
        %v5024 = vunpack.c.l.b16 %v4845
        %v5025 = vunpack.c.h.b16 %v4845
        %v5026 = vunpack.c.l.b16 %v4846
        %v5027 = vunpack.c.h.b16 %v4846
        %v5028 = vunpack.c.l.b16 %v4847
        %v5029 = vunpack.c.h.b16 %v4847
        %v5030 = vunpack.c.l.b16 %v4848
        %v5031 = vunpack.c.h.b16 %v4848
        %v5032 = vunpack.c.l.b16 %v4849
        %v5033 = vunpack.c.h.b16 %v4849
        %v5034 = vunpack.c.l.b16 %v4850
        %v5035 = vunpack.c.h.b16 %v4850
        %v5036 = vunpack.c.l.b16 %v4851
        %v5037 = vunpack.c.h.b16 %v4851
        %v5038 = vunpack.c.l.b16 %v4852
        %v5039 = vunpack.c.h.b16 %v4852
        %v5040 = vunpack.c.l.b16 %v4853
        %v5041 = vunpack.c.h.b16 %v4853
        %v5042 = vunpack.c.l.b16 %v4854
        %v5043 = vunpack.c.h.b16 %v4854
        %v5044 = vunpack.c.l.b16 %v4855
        %v5045 = vunpack.c.h.b16 %v4855
        %v5046 = vunpack.c.l.b16 %v4856
        %v5047 = vunpack.c.h.b16 %v4856
        %v5048 = vunpack.c.l.b16 %v4857
        %v5049 = vunpack.c.h.b16 %v4857
        %v5050 = vpack.c.b16 %v4924, %v4922
        %v5051 = vpack.c.b16 %v4925, %v4923
        %v5052 = vpack.c.b16 %v4928, %v4926
        %v5053 = vpack.c.b16 %v4929, %v4927
        %v5054 = vpack.c.b16 %v4932, %v4930
        %v5055 = vpack.c.b16 %v4933, %v4931
        %v5056 = vpack.c.b16 %v4936, %v4934
        %v5057 = vpack.c.b16 %v4937, %v4935
        %v5058 = vpack.c.b16 %v4940, %v4938
        %v5059 = vpack.c.b16 %v4941, %v4939
        %v5060 = vpack.c.b16 %v4944, %v4942
        %v5061 = vpack.c.b16 %v4945, %v4943
        %v5062 = vpack.c.b16 %v4948, %v4946
        %v5063 = vpack.c.b16 %v4949, %v4947
        %v5064 = vpack.c.b16 %v4952, %v4950
        %v5065 = vpack.c.b16 %v4953, %v4951
        %v5066 = vpack.c.b16 %v4956, %v4954
        %v5067 = vpack.c.b16 %v4957, %v4955
        %v5068 = vpack.c.b16 %v4960, %v4958
        %v5069 = vpack.c.b16 %v4961, %v4959
        %v5070 = vpack.c.b16 %v4964, %v4962
        %v5071 = vpack.c.b16 %v4965, %v4963
        %v5072 = vpack.c.b16 %v4968, %v4966
        %v5073 = vpack.c.b16 %v4969, %v4967
        %v5074 = vpack.c.b16 %v4972, %v4970
        %v5075 = vpack.c.b16 %v4973, %v4971
        %v5076 = vpack.c.b16 %v4976, %v4974
        %v5077 = vpack.c.b16 %v4977, %v4975
        %v5078 = vpack.c.b16 %v4980, %v4978
        %v5079 = vpack.c.b16 %v4981, %v4979
        %v5080 = vpack.c.b16 %v4984, %v4982
        %v5081 = vpack.c.b16 %v4985, %v4983
        %v5082 = vpack.c.b16 %v4988, %v4986
        %v5083 = vpack.c.b16 %v4989, %v4987
        %v5084 = vpack.c.b16 %v4992, %v4990
        %v5085 = vpack.c.b16 %v4993, %v4991
        %v5086 = vpack.c.b16 %v4996, %v4994
        %v5087 = vpack.c.b16 %v4997, %v4995
        %v5088 = vpack.c.b16 %v5000, %v4998
        %v5089 = vpack.c.b16 %v5001, %v4999
        %v5090 = vpack.c.b16 %v5004, %v5002
        %v5091 = vpack.c.b16 %v5005, %v5003
        %v5092 = vpack.c.b16 %v5008, %v5006
        %v5093 = vpack.c.b16 %v5009, %v5007
        %v5094 = vpack.c.b16 %v5012, %v5010
        %v5095 = vpack.c.b16 %v5013, %v5011
        %v5096 = vpack.c.b16 %v5016, %v5014
        %v5097 = vpack.c.b16 %v5017, %v5015
        %v5098 = vpack.c.b16 %v5020, %v5018
        %v5099 = vpack.c.b16 %v5021, %v5019
        %v5100 = vpack.c.b16 %v5024, %v5022
        %v5101 = vpack.c.b16 %v5025, %v5023
        %v5102 = vpack.c.b16 %v5028, %v5026
        %v5103 = vpack.c.b16 %v5029, %v5027
        %v5104 = vpack.c.b16 %v5032, %v5030
        %v5105 = vpack.c.b16 %v5033, %v5031
        %v5106 = vpack.c.b16 %v5036, %v5034
        %v5107 = vpack.c.b16 %v5037, %v5035
        %v5108 = vpack.c.b16 %v5040, %v5038
        %v5109 = vpack.c.b16 %v5041, %v5039
        %v5110 = vpack.c.b16 %v5044, %v5042
        %v5111 = vpack.c.b16 %v5045, %v5043
        %v5112 = vpack.c.b16 %v5048, %v5046
        %v5113 = vpack.c.b16 %v5049, %v5047
        %5178 = vmatprep.subr.bf16.mxu0 %v5051
        %5179 = vmatpush1.bf16.msra.mxu0 %v5050
        %5180 = vmatprep.subr.bf16.mxu0 %v5053
        %5181 = vmatpush1.bf16.msra.mxu0 %v5052
        %5182 = vmatprep.subr.bf16.mxu0 %v5055
        %5183 = vmatpush1.bf16.msra.mxu0 %v5054
        %5184 = vmatprep.subr.bf16.mxu0 %v5057
        %5185 = vmatpush1.bf16.msra.mxu0 %v5056
        %5186 = vmatprep.subr.bf16.mxu0 %v5059
        %5187 = vmatpush1.bf16.msra.mxu0 %v5058
        %5188 = vmatprep.subr.bf16.mxu0 %v5061
        %5189 = vmatpush1.bf16.msra.mxu0 %v5060
        %5190 = vmatprep.subr.bf16.mxu0 %v5063
        %5191 = vmatpush1.bf16.msra.mxu0 %v5062
        %5192 = vmatprep.subr.bf16.mxu0 %v5065
        %5193 = vmatpush1.bf16.msra.mxu0 %v5064
        %5194 = vmatprep.subr.bf16.mxu0 %v5067
        %5195 = vmatpush1.bf16.msra.mxu0 %v5066
        %5196 = vmatprep.subr.bf16.mxu0 %v5069
        %5197 = vmatpush1.bf16.msra.mxu0 %v5068
        %5198 = vmatprep.subr.bf16.mxu0 %v5071
        %5199 = vmatpush1.bf16.msra.mxu0 %v5070
        %5200 = vmatprep.subr.bf16.mxu0 %v5073
        %5201 = vmatpush1.bf16.msra.mxu0 %v5072
        %5202 = vmatprep.subr.bf16.mxu0 %v5075
        %5203 = vmatpush1.bf16.msra.mxu0 %v5074
        %5204 = vmatprep.subr.bf16.mxu0 %v5077
        %5205 = vmatpush1.bf16.msra.mxu0 %v5076
        %5206 = vmatprep.subr.bf16.mxu0 %v5079
        %5207 = vmatpush1.bf16.msra.mxu0 %v5078
        %5208 = vmatprep.subr.bf16.mxu0 %v5081
        %5209 = vmatpush1.bf16.msra.mxu0 %v5080
        %5210 = vmatprep.mubr.bf16.mxu0 %v4787
        %5211 = vmatmul.mubr.bf16.gmra.mrb[0].mxu0 %v4786
        %v5212 = vpop.f32.mrb[0].mxu0
        %v5213 = vadd.f32 0.0, %v5212
        %v5214 = vpop.f32.mrb[0].mxu0
        %v5215 = vadd.f32 0.0, %v5214
        %v5216 = vpop.f32.mrb[0].mxu0
        %v5217 = vadd.f32 0.0, %v5216
        %v5218 = vpop.f32.mrb[0].mxu0
        %v5219 = vadd.f32 0.0, %v5218
        %5220 = vmatprep.mubr.bf16.mxu0 %v4791
        %5221 = vmatmul.mubr.bf16.gmra.mrb[0].mxu0 %v4790
        %v5222 = vpop.f32.mrb[0].mxu0
        %v5223 = vadd.f32 0.0, %v5222
        %v5224 = vpop.f32.mrb[0].mxu0
        %v5225 = vadd.f32 0.0, %v5224
        %v5226 = vpop.f32.mrb[0].mxu0
        %v5227 = vadd.f32 0.0, %v5226
        %v5228 = vpop.f32.mrb[0].mxu0
        %v5229 = vadd.f32 0.0, %v5228
        %5230 = vdwg.mxu0
        %5231 = vmatprep.subr.bf16.mxu0 %v5083
        %5232 = vmatpush1.bf16.msra.mxu0 %v5082
        %5233 = vmatprep.subr.bf16.mxu0 %v5085
        %5234 = vmatpush1.bf16.msra.mxu0 %v5084
        %5235 = vmatprep.subr.bf16.mxu0 %v5087
        %5236 = vmatpush1.bf16.msra.mxu0 %v5086
        %5237 = vmatprep.subr.bf16.mxu0 %v5089
        %5238 = vmatpush1.bf16.msra.mxu0 %v5088
        %5239 = vmatprep.subr.bf16.mxu0 %v5091
        %5240 = vmatpush1.bf16.msra.mxu0 %v5090
        %5241 = vmatprep.subr.bf16.mxu0 %v5093
        %5242 = vmatpush1.bf16.msra.mxu0 %v5092
        %5243 = vmatprep.subr.bf16.mxu0 %v5095
        %5244 = vmatpush1.bf16.msra.mxu0 %v5094
        %5245 = vmatprep.subr.bf16.mxu0 %v5097
        %5246 = vmatpush1.bf16.msra.mxu0 %v5096
        %5247 = vmatprep.subr.bf16.mxu0 %v5099
        %5248 = vmatpush1.bf16.msra.mxu0 %v5098
        %5249 = vmatprep.subr.bf16.mxu0 %v5101
        %5250 = vmatpush1.bf16.msra.mxu0 %v5100
        %5251 = vmatprep.subr.bf16.mxu0 %v5103
        %5252 = vmatpush1.bf16.msra.mxu0 %v5102
        %5253 = vmatprep.subr.bf16.mxu0 %v5105
        %5254 = vmatpush1.bf16.msra.mxu0 %v5104
        %5255 = vmatprep.subr.bf16.mxu0 %v5107
        %5256 = vmatpush1.bf16.msra.mxu0 %v5106
        %5257 = vmatprep.subr.bf16.mxu0 %v5109
        %5258 = vmatpush1.bf16.msra.mxu0 %v5108
        %5259 = vmatprep.subr.bf16.mxu0 %v5111
        %5260 = vmatpush1.bf16.msra.mxu0 %v5110
        %5261 = vmatprep.subr.bf16.mxu0 %v5113
        %5262 = vmatpush1.bf16.msra.mxu0 %v5112
        %5263 = vmatprep.mubr.bf16.mxu0 %v4789
        %5264 = vmatmul.mubr.bf16.gmra.mrb[0].mxu0 %v4788
        %v5265 = vpop.f32.mrb[0].mxu0
        %v5266 = vadd.f32 %v5213, %v5265
        %v5267 = vpop.f32.mrb[0].mxu0
        %v5268 = vadd.f32 %v5215, %v5267
        %v5269 = vpop.f32.mrb[0].mxu0
        %v5270 = vadd.f32 %v5217, %v5269
        %v5271 = vpop.f32.mrb[0].mxu0
        %v5272 = vadd.f32 %v5219, %v5271
        %5273 = vmatprep.mubr.bf16.mxu0 %v4793
        %5274 = vmatmul.mubr.bf16.gmra.mrb[0].mxu0 %v4792
        %v5275 = vpop.f32.mrb[0].mxu0
        %v5276 = vadd.f32 %v5223, %v5275
        %v5277 = vpop.f32.mrb[0].mxu0
        %v5278 = vadd.f32 %v5225, %v5277
        %v5279 = vpop.f32.mrb[0].mxu0
        %v5280 = vadd.f32 %v5227, %v5279
        %v5281 = vpop.f32.mrb[0].mxu0
        %v5282 = vadd.f32 %v5229, %v5281
        %5283 = vdwg.mxu0
        %v5284 = vadd.f32 %v4130, %v5266
        %v5285 = vadd.f32 %v4131, %v5268
        %v5286 = vadd.f32 %v4132, %v5270
        %v5287 = vadd.f32 %v4133, %v5272
        %v5288 = vadd.f32 %v4134, %v5276
        %v5289 = vadd.f32 %v4135, %v5278
        %v5290 = vadd.f32 %v4136, %v5280
        %v5291 = vadd.f32 %v4137, %v5282
        %v5292 = vlaneseq
        %v5293 = vshrl.u32 %v5292, 7
        %v5294 = vsub.s32 4, %v5293
        %v5295 = vrot.slane %v785, %v5294
        %v5296 = vlaneseq
        %v5297 = vshrl.u32 %v5296, 7
        %v5298 = vsub.s32 4, %v5297
        %v5299 = vrot.slane %v786, %v5298
        %v5300 = vadd.f32 %v5284, %v5295
        %v5301 = vadd.f32 %v5285, %v5299
        %v5302 = vadd.f32 %v5286, %v5295
        %v5303 = vadd.f32 %v5287, %v5299
        %v5304 = vadd.f32 %v5288, %v5295
        %v5305 = vadd.f32 %v5289, %v5299
        %v5306 = vadd.f32 %v5290, %v5295
        %v5307 = vadd.f32 %v5291, %v5299
        %5308 = vst [vmem:[%s727] sm:$0xff] %v5300
        %5309 = vst [vmem:[%s727 + $0x8] sm:$0xff] %v5301
        %5310 = vst [vmem:[%s727 + $0x10] sm:$0xff] %v5302
        %5311 = vst [vmem:[%s727 + $0x18] sm:$0xff] %v5303
        %5312 = vst [vmem:[%s727 + $0x20] sm:$0xff] %v5304
        %5313 = vst [vmem:[%s727 + $0x28] sm:$0xff] %v5305
        %5314 = vst [vmem:[%s727 + $0x30] sm:$0xff] %v5306
        %5315 = vst [vmem:[%s727 + $0x38] sm:$0xff] %v5307
        %s5316 = sand.u32 %s406, 1
        %s5317 = scalar_lea.sflag [#allocation4], %s5316
        %s5318 = sand.u32 %s406, 1
        %s5319 = smul.addr %s5318, 64
        %s5320 = scalar_lea.vmem [#allocation16], %s5319
        // Predicated region
        $region113: #{tpu_custom_call.1} parent=79 // pred_check
          %p5321 = pneg %p416
        $region114: #{tpu_custom_call.1} parent=79 // pred_check_branch
          %5323 = sbr.rel (%p5321) target = $region116
        $region115: #{tpu_custom_call.1} parent=79 // pred_region
          %s5324 = smul.u32 4, %s43
          %s5326 = ssub.s32 1024, 1024
          %5327 = vsyncadd %s5317, %s5326
          %s5328 = smul.addr %s5324, 2
          %s5329 = smul.addr %s42, 16
          %s5330 = sadd.s32 %s5328, %s5329
          %s5331 = smul.addr %s5330, 128
          %s5332 = scalar_lea.hbm %s15, %s5331
          %s5333 = sshll.u32 %s5320, 4
          %s5334 = int_to_ptr.vmem [resolvable:$true] %s5333
          %5339 = dma.vmem_to_hbm [thread:$0]  %s5334, 1024, %s5332, %s5317, 256, 256, 16
        $region116: #{tpu_custom_call.1} parent=79 // pred_fallthru
          _
      $region80: #{tpu_custom_call.1} parent=5 // pred_fallthru
        _
      %p5340 = scmp.le.s32.totalorder 2, %s33
      // Predicated region
      $region117: #{tpu_custom_call.1} parent=5 // pred_check
        %p5341 = pneg %p5340
      $region118: #{tpu_custom_call.1} parent=5 // pred_check_branch
        %5343 = sbr.rel (%p5341) target = $region120
      $region119: #{tpu_custom_call.1} parent=5 // pred_region
        %s5344 = ssub.s32 %s33, 2
        // Predicated region
        $region121: #{tpu_custom_call.1} parent=119 // pred_check
          %p5345 = pneg %p422
        $region122: #{tpu_custom_call.1} parent=119 // pred_check_branch
          %5347 = sbr.rel (%p5345) target = $region124
        $region123: #{tpu_custom_call.1} parent=119 // pred_region
          %s5348 = sand.u32 %s407, 1
          %s5349 = scalar_lea.sflag [#allocation4], %s5348
          %s5350 = sand.u32 %s407, 1
          %s5351 = smul.addr %s5350, 64
          %s5352 = scalar_lea.vmem [#allocation16], %s5351
          %5353 = dma.done %s5349, 1024
        $region124: #{tpu_custom_call.1} parent=119 // pred_fallthru
          _
      $region120: #{tpu_custom_call.1} parent=5 // pred_fallthru
        _
    $region6: #{tpu_custom_call.1} parent=1 // loop_footer
      %s37 = sadd.s32 1, %s33
    $region7: #{tpu_custom_call.1} parent=1 // loop_footer_branch
      %32 = sbr.rel target = $region3
    $region8: #{tpu_custom_call.1} parent=1 // loop_exit
      _
    %5354 = vsyncpa [#allocation3], 1
    %s5355 = scalar_lea.sflag [#allocation3], 1
    %5356 = vsyncpa %s5355, 1
    %5357 = vsyncpa [#allocation6], 1
    %s5358 = scalar_lea.sflag [#allocation6], 1
    %5359 = vsyncpa %s5358, 1
    %5360 = vsyncpa [#allocation9], 1
    %5361 = vsyncpa [#allocation12], 1
    %5362 = vsyncpa [#allocation15], 1
    %5363 = vsyncpa [#allocation4], 1
    %s5364 = scalar_lea.sflag [#allocation4], 1
    %5365 = vsyncpa %s5364, 1

</llo_original>
